<compile_context>
chip_gen: v7x
topology: tpu7x:2x2x1
jax: 0.10.0
libtpu: 0.0.40
codegen_flags: <defaults>
</compile_context>

<pallas_src>
import functools

import jax
import jax.numpy as jnp
from jax.experimental import pallas as pl
from jax.experimental.pallas import tpu as pltpu

# ---- scaled-down DistilBERT config -------------------------------------
HIDDEN = 128
N_HEADS = 4
HEAD_DIM = HIDDEN // N_HEADS
FFN = 256
N_LAYERS = 2
VOCAB = 512
MAX_POS = 64
NUM_CLASSES = 51
CLS_PAD = 128            # lane-dense logits width; padded cols sliced off outside
LN_EPS = 1e-12
PARAM_DT = jnp.float32   # biases / LN params / embeddings stay f32
MM_DT = jnp.bfloat16     # activations & weights feeding the MXU
# Row-tile target: conservative enough to fit v7x's 64 MiB VMEM at real
# DistilBERT sizes (K=768, N=3072, bf16, double-buffered); v5e/v6e simply
# amortize launch overhead better with the same value.
ROW_TILE_TARGET = 512


def _row_tile(m, target=ROW_TILE_TARGET):
    """Largest row tile <= target that divides m and is a multiple of 8."""
    if m <= target:
        return m
    if m % 8 != 0:
        return m                      # fall back to a single full block
    t = min(target, m)
    t -= t % 8
    while t > 8 and m % t != 0:
        t -= 8
    return t if m % t == 0 else m


_PAR = pltpu.CompilerParams(dimension_semantics=("parallel",))


# --------------------------------------------------------------------------
# Pallas kernels
# --------------------------------------------------------------------------
def _linear_kernel(x_ref, w_ref, b_ref, o_ref, *, activation):
    y = jnp.dot(x_ref[...], w_ref[...], preferred_element_type=jnp.float32)
    y = y + b_ref[...].astype(jnp.float32)        # (1, N) broadcasts over rows
    if activation == "gelu":
        # NOTE: tanh-approx GELU (exact erf-GELU differs by ~1e-3 relative).
        y = jax.nn.gelu(y, approximate=True)
    o_ref[...] = y.astype(o_ref.dtype)


def linear(x, w, b, activation=None):
    """x: [M, K] @ w: [K, N] + b, optional activation, row-tiled, bf16 out."""
    M, K = x.shape
    _, N = w.shape
    tm = _row_tile(M)
    return pl.pallas_call(
        functools.partial(_linear_kernel, activation=activation),
        grid=(M // tm,),
        out_shape=jax.ShapeDtypeStruct((M, N), MM_DT),
        in_specs=[
            pl.BlockSpec((tm, K), lambda i: (i, 0)),
            pl.BlockSpec((K, N), lambda i: (0, 0)),   # weight stays VMEM-resident
            pl.BlockSpec((1, N), lambda i: (0, 0)),
        ],
        out_specs=pl.BlockSpec((tm, N), lambda i: (i, 0)),
        compiler_params=_PAR,
    )(x, w, b.reshape(1, N))


def _linear_res_ln_kernel(x_ref, w_ref, b_ref, res_ref, g_ref, beta_ref, o_ref,
                          *, eps):
    # matmul + bias + residual + LayerNorm, all fused (f32 statistics).
    y = jnp.dot(x_ref[...], w_ref[...], preferred_element_type=jnp.float32)
    y = y + b_ref[...].astype(jnp.float32) + res_ref[...].astype(jnp.float32)
    mean = jnp.mean(y, axis=-1, keepdims=True)
    var = jnp.mean(jnp.square(y - mean), axis=-1, keepdims=True)
    y = (y - mean) * jax.lax.rsqrt(var + eps)
    y = y * g_ref[...].astype(jnp.float32) + beta_ref[...].astype(jnp.float32)
    o_ref[...] = y.astype(o_ref.dtype)


def linear_res_ln(x, w, b, res, gamma, beta):
    """LayerNorm(x @ w + b + res) * gamma + beta, fused, row-tiled."""
    M, K = x.shape
    _, N = w.shape
    tm = _row_tile(M)
    return pl.pallas_call(
        functools.partial(_linear_res_ln_kernel, eps=LN_EPS),
        grid=(M // tm,),
        out_shape=jax.ShapeDtypeStruct((M, N), MM_DT),
        in_specs=[
            pl.BlockSpec((tm, K), lambda i: (i, 0)),
            pl.BlockSpec((K, N), lambda i: (0, 0)),
            pl.BlockSpec((1, N), lambda i: (0, 0)),
            pl.BlockSpec((tm, N), lambda i: (i, 0)),
            pl.BlockSpec((1, N), lambda i: (0, 0)),
            pl.BlockSpec((1, N), lambda i: (0, 0)),
        ],
        out_specs=pl.BlockSpec((tm, N), lambda i: (i, 0)),
        compiler_params=_PAR,
    )(x, w, b.reshape(1, N), res, gamma.reshape(1, N), beta.reshape(1, N))


def _layernorm_kernel(x_ref, g_ref, b_ref, o_ref, *, eps):
    x = x_ref[...].astype(jnp.float32)
    mean = jnp.mean(x, axis=-1, keepdims=True)
    var = jnp.mean(jnp.square(x - mean), axis=-1, keepdims=True)
    y = (x - mean) * jax.lax.rsqrt(var + eps)
    o_ref[...] = (y * g_ref[...] + b_ref[...]).astype(o_ref.dtype)


def layernorm(x, gamma, beta):
    """Standalone LN (embedding path only). x: [M, H] -> bf16 [M, H]."""
    M, H = x.shape
    tm = _row_tile(M)
    return pl.pallas_call(
        functools.partial(_layernorm_kernel, eps=LN_EPS),
        grid=(M // tm,),
        out_shape=jax.ShapeDtypeStruct((M, H), MM_DT),
        in_specs=[
            pl.BlockSpec((tm, H), lambda i: (i, 0)),
            pl.BlockSpec((1, H), lambda i: (0, 0)),
            pl.BlockSpec((1, H), lambda i: (0, 0)),
        ],
        out_specs=pl.BlockSpec((tm, H), lambda i: (i, 0)),
        compiler_params=_PAR,
    )(x, gamma.reshape(1, H), beta.reshape(1, H))


def _attention_kernel(qkv_ref, bias_ref, o_ref, *, scale, n_heads, head_dim):
    """All heads of one batch element; qkv block is lane-dense [S, 3H]."""
    H = n_heads * head_dim
    qkv = qkv_ref[0]                            # [S, 3H] bf16
    bias = bias_ref[0].astype(jnp.float32)      # [1, S] additive mask (0 / -1e9)
    outs = []
    for h in range(n_heads):                    # static unrolled head loop
        q = qkv[:, h * head_dim:(h + 1) * head_dim]
        k = qkv[:, H + h * head_dim:H + (h + 1) * head_dim]
        v = qkv[:, 2 * H + h * head_dim:2 * H + (h + 1) * head_dim]
        s = jnp.dot(q, k.T, preferred_element_type=jnp.float32) * scale + bias
        # Fully-masked rows get a uniform softmax over -1e9 scores — this
        # matches the PyTorch reference behavior; do not "fix" it.
        m = jnp.max(s, axis=-1, keepdims=True)
        p = jnp.exp(s - m)
        denom = jnp.sum(p, axis=-1, keepdims=True)
        ctx = jnp.dot(p.astype(MM_DT), v, preferred_element_type=jnp.float32)
        ctx = ctx * pl.reciprocal(denom, approx=True)
        outs.append(ctx.astype(o_ref.dtype))
    o_ref[0] = jnp.concatenate(outs, axis=-1)   # single lane-dense [S, H] store


def attention(qkv, mask_bias):
    """qkv: [B, S, 3H] bf16, mask_bias: [B, 1, S] f32 -> [B, S, H] bf16."""
    B, S, threeH = qkv.shape
    H = threeH // 3
    return pl.pallas_call(
        functools.partial(_attention_kernel, scale=1.0 / (HEAD_DIM ** 0.5),
                          n_heads=N_HEADS, head_dim=HEAD_DIM),
        grid=(B,),
        out_shape=jax.ShapeDtypeStruct((B, S, H), MM_DT),
        in_specs=[
            pl.BlockSpec((1, S, threeH), lambda b: (b, 0, 0)),
            pl.BlockSpec((1, 1, S), lambda b: (b, 0, 0)),
        ],
        out_specs=pl.BlockSpec((1, S, H), lambda b: (b, 0, 0)),
        compiler_params=_PAR,
    )(qkv, mask_bias)


def _cls_head_kernel(x_ref, w1_ref, b1_ref, w2_ref, b2_ref, o_ref):
    # pre_classifier -> sigmoid -> dropout(0.3)=identity (inference) -> classifier
    h = jnp.dot(x_ref[...], w1_ref[...], preferred_element_type=jnp.float32)
    h = jax.nn.sigmoid(h + b1_ref[...].astype(jnp.float32))
    y = jnp.dot(h.astype(MM_DT), w2_ref[...], preferred_element_type=jnp.float32)
    o_ref[...] = (y + b2_ref[...].astype(jnp.float32)).astype(o_ref.dtype)


def classifier_head(cls, w1, b1, w2p, b2p):
    """cls: [B, H] bf16 -> logits [B, NUM_CLASSES] f32 (fused head)."""
    B, H = cls.shape
    Np = w2p.shape[1]
    out = pl.pallas_call(
        _cls_head_kernel,
        grid=(1,),
        out_shape=jax.ShapeDtypeStruct((B, Np), jnp.float32),
        in_specs=[
            pl.BlockSpec((B, H), lambda i: (0, 0)),
            pl.BlockSpec((H, H), lambda i: (0, 0)),
            pl.BlockSpec((1, H), lambda i: (0, 0)),
            pl.BlockSpec((H, Np), lambda i: (0, 0)),
            pl.BlockSpec((1, Np), lambda i: (0, 0)),
        ],
        out_specs=pl.BlockSpec((B, Np), lambda i: (0, 0)),
    )(cls, w1, b1.reshape(1, H), w2p, b2p.reshape(1, Np))
    return out[:, :NUM_CLASSES]        # drop lane-padding columns


# --------------------------------------------------------------------------
# Deterministic parameter init (shapes follow DistilBERT + classifier head)
# --------------------------------------------------------------------------
def init_params(key):
    def dense(key, k_in, k_out):
        w = (0.02 * jax.random.normal(key, (k_in, k_out), jnp.float32)).astype(MM_DT)
        return w, jnp.zeros((k_out,), PARAM_DT)

    keys = jax.random.split(key, 4 + 8 * N_LAYERS)
    p = {
        "word_emb": 0.02 * jax.random.normal(keys[0], (VOCAB, HIDDEN), PARAM_DT),
        "pos_emb": 0.02 * jax.random.normal(keys[1], (MAX_POS, HIDDEN), PARAM_DT),
        "emb_ln_g": jnp.ones((HIDDEN,), PARAM_DT),
        "emb_ln_b": jnp.zeros((HIDDEN,), PARAM_DT),
        "layers": [],
    }
    ki = 4
    for _ in range(N_LAYERS):
        lyr = {}
        q_w, q_b = dense(keys[ki + 0], HIDDEN, HIDDEN)
        k_w, k_b = dense(keys[ki + 1], HIDDEN, HIDDEN)
        v_w, v_b = dense(keys[ki + 2], HIDDEN, HIDDEN)
        lyr["qkv_w"] = jnp.concatenate([q_w, k_w, v_w], axis=1)     # [H, 3H]
        lyr["qkv_b"] = jnp.concatenate([q_b, k_b, v_b], axis=0)     # [3H]
        lyr["o_w"], lyr["o_b"] = dense(keys[ki + 3], HIDDEN, HIDDEN)
        lyr["ff1_w"], lyr["ff1_b"] = dense(keys[ki + 4], HIDDEN, FFN)
        lyr["ff2_w"], lyr["ff2_b"] = dense(keys[ki + 5], FFN, HIDDEN)
        lyr["ln1_g"] = jnp.ones((HIDDEN,), PARAM_DT)
        lyr["ln1_b"] = jnp.zeros((HIDDEN,), PARAM_DT)
        lyr["ln2_g"] = jnp.ones((HIDDEN,), PARAM_DT)
        lyr["ln2_b"] = jnp.zeros((HIDDEN,), PARAM_DT)
        p["layers"].append(lyr)
        ki += 8
    pre_key, cls_key = keys[2], keys[3]
    p["pre_w"], p["pre_b"] = dense(pre_key, HIDDEN, HIDDEN)
    cls_w, cls_b = dense(cls_key, HIDDEN, NUM_CLASSES)
    # Pad classifier weight/bias to a lane-dense width (zeros); the padded
    # logit columns are sliced off in classifier_head().
    p["cls_w"] = jnp.pad(cls_w, ((0, 0), (0, CLS_PAD - NUM_CLASSES)))
    p["cls_b"] = jnp.pad(cls_b, ((0, CLS_PAD - NUM_CLASSES),))
    return p


# --------------------------------------------------------------------------
# Forward pass (mirrors DistilBertClass.forward, inference mode)
# --------------------------------------------------------------------------
def distilbert_class_forward(params, input_ids, attn_mask):
    B, S = input_ids.shape
    H = HIDDEN

    # Embedding gather stays in plain JAX; LN runs as a Pallas kernel.
    x = params["word_emb"][input_ids] + params["pos_emb"][jnp.arange(S)][None]
    x = layernorm(x.reshape(B * S, H), params["emb_ln_g"], params["emb_ln_b"])

    # Additive attention-mask bias, precomputed once: 0 = keep, -1e9 = pad.
    mask_bias = (1.0 - attn_mask.astype(jnp.float32)).reshape(B, 1, S) * -1e9

    for lyr in params["layers"]:
        qkv = linear(x, lyr["qkv_w"], lyr["qkv_b"])              # fused QKV [B*S, 3H]
        ctx = attention(qkv.reshape(B, S, 3 * H), mask_bias)     # [B, S, H]
        x = linear_res_ln(ctx.reshape(B * S, H), lyr["o_w"], lyr["o_b"],
                          x, lyr["ln1_g"], lyr["ln1_b"])         # O-proj + residual + LN
        ff = linear(x, lyr["ff1_w"], lyr["ff1_b"], activation="gelu")
        x = linear_res_ln(ff, lyr["ff2_w"], lyr["ff2_b"],
                          x, lyr["ln2_g"], lyr["ln2_b"])         # FF2 + residual + LN

    cls = x.reshape(B, S, H)[:, 0]                               # last_hidden_state[:, 0]
    logits = classifier_head(cls, params["pre_w"], params["pre_b"],
                             params["cls_w"], params["cls_b"])   # [B, NUM_CLASSES]
    return logits


# --------------------------------------------------------------------------
if __name__ == "__main__":
    key = jax.random.PRNGKey(0)
    pkey, ikey = jax.random.split(key)
    params = init_params(pkey)

    B, S = 2, 16
    input_ids = jax.random.randint(ikey, (B, S), 0, VOCAB, dtype=jnp.int32)
    attn_mask = jnp.concatenate(
        [jnp.ones((B, S - 4), jnp.int32),
         jnp.array([[1, 1, 1, 1], [0, 0, 0, 0]], jnp.int32)], axis=1)

    fwd = jax.jit(distilbert_class_forward)
    logits = fwd(params, input_ids, attn_mask)
    jax.block_until_ready(logits)
    assert logits.shape == (B, NUM_CLASSES)
    print("KERNEL_OK")
</pallas_src>

<mosaic_0001>
module attributes {stable_mosaic.version = 11 : i64} {
  func.func @_layernorm_kernel(%arg0: i32, %arg1: memref<32x128xf32, #tpu.memory_space<vmem>>, %arg2: memref<1x128xf32, #tpu.memory_space<vmem>>, %arg3: memref<1x128xf32, #tpu.memory_space<vmem>>, %arg4: memref<32x128xbf16, #tpu.memory_space<vmem>>) attributes {dimension_semantics = [#tpu.dimension_semantics<parallel>], iteration_bounds = array<i64: 1>, scalar_prefetch = 0 : i64, scratch_operands = 0 : i64, tpu.core_type = #tpu.core_type<tc>, window_params = [{transform_indices = @transform_0, window_bounds = array<i64: 32, 128>}, {pipeline_mode = #tpu.pipeline_mode<synchronous>, transform_indices = @transform_1, window_bounds = array<i64: 1, 128>}, {pipeline_mode = #tpu.pipeline_mode<synchronous>, transform_indices = @transform_2, window_bounds = array<i64: 1, 128>}, {transform_indices = @transform_3, window_bounds = array<i64: 32, 128>}]} {
    %c0 = arith.constant 0 : index
    %c0_0 = arith.constant 0 : index
    %0 = vector.load %arg1[%c0, %c0_0] : memref<32x128xf32, #tpu.memory_space<vmem>>, vector<32x128xf32>
    %cst = arith.constant dense<0.000000e+00> : vector<32xf32>
    %1 = vector.multi_reduction <add>, %0, %cst [1] : vector<32x128xf32> to vector<32xf32>
    %2 = vector.shape_cast %1 : vector<32xf32> to vector<32x1xf32>
    %cst_1 = arith.constant 1.280000e+02 : f32
    %3 = vector.broadcast %cst_1 : f32 to vector<32x1xf32>
    %4 = arith.divf %2, %3 : vector<32x1xf32>
    %5 = vector.broadcast %4 : vector<32x1xf32> to vector<32x128xf32>
    %6 = arith.subf %0, %5 : vector<32x128xf32>
    %7 = arith.mulf %6, %6 : vector<32x128xf32>
    %cst_2 = arith.constant dense<0.000000e+00> : vector<32xf32>
    %8 = vector.multi_reduction <add>, %7, %cst_2 [1] : vector<32x128xf32> to vector<32xf32>
    %9 = vector.shape_cast %8 : vector<32xf32> to vector<32x1xf32>
    %cst_3 = arith.constant 1.280000e+02 : f32
    %10 = vector.broadcast %cst_3 : f32 to vector<32x1xf32>
    %11 = arith.divf %9, %10 : vector<32x1xf32>
    %12 = vector.broadcast %4 : vector<32x1xf32> to vector<32x128xf32>
    %13 = arith.subf %0, %12 : vector<32x128xf32>
    %cst_4 = arith.constant 9.99999996E-13 : f32
    %14 = vector.broadcast %cst_4 : f32 to vector<32x1xf32>
    %15 = arith.addf %11, %14 : vector<32x1xf32>
    %16 = math.rsqrt %15 : vector<32x1xf32>
    %17 = vector.broadcast %16 : vector<32x1xf32> to vector<32x128xf32>
    %18 = arith.mulf %13, %17 : vector<32x128xf32>
    %c0_5 = arith.constant 0 : index
    %c0_6 = arith.constant 0 : index
    %19 = vector.load %arg2[%c0_5, %c0_6] : memref<1x128xf32, #tpu.memory_space<vmem>>, vector<1x128xf32>
    %20 = vector.broadcast %19 : vector<1x128xf32> to vector<32x128xf32>
    %21 = arith.mulf %18, %20 : vector<32x128xf32>
    %c0_7 = arith.constant 0 : index
    %c0_8 = arith.constant 0 : index
    %22 = vector.load %arg3[%c0_7, %c0_8] : memref<1x128xf32, #tpu.memory_space<vmem>>, vector<1x128xf32>
    %23 = vector.broadcast %22 : vector<1x128xf32> to vector<32x128xf32>
    %24 = arith.addf %21, %23 : vector<32x128xf32>
    %25 = arith.truncf %24 : vector<32x128xf32> to vector<32x128xbf16>
    %c0_9 = arith.constant 0 : index
    %c0_10 = arith.constant 0 : index
    %26 = vector.load %arg4[%c0_9, %c0_10] : memref<32x128xbf16, #tpu.memory_space<vmem>>, vector<32x128xbf16>
    tpu.vector_store %arg4[%c0_9, %c0_10], %25 {strides = array<i32>} : memref<32x128xbf16, #tpu.memory_space<vmem>>, vector<32x128xbf16>,
    return
  }
  func.func @transform_0(%arg0: i32) -> (i32, i32) {
    %c0_i32 = arith.constant 0 : i32
    %c0_i32_0 = arith.constant 0 : i32
    return %arg0, %c0_i32 : i32, i32
  }
  func.func @transform_1(%arg0: i32) -> (i32, i32) {
    %c0_i32 = arith.constant 0 : i32
    %c0_i32_0 = arith.constant 0 : i32
    %c0_i32_1 = arith.constant 0 : i32
    return %c0_i32, %c0_i32_0 : i32, i32
  }
  func.func @transform_2(%arg0: i32) -> (i32, i32) {
    %c0_i32 = arith.constant 0 : i32
    %c0_i32_0 = arith.constant 0 : i32
    %c0_i32_1 = arith.constant 0 : i32
    return %c0_i32, %c0_i32_0 : i32, i32
  }
  func.func @transform_3(%arg0: i32) -> (i32, i32) {
    %c0_i32 = arith.constant 0 : i32
    %c0_i32_0 = arith.constant 0 : i32
    return %arg0, %c0_i32 : i32, i32
  }
}

module attributes {stable_mosaic.version = 11 : i64} {
  func.func @_linear_kernel(%arg0: i32, %arg1: memref<32x128xbf16, #tpu.memory_space<vmem>>, %arg2: memref<128x384xbf16, #tpu.memory_space<vmem>>, %arg3: memref<1x384xf32, #tpu.memory_space<vmem>>, %arg4: memref<32x384xbf16, #tpu.memory_space<vmem>>) attributes {dimension_semantics = [#tpu.dimension_semantics<parallel>], iteration_bounds = array<i64: 1>, scalar_prefetch = 0 : i64, scratch_operands = 0 : i64, tpu.core_type = #tpu.core_type<tc>, window_params = [{transform_indices = @transform_0, window_bounds = array<i64: 32, 128>}, {pipeline_mode = #tpu.pipeline_mode<synchronous>, transform_indices = @transform_1, window_bounds = array<i64: 128, 384>}, {pipeline_mode = #tpu.pipeline_mode<synchronous>, transform_indices = @transform_2, window_bounds = array<i64: 1, 384>}, {transform_indices = @transform_3, window_bounds = array<i64: 32, 384>}]} {
    %c0 = arith.constant 0 : index
    %c0_0 = arith.constant 0 : index
    %0 = vector.load %arg1[%c0, %c0_0] : memref<32x128xbf16, #tpu.memory_space<vmem>>, vector<32x128xbf16>
    %c0_1 = arith.constant 0 : index
    %c0_2 = arith.constant 0 : index
    %1 = vector.load %arg2[%c0_1, %c0_2] : memref<128x384xbf16, #tpu.memory_space<vmem>>, vector<128x384xbf16>
    %cst = arith.constant dense<0.000000e+00> : vector<32x384xf32>
    %2 = tpu.matmul %0, %1, %cst {dimension_numbers = #tpu.dot_dimension_numbers<[1], [0], [0], [1], [0, 0, 1, 1], [], []>} : vector<32x128xbf16>, vector<128x384xbf16>, vector<32x384xf32> -> vector<32x384xf32>
    %c0_3 = arith.constant 0 : index
    %c0_4 = arith.constant 0 : index
    %3 = vector.load %arg3[%c0_3, %c0_4] : memref<1x384xf32, #tpu.memory_space<vmem>>, vector<1x384xf32>
    %4 = vector.broadcast %3 : vector<1x384xf32> to vector<32x384xf32>
    %5 = arith.addf %2, %4 : vector<32x384xf32>
    %6 = arith.truncf %5 : vector<32x384xf32> to vector<32x384xbf16>
    %c0_5 = arith.constant 0 : index
    %c0_6 = arith.constant 0 : index
    %7 = vector.load %arg4[%c0_5, %c0_6] : memref<32x384xbf16, #tpu.memory_space<vmem>>, vector<32x384xbf16>
    tpu.vector_store %arg4[%c0_5, %c0_6], %6 {strides = array<i32>} : memref<32x384xbf16, #tpu.memory_space<vmem>>, vector<32x384xbf16>,
    return
  }
  func.func @transform_0(%arg0: i32) -> (i32, i32) {
    %c0_i32 = arith.constant 0 : i32
    %c0_i32_0 = arith.constant 0 : i32
    return %arg0, %c0_i32 : i32, i32
  }
  func.func @transform_1(%arg0: i32) -> (i32, i32) {
    %c0_i32 = arith.constant 0 : i32
    %c0_i32_0 = arith.constant 0 : i32
    %c0_i32_1 = arith.constant 0 : i32
    return %c0_i32, %c0_i32_0 : i32, i32
  }
  func.func @transform_2(%arg0: i32) -> (i32, i32) {
    %c0_i32 = arith.constant 0 : i32
    %c0_i32_0 = arith.constant 0 : i32
    %c0_i32_1 = arith.constant 0 : i32
    return %c0_i32, %c0_i32_0 : i32, i32
  }
  func.func @transform_3(%arg0: i32) -> (i32, i32) {
    %c0_i32 = arith.constant 0 : i32
    %c0_i32_0 = arith.constant 0 : i32
    return %arg0, %c0_i32 : i32, i32
  }
}

module attributes {stable_mosaic.version = 11 : i64} {
  func.func @_attention_kernel(%arg0: i32, %arg1: memref<1x16x384xbf16, #tpu.memory_space<vmem>>, %arg2: memref<1x1x16xf32, #tpu.memory_space<vmem>>, %arg3: memref<1x16x128xbf16, #tpu.memory_space<vmem>>) attributes {dimension_semantics = [#tpu.dimension_semantics<parallel>], iteration_bounds = array<i64: 2>, scalar_prefetch = 0 : i64, scratch_operands = 0 : i64, tpu.core_type = #tpu.core_type<tc>, window_params = [{transform_indices = @transform_0, window_bounds = array<i64: 1, 16, 384>}, {transform_indices = @transform_1, window_bounds = array<i64: 1, 1, 16>}, {transform_indices = @transform_2, window_bounds = array<i64: 1, 16, 128>}]} {
    %c0 = arith.constant 0 : index
    %c0_0 = arith.constant 0 : index
    %c0_1 = arith.constant 0 : index
    %0 = vector.load %arg1[%c0, %c0_0, %c0_1] : memref<1x16x384xbf16, #tpu.memory_space<vmem>>, vector<1x16x384xbf16>
    %1 = vector.shape_cast %0 : vector<1x16x384xbf16> to vector<16x384xbf16>
    %c0_2 = arith.constant 0 : index
    %c0_3 = arith.constant 0 : index
    %c0_4 = arith.constant 0 : index
    %2 = vector.load %arg2[%c0_2, %c0_3, %c0_4] : memref<1x1x16xf32, #tpu.memory_space<vmem>>, vector<1x1x16xf32>
    %3 = vector.shape_cast %2 : vector<1x1x16xf32> to vector<1x16xf32>
    %4 = vector.extract_strided_slice %1 {offsets = [0, 0], sizes = [16, 32], strides = [1, 1]} : vector<16x384xbf16> to vector<16x32xbf16>
    %5 = vector.extract_strided_slice %1 {offsets = [0, 128], sizes = [16, 32], strides = [1, 1]} : vector<16x384xbf16> to vector<16x32xbf16>
    %6 = vector.extract_strided_slice %1 {offsets = [0, 256], sizes = [16, 32], strides = [1, 1]} : vector<16x384xbf16> to vector<16x32xbf16>
    %7 = tpu.transpose %5, [1, 0] : vector<16x32xbf16> -> vector<32x16xbf16>
    %cst = arith.constant dense<0.000000e+00> : vector<16x16xf32>
    %8 = tpu.matmul %4, %7, %cst {dimension_numbers = #tpu.dot_dimension_numbers<[1], [0], [0], [1], [0, 0, 1, 1], [], []>} : vector<16x32xbf16>, vector<32x16xbf16>, vector<16x16xf32> -> vector<16x16xf32>
    %cst_5 = arith.constant 0.176776692 : f32
    %9 = vector.broadcast %cst_5 : f32 to vector<16x16xf32>
    %10 = arith.mulf %8, %9 : vector<16x16xf32>
    %11 = vector.broadcast %3 : vector<1x16xf32> to vector<16x16xf32>
    %12 = arith.addf %10, %11 : vector<16x16xf32>
    %cst_6 = arith.constant dense<0xFF800000> : vector<16xf32>
    %13 = vector.multi_reduction <maximumf>, %12, %cst_6 [1] : vector<16x16xf32> to vector<16xf32>
    %14 = vector.shape_cast %13 : vector<16xf32> to vector<16x1xf32>
    %15 = vector.broadcast %14 : vector<16x1xf32> to vector<16x16xf32>
    %16 = arith.subf %12, %15 : vector<16x16xf32>
    %17 = math.exp %16 : vector<16x16xf32>
    %cst_7 = arith.constant dense<0.000000e+00> : vector<16xf32>
    %18 = vector.multi_reduction <add>, %17, %cst_7 [1] : vector<16x16xf32> to vector<16xf32>
    %19 = vector.shape_cast %18 : vector<16xf32> to vector<16x1xf32>
    %20 = arith.truncf %17 : vector<16x16xf32> to vector<16x16xbf16>
    %cst_8 = arith.constant dense<0.000000e+00> : vector<16x32xf32>
    %21 = tpu.matmul %20, %6, %cst_8 {dimension_numbers = #tpu.dot_dimension_numbers<[1], [0], [0], [1], [0, 0, 1, 1], [], []>} : vector<16x16xbf16>, vector<16x32xbf16>, vector<16x32xf32> -> vector<16x32xf32>
    %22 = tpu.reciprocal %19 {approx = true} : vector<16x1xf32> -> vector<16x1xf32>
    %23 = vector.broadcast %22 : vector<16x1xf32> to vector<16x32xf32>
    %24 = arith.mulf %21, %23 : vector<16x32xf32>
    %25 = arith.truncf %24 : vector<16x32xf32> to vector<16x32xbf16>
    %26 = vector.extract_strided_slice %1 {offsets = [0, 32], sizes = [16, 32], strides = [1, 1]} : vector<16x384xbf16> to vector<16x32xbf16>
    %27 = vector.extract_strided_slice %1 {offsets = [0, 160], sizes = [16, 32], strides = [1, 1]} : vector<16x384xbf16> to vector<16x32xbf16>
    %28 = vector.extract_strided_slice %1 {offsets = [0, 288], sizes = [16, 32], strides = [1, 1]} : vector<16x384xbf16> to vector<16x32xbf16>
    %29 = tpu.transpose %27, [1, 0] : vector<16x32xbf16> -> vector<32x16xbf16>
    %cst_9 = arith.constant dense<0.000000e+00> : vector<16x16xf32>
    %30 = tpu.matmul %26, %29, %cst_9 {dimension_numbers = #tpu.dot_dimension_numbers<[1], [0], [0], [1], [0, 0, 1, 1], [], []>} : vector<16x32xbf16>, vector<32x16xbf16>, vector<16x16xf32> -> vector<16x16xf32>
    %cst_10 = arith.constant 0.176776692 : f32
    %31 = vector.broadcast %cst_10 : f32 to vector<16x16xf32>
    %32 = arith.mulf %30, %31 : vector<16x16xf32>
    %33 = vector.broadcast %3 : vector<1x16xf32> to vector<16x16xf32>
    %34 = arith.addf %32, %33 : vector<16x16xf32>
    %cst_11 = arith.constant dense<0xFF800000> : vector<16xf32>
    %35 = vector.multi_reduction <maximumf>, %34, %cst_11 [1] : vector<16x16xf32> to vector<16xf32>
    %36 = vector.shape_cast %35 : vector<16xf32> to vector<16x1xf32>
    %37 = vector.broadcast %36 : vector<16x1xf32> to vector<16x16xf32>
    %38 = arith.subf %34, %37 : vector<16x16xf32>
    %39 = math.exp %38 : vector<16x16xf32>
    %cst_12 = arith.constant dense<0.000000e+00> : vector<16xf32>
    %40 = vector.multi_reduction <add>, %39, %cst_12 [1] : vector<16x16xf32> to vector<16xf32>
    %41 = vector.shape_cast %40 : vector<16xf32> to vector<16x1xf32>
    %42 = arith.truncf %39 : vector<16x16xf32> to vector<16x16xbf16>
    %cst_13 = arith.constant dense<0.000000e+00> : vector<16x32xf32>
    %43 = tpu.matmul %42, %28, %cst_13 {dimension_numbers = #tpu.dot_dimension_numbers<[1], [0], [0], [1], [0, 0, 1, 1], [], []>} : vector<16x16xbf16>, vector<16x32xbf16>, vector<16x32xf32> -> vector<16x32xf32>
    %44 = tpu.reciprocal %41 {approx = true} : vector<16x1xf32> -> vector<16x1xf32>
    %45 = vector.broadcast %44 : vector<16x1xf32> to vector<16x32xf32>
    %46 = arith.mulf %43, %45 : vector<16x32xf32>
    %47 = arith.truncf %46 : vector<16x32xf32> to vector<16x32xbf16>
    %48 = vector.extract_strided_slice %1 {offsets = [0, 64], sizes = [16, 32], strides = [1, 1]} : vector<16x384xbf16> to vector<16x32xbf16>
    %49 = vector.extract_strided_slice %1 {offsets = [0, 192], sizes = [16, 32], strides = [1, 1]} : vector<16x384xbf16> to vector<16x32xbf16>
    %50 = vector.extract_strided_slice %1 {offsets = [0, 320], sizes = [16, 32], strides = [1, 1]} : vector<16x384xbf16> to vector<16x32xbf16>
    %51 = tpu.transpose %49, [1, 0] : vector<16x32xbf16> -> vector<32x16xbf16>
    %cst_14 = arith.constant dense<0.000000e+00> : vector<16x16xf32>
    %52 = tpu.matmul %48, %51, %cst_14 {dimension_numbers = #tpu.dot_dimension_numbers<[1], [0], [0], [1], [0, 0, 1, 1], [], []>} : vector<16x32xbf16>, vector<32x16xbf16>, vector<16x16xf32> -> vector<16x16xf32>
    %cst_15 = arith.constant 0.176776692 : f32
    %53 = vector.broadcast %cst_15 : f32 to vector<16x16xf32>
    %54 = arith.mulf %52, %53 : vector<16x16xf32>
    %55 = vector.broadcast %3 : vector<1x16xf32> to vector<16x16xf32>
    %56 = arith.addf %54, %55 : vector<16x16xf32>
    %cst_16 = arith.constant dense<0xFF800000> : vector<16xf32>
    %57 = vector.multi_reduction <maximumf>, %56, %cst_16 [1] : vector<16x16xf32> to vector<16xf32>
    %58 = vector.shape_cast %57 : vector<16xf32> to vector<16x1xf32>
    %59 = vector.broadcast %58 : vector<16x1xf32> to vector<16x16xf32>
    %60 = arith.subf %56, %59 : vector<16x16xf32>
    %61 = math.exp %60 : vector<16x16xf32>
    %cst_17 = arith.constant dense<0.000000e+00> : vector<16xf32>
    %62 = vector.multi_reduction <add>, %61, %cst_17 [1] : vector<16x16xf32> to vector<16xf32>
    %63 = vector.shape_cast %62 : vector<16xf32> to vector<16x1xf32>
    %64 = arith.truncf %61 : vector<16x16xf32> to vector<16x16xbf16>
    %cst_18 = arith.constant dense<0.000000e+00> : vector<16x32xf32>
    %65 = tpu.matmul %64, %50, %cst_18 {dimension_numbers = #tpu.dot_dimension_numbers<[1], [0], [0], [1], [0, 0, 1, 1], [], []>} : vector<16x16xbf16>, vector<16x32xbf16>, vector<16x32xf32> -> vector<16x32xf32>
    %66 = tpu.reciprocal %63 {approx = true} : vector<16x1xf32> -> vector<16x1xf32>
    %67 = vector.broadcast %66 : vector<16x1xf32> to vector<16x32xf32>
    %68 = arith.mulf %65, %67 : vector<16x32xf32>
    %69 = arith.truncf %68 : vector<16x32xf32> to vector<16x32xbf16>
    %70 = vector.extract_strided_slice %1 {offsets = [0, 96], sizes = [16, 32], strides = [1, 1]} : vector<16x384xbf16> to vector<16x32xbf16>
    %71 = vector.extract_strided_slice %1 {offsets = [0, 224], sizes = [16, 32], strides = [1, 1]} : vector<16x384xbf16> to vector<16x32xbf16>
    %72 = vector.extract_strided_slice %1 {offsets = [0, 352], sizes = [16, 32], strides = [1, 1]} : vector<16x384xbf16> to vector<16x32xbf16>
    %73 = tpu.transpose %71, [1, 0] : vector<16x32xbf16> -> vector<32x16xbf16>
    %cst_19 = arith.constant dense<0.000000e+00> : vector<16x16xf32>
    %74 = tpu.matmul %70, %73, %cst_19 {dimension_numbers = #tpu.dot_dimension_numbers<[1], [0], [0], [1], [0, 0, 1, 1], [], []>} : vector<16x32xbf16>, vector<32x16xbf16>, vector<16x16xf32> -> vector<16x16xf32>
    %cst_20 = arith.constant 0.176776692 : f32
    %75 = vector.broadcast %cst_20 : f32 to vector<16x16xf32>
    %76 = arith.mulf %74, %75 : vector<16x16xf32>
    %77 = vector.broadcast %3 : vector<1x16xf32> to vector<16x16xf32>
    %78 = arith.addf %76, %77 : vector<16x16xf32>
    %cst_21 = arith.constant dense<0xFF800000> : vector<16xf32>
    %79 = vector.multi_reduction <maximumf>, %78, %cst_21 [1] : vector<16x16xf32> to vector<16xf32>
    %80 = vector.shape_cast %79 : vector<16xf32> to vector<16x1xf32>
    %81 = vector.broadcast %80 : vector<16x1xf32> to vector<16x16xf32>
    %82 = arith.subf %78, %81 : vector<16x16xf32>
    %83 = math.exp %82 : vector<16x16xf32>
    %cst_22 = arith.constant dense<0.000000e+00> : vector<16xf32>
    %84 = vector.multi_reduction <add>, %83, %cst_22 [1] : vector<16x16xf32> to vector<16xf32>
    %85 = vector.shape_cast %84 : vector<16xf32> to vector<16x1xf32>
    %86 = arith.truncf %83 : vector<16x16xf32> to vector<16x16xbf16>
    %cst_23 = arith.constant dense<0.000000e+00> : vector<16x32xf32>
    %87 = tpu.matmul %86, %72, %cst_23 {dimension_numbers = #tpu.dot_dimension_numbers<[1], [0], [0], [1], [0, 0, 1, 1], [], []>} : vector<16x16xbf16>, vector<16x32xbf16>, vector<16x32xf32> -> vector<16x32xf32>
    %88 = tpu.reciprocal %85 {approx = true} : vector<16x1xf32> -> vector<16x1xf32>
    %89 = vector.broadcast %88 : vector<16x1xf32> to vector<16x32xf32>
    %90 = arith.mulf %87, %89 : vector<16x32xf32>
    %91 = arith.truncf %90 : vector<16x32xf32> to vector<16x32xbf16>
    %92 = tpu.concatenate %25, %47, %69, %91 in 1 : vector<16x32xbf16>, vector<16x32xbf16>, vector<16x32xbf16>, vector<16x32xbf16> -> vector<16x128xbf16>
    %c0_24 = arith.constant 0 : index
    %c0_25 = arith.constant 0 : index
    %c0_26 = arith.constant 0 : index
    %93 = vector.load %arg3[%c0_24, %c0_25, %c0_26] : memref<1x16x128xbf16, #tpu.memory_space<vmem>>, vector<1x16x128xbf16>
    %94 = vector.shape_cast %93 : vector<1x16x128xbf16> to vector<16x128xbf16>
    %95 = vector.shape_cast %92 : vector<16x128xbf16> to vector<1x16x128xbf16>
    tpu.vector_store %arg3[%c0_24, %c0_25, %c0_26], %95 {strides = array<i32>} : memref<1x16x128xbf16, #tpu.memory_space<vmem>>, vector<1x16x128xbf16>,
    return
  }
  func.func @transform_0(%arg0: i32) -> (i32, i32, i32) {
    %c0_i32 = arith.constant 0 : i32
    %c0_i32_0 = arith.constant 0 : i32
    %c0_i32_1 = arith.constant 0 : i32
    return %arg0, %c0_i32, %c0_i32_0 : i32, i32, i32
  }
  func.func @transform_1(%arg0: i32) -> (i32, i32, i32) {
    %c0_i32 = arith.constant 0 : i32
    %c0_i32_0 = arith.constant 0 : i32
    %c0_i32_1 = arith.constant 0 : i32
    return %arg0, %c0_i32, %c0_i32_0 : i32, i32, i32
  }
  func.func @transform_2(%arg0: i32) -> (i32, i32, i32) {
    %c0_i32 = arith.constant 0 : i32
    %c0_i32_0 = arith.constant 0 : i32
    %c0_i32_1 = arith.constant 0 : i32
    return %arg0, %c0_i32, %c0_i32_0 : i32, i32, i32
  }
}

module attributes {stable_mosaic.version = 11 : i64} {
  func.func @_linear_res_ln_kernel(%arg0: i32, %arg1: memref<32x128xbf16, #tpu.memory_space<vmem>>, %arg2: memref<128x128xbf16, #tpu.memory_space<vmem>>, %arg3: memref<1x128xf32, #tpu.memory_space<vmem>>, %arg4: memref<32x128xbf16, #tpu.memory_space<vmem>>, %arg5: memref<1x128xf32, #tpu.memory_space<vmem>>, %arg6: memref<1x128xf32, #tpu.memory_space<vmem>>, %arg7: memref<32x128xbf16, #tpu.memory_space<vmem>>) attributes {dimension_semantics = [#tpu.dimension_semantics<parallel>], iteration_bounds = array<i64: 1>, scalar_prefetch = 0 : i64, scratch_operands = 0 : i64, tpu.core_type = #tpu.core_type<tc>, window_params = [{transform_indices = @transform_0, window_bounds = array<i64: 32, 128>}, {pipeline_mode = #tpu.pipeline_mode<synchronous>, transform_indices = @transform_1, window_bounds = array<i64: 128, 128>}, {pipeline_mode = #tpu.pipeline_mode<synchronous>, transform_indices = @transform_2, window_bounds = array<i64: 1, 128>}, {transform_indices = @transform_3, window_bounds = array<i64: 32, 128>}, {pipeline_mode = #tpu.pipeline_mode<synchronous>, transform_indices = @transform_4, window_bounds = array<i64: 1, 128>}, {pipeline_mode = #tpu.pipeline_mode<synchronous>, transform_indices = @transform_5, window_bounds = array<i64: 1, 128>}, {transform_indices = @transform_6, window_bounds = array<i64: 32, 128>}]} {
    %c0 = arith.constant 0 : index
    %c0_0 = arith.constant 0 : index
    %0 = vector.load %arg1[%c0, %c0_0] : memref<32x128xbf16, #tpu.memory_space<vmem>>, vector<32x128xbf16>
    %c0_1 = arith.constant 0 : index
    %c0_2 = arith.constant 0 : index
    %1 = vector.load %arg2[%c0_1, %c0_2] : memref<128x128xbf16, #tpu.memory_space<vmem>>, vector<128x128xbf16>
    %cst = arith.constant dense<0.000000e+00> : vector<32x128xf32>
    %2 = tpu.matmul %0, %1, %cst {dimension_numbers = #tpu.dot_dimension_numbers<[1], [0], [0], [1], [0, 0, 1, 1], [], []>} : vector<32x128xbf16>, vector<128x128xbf16>, vector<32x128xf32> -> vector<32x128xf32>
    %c0_3 = arith.constant 0 : index
    %c0_4 = arith.constant 0 : index
    %3 = vector.load %arg3[%c0_3, %c0_4] : memref<1x128xf32, #tpu.memory_space<vmem>>, vector<1x128xf32>
    %4 = vector.broadcast %3 : vector<1x128xf32> to vector<32x128xf32>
    %5 = arith.addf %2, %4 : vector<32x128xf32>
    %c0_5 = arith.constant 0 : index
    %c0_6 = arith.constant 0 : index
    %6 = vector.load %arg4[%c0_5, %c0_6] : memref<32x128xbf16, #tpu.memory_space<vmem>>, vector<32x128xbf16>
    %7 = arith.extf %6 : vector<32x128xbf16> to vector<32x128xf32>
    %8 = arith.addf %5, %7 : vector<32x128xf32>
    %cst_7 = arith.constant dense<0.000000e+00> : vector<32xf32>
    %9 = vector.multi_reduction <add>, %8, %cst_7 [1] : vector<32x128xf32> to vector<32xf32>
    %10 = vector.shape_cast %9 : vector<32xf32> to vector<32x1xf32>
    %cst_8 = arith.constant 1.280000e+02 : f32
    %11 = vector.broadcast %cst_8 : f32 to vector<32x1xf32>
    %12 = arith.divf %10, %11 : vector<32x1xf32>
    %13 = vector.broadcast %12 : vector<32x1xf32> to vector<32x128xf32>
    %14 = arith.subf %8, %13 : vector<32x128xf32>
    %15 = arith.mulf %14, %14 : vector<32x128xf32>
    %cst_9 = arith.constant dense<0.000000e+00> : vector<32xf32>
    %16 = vector.multi_reduction <add>, %15, %cst_9 [1] : vector<32x128xf32> to vector<32xf32>
    %17 = vector.shape_cast %16 : vector<32xf32> to vector<32x1xf32>
    %cst_10 = arith.constant 1.280000e+02 : f32
    %18 = vector.broadcast %cst_10 : f32 to vector<32x1xf32>
    %19 = arith.divf %17, %18 : vector<32x1xf32>
    %20 = vector.broadcast %12 : vector<32x1xf32> to vector<32x128xf32>
    %21 = arith.subf %8, %20 : vector<32x128xf32>
    %cst_11 = arith.constant 9.99999996E-13 : f32
    %22 = vector.broadcast %cst_11 : f32 to vector<32x1xf32>
    %23 = arith.addf %19, %22 : vector<32x1xf32>
    %24 = math.rsqrt %23 : vector<32x1xf32>
    %25 = vector.broadcast %24 : vector<32x1xf32> to vector<32x128xf32>
    %26 = arith.mulf %21, %25 : vector<32x128xf32>
    %c0_12 = arith.constant 0 : index
    %c0_13 = arith.constant 0 : index
    %27 = vector.load %arg5[%c0_12, %c0_13] : memref<1x128xf32, #tpu.memory_space<vmem>>, vector<1x128xf32>
    %28 = vector.broadcast %27 : vector<1x128xf32> to vector<32x128xf32>
    %29 = arith.mulf %26, %28 : vector<32x128xf32>
    %c0_14 = arith.constant 0 : index
    %c0_15 = arith.constant 0 : index
    %30 = vector.load %arg6[%c0_14, %c0_15] : memref<1x128xf32, #tpu.memory_space<vmem>>, vector<1x128xf32>
    %31 = vector.broadcast %30 : vector<1x128xf32> to vector<32x128xf32>
    %32 = arith.addf %29, %31 : vector<32x128xf32>
    %33 = arith.truncf %32 : vector<32x128xf32> to vector<32x128xbf16>
    %c0_16 = arith.constant 0 : index
    %c0_17 = arith.constant 0 : index
    %34 = vector.load %arg7[%c0_16, %c0_17] : memref<32x128xbf16, #tpu.memory_space<vmem>>, vector<32x128xbf16>
    tpu.vector_store %arg7[%c0_16, %c0_17], %33 {strides = array<i32>} : memref<32x128xbf16, #tpu.memory_space<vmem>>, vector<32x128xbf16>,
    return
  }
  func.func @transform_0(%arg0: i32) -> (i32, i32) {
    %c0_i32 = arith.constant 0 : i32
    %c0_i32_0 = arith.constant 0 : i32
    return %arg0, %c0_i32 : i32, i32
  }
  func.func @transform_1(%arg0: i32) -> (i32, i32) {
    %c0_i32 = arith.constant 0 : i32
    %c0_i32_0 = arith.constant 0 : i32
    %c0_i32_1 = arith.constant 0 : i32
    return %c0_i32, %c0_i32_0 : i32, i32
  }
  func.func @transform_2(%arg0: i32) -> (i32, i32) {
    %c0_i32 = arith.constant 0 : i32
    %c0_i32_0 = arith.constant 0 : i32
    %c0_i32_1 = arith.constant 0 : i32
    return %c0_i32, %c0_i32_0 : i32, i32
  }
  func.func @transform_3(%arg0: i32) -> (i32, i32) {
    %c0_i32 = arith.constant 0 : i32
    %c0_i32_0 = arith.constant 0 : i32
    return %arg0, %c0_i32 : i32, i32
  }
  func.func @transform_4(%arg0: i32) -> (i32, i32) {
    %c0_i32 = arith.constant 0 : i32
    %c0_i32_0 = arith.constant 0 : i32
    %c0_i32_1 = arith.constant 0 : i32
    return %c0_i32, %c0_i32_0 : i32, i32
  }
  func.func @transform_5(%arg0: i32) -> (i32, i32) {
    %c0_i32 = arith.constant 0 : i32
    %c0_i32_0 = arith.constant 0 : i32
    %c0_i32_1 = arith.constant 0 : i32
    return %c0_i32, %c0_i32_0 : i32, i32
  }
  func.func @transform_6(%arg0: i32) -> (i32, i32) {
    %c0_i32 = arith.constant 0 : i32
    %c0_i32_0 = arith.constant 0 : i32
    return %arg0, %c0_i32 : i32, i32
  }
}

module attributes {stable_mosaic.version = 11 : i64} {
  func.func @_linear_kernel(%arg0: i32, %arg1: memref<32x128xbf16, #tpu.memory_space<vmem>>, %arg2: memref<128x256xbf16, #tpu.memory_space<vmem>>, %arg3: memref<1x256xf32, #tpu.memory_space<vmem>>, %arg4: memref<32x256xbf16, #tpu.memory_space<vmem>>) attributes {dimension_semantics = [#tpu.dimension_semantics<parallel>], iteration_bounds = array<i64: 1>, scalar_prefetch = 0 : i64, scratch_operands = 0 : i64, tpu.core_type = #tpu.core_type<tc>, window_params = [{transform_indices = @transform_0, window_bounds = array<i64: 32, 128>}, {pipeline_mode = #tpu.pipeline_mode<synchronous>, transform_indices = @transform_1, window_bounds = array<i64: 128, 256>}, {pipeline_mode = #tpu.pipeline_mode<synchronous>, transform_indices = @transform_2, window_bounds = array<i64: 1, 256>}, {transform_indices = @transform_3, window_bounds = array<i64: 32, 256>}]} {
    %c0 = arith.constant 0 : index
    %c0_0 = arith.constant 0 : index
    %0 = vector.load %arg1[%c0, %c0_0] : memref<32x128xbf16, #tpu.memory_space<vmem>>, vector<32x128xbf16>
    %c0_1 = arith.constant 0 : index
    %c0_2 = arith.constant 0 : index
    %1 = vector.load %arg2[%c0_1, %c0_2] : memref<128x256xbf16, #tpu.memory_space<vmem>>, vector<128x256xbf16>
    %cst = arith.constant dense<0.000000e+00> : vector<32x256xf32>
    %2 = tpu.matmul %0, %1, %cst {dimension_numbers = #tpu.dot_dimension_numbers<[1], [0], [0], [1], [0, 0, 1, 1], [], []>} : vector<32x128xbf16>, vector<128x256xbf16>, vector<32x256xf32> -> vector<32x256xf32>
    %c0_3 = arith.constant 0 : index
    %c0_4 = arith.constant 0 : index
    %3 = vector.load %arg3[%c0_3, %c0_4] : memref<1x256xf32, #tpu.memory_space<vmem>>, vector<1x256xf32>
    %4 = vector.broadcast %3 : vector<1x256xf32> to vector<32x256xf32>
    %5 = arith.addf %2, %4 : vector<32x256xf32>
    %6 = arith.mulf %5, %5 : vector<32x256xf32>
    %7 = arith.mulf %5, %6 : vector<32x256xf32>
    %cst_5 = arith.constant 4.471500e-02 : f32
    %8 = vector.broadcast %cst_5 : f32 to vector<32x256xf32>
    %9 = arith.mulf %8, %7 : vector<32x256xf32>
    %10 = arith.addf %5, %9 : vector<32x256xf32>
    %cst_6 = arith.constant 0.797884583 : f32
    %11 = vector.broadcast %cst_6 : f32 to vector<32x256xf32>
    %12 = arith.mulf %11, %10 : vector<32x256xf32>
    %13 = math.tanh %12 : vector<32x256xf32>
    %cst_7 = arith.constant 1.000000e+00 : f32
    %14 = vector.broadcast %cst_7 : f32 to vector<32x256xf32>
    %15 = arith.addf %14, %13 : vector<32x256xf32>
    %cst_8 = arith.constant 5.000000e-01 : f32
    %16 = vector.broadcast %cst_8 : f32 to vector<32x256xf32>
    %17 = arith.mulf %16, %15 : vector<32x256xf32>
    %18 = arith.mulf %5, %17 : vector<32x256xf32>
    %19 = arith.truncf %18 : vector<32x256xf32> to vector<32x256xbf16>
    %c0_9 = arith.constant 0 : index
    %c0_10 = arith.constant 0 : index
    %20 = vector.load %arg4[%c0_9, %c0_10] : memref<32x256xbf16, #tpu.memory_space<vmem>>, vector<32x256xbf16>
    tpu.vector_store %arg4[%c0_9, %c0_10], %19 {strides = array<i32>} : memref<32x256xbf16, #tpu.memory_space<vmem>>, vector<32x256xbf16>,
    return
  }
  func.func @transform_0(%arg0: i32) -> (i32, i32) {
    %c0_i32 = arith.constant 0 : i32
    %c0_i32_0 = arith.constant 0 : i32
    return %arg0, %c0_i32 : i32, i32
  }
  func.func @transform_1(%arg0: i32) -> (i32, i32) {
    %c0_i32 = arith.constant 0 : i32
    %c0_i32_0 = arith.constant 0 : i32
    %c0_i32_1 = arith.constant 0 : i32
    return %c0_i32, %c0_i32_0 : i32, i32
  }
  func.func @transform_2(%arg0: i32) -> (i32, i32) {
    %c0_i32 = arith.constant 0 : i32
    %c0_i32_0 = arith.constant 0 : i32
    %c0_i32_1 = arith.constant 0 : i32
    return %c0_i32, %c0_i32_0 : i32, i32
  }
  func.func @transform_3(%arg0: i32) -> (i32, i32) {
    %c0_i32 = arith.constant 0 : i32
    %c0_i32_0 = arith.constant 0 : i32
    return %arg0, %c0_i32 : i32, i32
  }
}

module attributes {stable_mosaic.version = 11 : i64} {
  func.func @_linear_res_ln_kernel(%arg0: i32, %arg1: memref<32x256xbf16, #tpu.memory_space<vmem>>, %arg2: memref<256x128xbf16, #tpu.memory_space<vmem>>, %arg3: memref<1x128xf32, #tpu.memory_space<vmem>>, %arg4: memref<32x128xbf16, #tpu.memory_space<vmem>>, %arg5: memref<1x128xf32, #tpu.memory_space<vmem>>, %arg6: memref<1x128xf32, #tpu.memory_space<vmem>>, %arg7: memref<32x128xbf16, #tpu.memory_space<vmem>>) attributes {dimension_semantics = [#tpu.dimension_semantics<parallel>], iteration_bounds = array<i64: 1>, scalar_prefetch = 0 : i64, scratch_operands = 0 : i64, tpu.core_type = #tpu.core_type<tc>, window_params = [{transform_indices = @transform_0, window_bounds = array<i64: 32, 256>}, {pipeline_mode = #tpu.pipeline_mode<synchronous>, transform_indices = @transform_1, window_bounds = array<i64: 256, 128>}, {pipeline_mode = #tpu.pipeline_mode<synchronous>, transform_indices = @transform_2, window_bounds = array<i64: 1, 128>}, {transform_indices = @transform_3, window_bounds = array<i64: 32, 128>}, {pipeline_mode = #tpu.pipeline_mode<synchronous>, transform_indices = @transform_4, window_bounds = array<i64: 1, 128>}, {pipeline_mode = #tpu.pipeline_mode<synchronous>, transform_indices = @transform_5, window_bounds = array<i64: 1, 128>}, {transform_indices = @transform_6, window_bounds = array<i64: 32, 128>}]} {
    %c0 = arith.constant 0 : index
    %c0_0 = arith.constant 0 : index
    %0 = vector.load %arg1[%c0, %c0_0] : memref<32x256xbf16, #tpu.memory_space<vmem>>, vector<32x256xbf16>
    %c0_1 = arith.constant 0 : index
    %c0_2 = arith.constant 0 : index
    %1 = vector.load %arg2[%c0_1, %c0_2] : memref<256x128xbf16, #tpu.memory_space<vmem>>, vector<256x128xbf16>
    %cst = arith.constant dense<0.000000e+00> : vector<32x128xf32>
    %2 = tpu.matmul %0, %1, %cst {dimension_numbers = #tpu.dot_dimension_numbers<[1], [0], [0], [1], [0, 0, 1, 1], [], []>} : vector<32x256xbf16>, vector<256x128xbf16>, vector<32x128xf32> -> vector<32x128xf32>
    %c0_3 = arith.constant 0 : index
    %c0_4 = arith.constant 0 : index
    %3 = vector.load %arg3[%c0_3, %c0_4] : memref<1x128xf32, #tpu.memory_space<vmem>>, vector<1x128xf32>
    %4 = vector.broadcast %3 : vector<1x128xf32> to vector<32x128xf32>
    %5 = arith.addf %2, %4 : vector<32x128xf32>
    %c0_5 = arith.constant 0 : index
    %c0_6 = arith.constant 0 : index
    %6 = vector.load %arg4[%c0_5, %c0_6] : memref<32x128xbf16, #tpu.memory_space<vmem>>, vector<32x128xbf16>
    %7 = arith.extf %6 : vector<32x128xbf16> to vector<32x128xf32>
    %8 = arith.addf %5, %7 : vector<32x128xf32>
    %cst_7 = arith.constant dense<0.000000e+00> : vector<32xf32>
    %9 = vector.multi_reduction <add>, %8, %cst_7 [1] : vector<32x128xf32> to vector<32xf32>
    %10 = vector.shape_cast %9 : vector<32xf32> to vector<32x1xf32>
    %cst_8 = arith.constant 1.280000e+02 : f32
    %11 = vector.broadcast %cst_8 : f32 to vector<32x1xf32>
    %12 = arith.divf %10, %11 : vector<32x1xf32>
    %13 = vector.broadcast %12 : vector<32x1xf32> to vector<32x128xf32>
    %14 = arith.subf %8, %13 : vector<32x128xf32>
    %15 = arith.mulf %14, %14 : vector<32x128xf32>
    %cst_9 = arith.constant dense<0.000000e+00> : vector<32xf32>
    %16 = vector.multi_reduction <add>, %15, %cst_9 [1] : vector<32x128xf32> to vector<32xf32>
    %17 = vector.shape_cast %16 : vector<32xf32> to vector<32x1xf32>
    %cst_10 = arith.constant 1.280000e+02 : f32
    %18 = vector.broadcast %cst_10 : f32 to vector<32x1xf32>
    %19 = arith.divf %17, %18 : vector<32x1xf32>
    %20 = vector.broadcast %12 : vector<32x1xf32> to vector<32x128xf32>
    %21 = arith.subf %8, %20 : vector<32x128xf32>
    %cst_11 = arith.constant 9.99999996E-13 : f32
    %22 = vector.broadcast %cst_11 : f32 to vector<32x1xf32>
    %23 = arith.addf %19, %22 : vector<32x1xf32>
    %24 = math.rsqrt %23 : vector<32x1xf32>
    %25 = vector.broadcast %24 : vector<32x1xf32> to vector<32x128xf32>
    %26 = arith.mulf %21, %25 : vector<32x128xf32>
    %c0_12 = arith.constant 0 : index
    %c0_13 = arith.constant 0 : index
    %27 = vector.load %arg5[%c0_12, %c0_13] : memref<1x128xf32, #tpu.memory_space<vmem>>, vector<1x128xf32>
    %28 = vector.broadcast %27 : vector<1x128xf32> to vector<32x128xf32>
    %29 = arith.mulf %26, %28 : vector<32x128xf32>
    %c0_14 = arith.constant 0 : index
    %c0_15 = arith.constant 0 : index
    %30 = vector.load %arg6[%c0_14, %c0_15] : memref<1x128xf32, #tpu.memory_space<vmem>>, vector<1x128xf32>
    %31 = vector.broadcast %30 : vector<1x128xf32> to vector<32x128xf32>
    %32 = arith.addf %29, %31 : vector<32x128xf32>
    %33 = arith.truncf %32 : vector<32x128xf32> to vector<32x128xbf16>
    %c0_16 = arith.constant 0 : index
    %c0_17 = arith.constant 0 : index
    %34 = vector.load %arg7[%c0_16, %c0_17] : memref<32x128xbf16, #tpu.memory_space<vmem>>, vector<32x128xbf16>
    tpu.vector_store %arg7[%c0_16, %c0_17], %33 {strides = array<i32>} : memref<32x128xbf16, #tpu.memory_space<vmem>>, vector<32x128xbf16>,
    return
  }
  func.func @transform_0(%arg0: i32) -> (i32, i32) {
    %c0_i32 = arith.constant 0 : i32
    %c0_i32_0 = arith.constant 0 : i32
    return %arg0, %c0_i32 : i32, i32
  }
  func.func @transform_1(%arg0: i32) -> (i32, i32) {
    %c0_i32 = arith.constant 0 : i32
    %c0_i32_0 = arith.constant 0 : i32
    %c0_i32_1 = arith.constant 0 : i32
    return %c0_i32, %c0_i32_0 : i32, i32
  }
  func.func @transform_2(%arg0: i32) -> (i32, i32) {
    %c0_i32 = arith.constant 0 : i32
    %c0_i32_0 = arith.constant 0 : i32
    %c0_i32_1 = arith.constant 0 : i32
    return %c0_i32, %c0_i32_0 : i32, i32
  }
  func.func @transform_3(%arg0: i32) -> (i32, i32) {
    %c0_i32 = arith.constant 0 : i32
    %c0_i32_0 = arith.constant 0 : i32
    return %arg0, %c0_i32 : i32, i32
  }
  func.func @transform_4(%arg0: i32) -> (i32, i32) {
    %c0_i32 = arith.constant 0 : i32
    %c0_i32_0 = arith.constant 0 : i32
    %c0_i32_1 = arith.constant 0 : i32
    return %c0_i32, %c0_i32_0 : i32, i32
  }
  func.func @transform_5(%arg0: i32) -> (i32, i32) {
    %c0_i32 = arith.constant 0 : i32
    %c0_i32_0 = arith.constant 0 : i32
    %c0_i32_1 = arith.constant 0 : i32
    return %c0_i32, %c0_i32_0 : i32, i32
  }
  func.func @transform_6(%arg0: i32) -> (i32, i32) {
    %c0_i32 = arith.constant 0 : i32
    %c0_i32_0 = arith.constant 0 : i32
    return %arg0, %c0_i32 : i32, i32
  }
}

module attributes {stable_mosaic.version = 11 : i64} {
  func.func @_cls_head_kernel(%arg0: i32, %arg1: memref<2x128xbf16, #tpu.memory_space<vmem>>, %arg2: memref<128x128xbf16, #tpu.memory_space<vmem>>, %arg3: memref<1x128xf32, #tpu.memory_space<vmem>>, %arg4: memref<128x128xbf16, #tpu.memory_space<vmem>>, %arg5: memref<1x128xf32, #tpu.memory_space<vmem>>, %arg6: memref<2x128xf32, #tpu.memory_space<vmem>>) attributes {dimension_semantics = [#tpu.dimension_semantics<arbitrary>], iteration_bounds = array<i64: 1>, scalar_prefetch = 0 : i64, scratch_operands = 0 : i64, tpu.core_type = #tpu.core_type<tc>, window_params = [{pipeline_mode = #tpu.pipeline_mode<synchronous>, transform_indices = @transform_0, window_bounds = array<i64: 2, 128>}, {pipeline_mode = #tpu.pipeline_mode<synchronous>, transform_indices = @transform_1, window_bounds = array<i64: 128, 128>}, {pipeline_mode = #tpu.pipeline_mode<synchronous>, transform_indices = @transform_2, window_bounds = array<i64: 1, 128>}, {pipeline_mode = #tpu.pipeline_mode<synchronous>, transform_indices = @transform_3, window_bounds = array<i64: 128, 128>}, {pipeline_mode = #tpu.pipeline_mode<synchronous>, transform_indices = @transform_4, window_bounds = array<i64: 1, 128>}, {pipeline_mode = #tpu.pipeline_mode<synchronous>, transform_indices = @transform_5, window_bounds = array<i64: 2, 128>}]} {
    %c0 = arith.constant 0 : index
    %c0_0 = arith.constant 0 : index
    %0 = vector.load %arg1[%c0, %c0_0] : memref<2x128xbf16, #tpu.memory_space<vmem>>, vector<2x128xbf16>
    %c0_1 = arith.constant 0 : index
    %c0_2 = arith.constant 0 : index
    %1 = vector.load %arg2[%c0_1, %c0_2] : memref<128x128xbf16, #tpu.memory_space<vmem>>, vector<128x128xbf16>
    %cst = arith.constant dense<0.000000e+00> : vector<2x128xf32>
    %2 = tpu.matmul %0, %1, %cst {dimension_numbers = #tpu.dot_dimension_numbers<[1], [0], [0], [1], [0, 0, 1, 1], [], []>} : vector<2x128xbf16>, vector<128x128xbf16>, vector<2x128xf32> -> vector<2x128xf32>
    %c0_3 = arith.constant 0 : index
    %c0_4 = arith.constant 0 : index
    %3 = vector.load %arg3[%c0_3, %c0_4] : memref<1x128xf32, #tpu.memory_space<vmem>>, vector<1x128xf32>
    %4 = vector.broadcast %3 : vector<1x128xf32> to vector<2x128xf32>
    %5 = arith.addf %2, %4 : vector<2x128xf32>
    %6 = arith.negf %5 : vector<2x128xf32>
    %7 = math.exp %6 : vector<2x128xf32>
    %cst_5 = arith.constant 1.000000e+00 : f32
    %8 = vector.broadcast %cst_5 : f32 to vector<2x128xf32>
    %9 = arith.addf %8, %7 : vector<2x128xf32>
    %10 = arith.divf %8, %9 : vector<2x128xf32>
    %11 = arith.truncf %10 : vector<2x128xf32> to vector<2x128xbf16>
    %c0_6 = arith.constant 0 : index
    %c0_7 = arith.constant 0 : index
    %12 = vector.load %arg4[%c0_6, %c0_7] : memref<128x128xbf16, #tpu.memory_space<vmem>>, vector<128x128xbf16>
    %cst_8 = arith.constant dense<0.000000e+00> : vector<2x128xf32>
    %13 = tpu.matmul %11, %12, %cst_8 {dimension_numbers = #tpu.dot_dimension_numbers<[1], [0], [0], [1], [0, 0, 1, 1], [], []>} : vector<2x128xbf16>, vector<128x128xbf16>, vector<2x128xf32> -> vector<2x128xf32>
    %c0_9 = arith.constant 0 : index
    %c0_10 = arith.constant 0 : index
    %14 = vector.load %arg5[%c0_9, %c0_10] : memref<1x128xf32, #tpu.memory_space<vmem>>, vector<1x128xf32>
    %15 = vector.broadcast %14 : vector<1x128xf32> to vector<2x128xf32>
    %16 = arith.addf %13, %15 : vector<2x128xf32>
    %c0_11 = arith.constant 0 : index
    %c0_12 = arith.constant 0 : index
    %17 = vector.load %arg6[%c0_11, %c0_12] : memref<2x128xf32, #tpu.memory_space<vmem>>, vector<2x128xf32>
    tpu.vector_store %arg6[%c0_11, %c0_12], %16 {strides = array<i32>} : memref<2x128xf32, #tpu.memory_space<vmem>>, vector<2x128xf32>,
    return
  }
  func.func @transform_0(%arg0: i32) -> (i32, i32) {
    %c0_i32 = arith.constant 0 : i32
    %c0_i32_0 = arith.constant 0 : i32
    %c0_i32_1 = arith.constant 0 : i32
    return %c0_i32, %c0_i32_0 : i32, i32
  }
  func.func @transform_1(%arg0: i32) -> (i32, i32) {
    %c0_i32 = arith.constant 0 : i32
    %c0_i32_0 = arith.constant 0 : i32
    %c0_i32_1 = arith.constant 0 : i32
    return %c0_i32, %c0_i32_0 : i32, i32
  }
  func.func @transform_2(%arg0: i32) -> (i32, i32) {
    %c0_i32 = arith.constant 0 : i32
    %c0_i32_0 = arith.constant 0 : i32
    %c0_i32_1 = arith.constant 0 : i32
    return %c0_i32, %c0_i32_0 : i32, i32
  }
  func.func @transform_3(%arg0: i32) -> (i32, i32) {
    %c0_i32 = arith.constant 0 : i32
    %c0_i32_0 = arith.constant 0 : i32
    %c0_i32_1 = arith.constant 0 : i32
    return %c0_i32, %c0_i32_0 : i32, i32
  }
  func.func @transform_4(%arg0: i32) -> (i32, i32) {
    %c0_i32 = arith.constant 0 : i32
    %c0_i32_0 = arith.constant 0 : i32
    %c0_i32_1 = arith.constant 0 : i32
    return %c0_i32, %c0_i32_0 : i32, i32
  }
  func.func @transform_5(%arg0: i32) -> (i32, i32) {
    %c0_i32 = arith.constant 0 : i32
    %c0_i32_0 = arith.constant 0 : i32
    %c0_i32_1 = arith.constant 0 : i32
    return %c0_i32, %c0_i32_0 : i32, i32
  }
}

</mosaic_0001>

<llo_original>
// kernel: distilbert_class_forward.12
$region0: #{distilbert_class_forward.12}
  #allocation0 [shape = 'u32[]', space=smem, size = 0x4, offset = 0x4, fixed_abs, tag = 'smem constant byte address 0x4 - core index']
  #allocation1 [shape = 'u32[144,128]{1,0:T(1,128)}', space=vmem, size = 0x12000, scoped, tag = 'internal scratch']
  %s0 = inlined_call_operand.vmem [shape: f32[32,128], index: 0, kind: input, shape index: {}]
  %s1 = inlined_call_operand.vmem [shape: f32[1,128], index: 1, kind: input, shape index: {}]
  %s2 = inlined_call_operand.vmem [shape: f32[1,128], index: 2, kind: input, shape index: {}]
  %s3 = inlined_call_operand.vmem [shape: bf16[32,128], index: 3, kind: output, shape index: {}]
  %s4 = sld [smem:[#allocation0]]
  $region22: #{distilbert_class_forward.12} parent=0
    _
  %s6 = ssub.s32 1, %s4
  %s7 = scalar_select 0, %s6, %s4
  // Predicated region
  $region2: #{distilbert_class_forward.12} parent=0 // pred_check
    _
  $region3: #{distilbert_class_forward.12} parent=0 // pred_check_branch
    %9 = sbr.rel (0) target = $region5
  $region4: #{distilbert_class_forward.12} parent=0 // pred_region
    _
  $region5: #{distilbert_class_forward.12} parent=0 // pred_fallthru
    _
  // Predicated region
  $region6: #{distilbert_class_forward.12} parent=0 // pred_check
    _
  $region7: #{distilbert_class_forward.12} parent=0 // pred_check_branch
    %11 = sbr.rel (0) target = $region9
  $region8: #{distilbert_class_forward.12} parent=0 // pred_region
    _
  $region9: #{distilbert_class_forward.12} parent=0 // pred_fallthru
    _
  // Predicated region
  $region10: #{distilbert_class_forward.12} parent=0 // pred_check
    _
  $region11: #{distilbert_class_forward.12} parent=0 // pred_check_branch
    %13 = sbr.rel (0) target = $region13
  $region12: #{distilbert_class_forward.12} parent=0 // pred_region
    _
  $region13: #{distilbert_class_forward.12} parent=0 // pred_fallthru
    _
  %v14 = vld [vmem:[%s0] sm:$0xff]
  %v15 = vld [vmem:[%s0 + $0x8] sm:$0xff]
  %v16 = vld [vmem:[%s0 + $0x10] sm:$0xff]
  %v17 = vld [vmem:[%s0 + $0x18] sm:$0xff]
  %18 = vadd.xlane.f32.xlu0 %v14
  %v19 = vpop.xlane.xlu0 %18
  %20 = vadd.xlane.f32.xlu0 %v15
  %v21 = vpop.xlane.xlu0 %20
  %22 = vadd.xlane.f32.xlu0 %v16
  %v23 = vpop.xlane.xlu0 %22
  %24 = vadd.xlane.f32.xlu0 %v17
  %v25 = vpop.xlane.xlu0 %24
  %v26 = vrcp.pop 128.0
  %v27 = vmul.f32 %v19, %v26
  %v28 = vmul.f32 %v21, %v26
  %v29 = vmul.f32 %v23, %v26
  %v30 = vmul.f32 %v25, %v26
  %v31 = vsub.f32 %v14, %v27
  %v32 = vsub.f32 %v15, %v28
  %v33 = vsub.f32 %v16, %v29
  %v34 = vsub.f32 %v17, %v30
  %v35 = vmul.f32 %v31, %v31
  %v36 = vmul.f32 %v32, %v32
  %v37 = vmul.f32 %v33, %v33
  %v38 = vmul.f32 %v34, %v34
  %39 = vadd.xlane.f32.xlu0 %v35
  %v40 = vpop.xlane.xlu0 %39
  %41 = vadd.xlane.f32.xlu0 %v36
  %v42 = vpop.xlane.xlu0 %41
  %43 = vadd.xlane.f32.xlu0 %v37
  %v44 = vpop.xlane.xlu0 %43
  %45 = vadd.xlane.f32.xlu0 %v38
  %v46 = vpop.xlane.xlu0 %45
  %v47 = vmul.f32 %v40, %v26
  %v48 = vmul.f32 %v42, %v26
  %v49 = vmul.f32 %v44, %v26
  %v50 = vmul.f32 %v46, %v26
  %v51 = vadd.f32 %v47, 1e-12
  %v52 = vadd.f32 %v48, 1e-12
  %v53 = vadd.f32 %v49, 1e-12
  %v54 = vadd.f32 %v50, 1e-12
  %v55 = vrsqrt.pop %v51
  %v56 = vrsqrt.pop %v52
  %v57 = vrsqrt.pop %v53
  %v58 = vrsqrt.pop %v54
  %v59 = vmul.f32 %v31, %v55
  %v60 = vmul.f32 %v32, %v56
  %v61 = vmul.f32 %v33, %v57
  %v62 = vmul.f32 %v34, %v58
  %v63 = vld [vmem:[%s1] sm:$0x1]
  %v65 = vlaneseq
  %v66 = vshrl.u32 %v65, 7
  %v67 = vsub.s32 0, %v66
  %v68 = vrot.slane %v63, %v67
  %v70 = vmul.f32 %v59, %v68
  %v71 = vmul.f32 %v60, %v68
  %v72 = vmul.f32 %v61, %v68
  %v73 = vmul.f32 %v62, %v68
  %v74 = vld [vmem:[%s2] sm:$0x1]
  %v76 = vlaneseq
  %v77 = vshrl.u32 %v76, 7
  %v78 = vsub.s32 0, %v77
  %v79 = vrot.slane %v74, %v78
  %v81 = vadd.f32 %v70, %v79
  %v82 = vadd.f32 %v71, %v79
  %v83 = vadd.f32 %v72, %v79
  %v84 = vadd.f32 %v73, %v79
  %v85 = vpack.c.bf16 %v82, %v81
  %v86 = vpack.c.bf16 %v84, %v83
  %v89 = vunpack.c.l.b16 %v85
  %v90 = vunpack.c.h.b16 %v85
  %v91 = vunpack.c.l.b16 %v86
  %v92 = vunpack.c.h.b16 %v86
  %v93 = vpack.c.b16 %v89, %v89
  %v94 = vpack.c.b16 %v90, %v90
  %v95 = vpack.c.b16 %v91, %v91
  %v96 = vpack.c.b16 %v92, %v92
  %101 = vst [vmem:[%s3] sm:$0xf] %v93
  %102 = vst [vmem:[%s3 + $0x4] sm:$0xf] %v94
  %103 = vst [vmem:[%s3 + $0x8] sm:$0xf] %v95
  %104 = vst [vmem:[%s3 + $0xc] sm:$0xf] %v96
  // Predicated region
  $region14: #{distilbert_class_forward.12} parent=0 // pred_check
    _
  $region15: #{distilbert_class_forward.12} parent=0 // pred_check_branch
    %106 = sbr.rel (0) target = $region17
  $region16: #{distilbert_class_forward.12} parent=0 // pred_region
    _
  $region17: #{distilbert_class_forward.12} parent=0 // pred_fallthru
    _
  // Predicated region
  $region18: #{distilbert_class_forward.12} parent=0 // pred_check
    _
  $region19: #{distilbert_class_forward.12} parent=0 // pred_check_branch
    %108 = sbr.rel (0) target = $region21
  $region20: #{distilbert_class_forward.12} parent=0 // pred_region
    _
  $region21: #{distilbert_class_forward.12} parent=0 // pred_fallthru
    _

// kernel: distilbert_class_forward.15
$region0: #{distilbert_class_forward.15}
  #allocation0 [shape = 'u32[]', space=smem, size = 0x4, offset = 0x4, fixed_abs, tag = 'smem constant byte address 0x4 - core index']
  #allocation1 [shape = 'u32[144,128]{1,0:T(1,128)}', space=vmem, size = 0x12000, scoped, tag = 'internal scratch']
  %s0 = inlined_call_operand.vmem [shape: bf16[32,128], index: 0, kind: input, shape index: {}]
  %s1 = inlined_call_operand.vmem [shape: bf16[128,128], index: 1, kind: input, shape index: {}]
  %s2 = inlined_call_operand.vmem [shape: f32[1,128], index: 2, kind: input, shape index: {}]
  %s3 = inlined_call_operand.vmem [shape: bf16[32,128], index: 3, kind: input, shape index: {}]
  %s4 = inlined_call_operand.vmem [shape: f32[1,128], index: 4, kind: input, shape index: {}]
  %s5 = inlined_call_operand.vmem [shape: f32[1,128], index: 5, kind: input, shape index: {}]
  %s6 = inlined_call_operand.vmem [shape: bf16[32,128], index: 6, kind: output, shape index: {}]
  %s7 = sld [smem:[#allocation0]]
  $region34: #{distilbert_class_forward.15} parent=0
    _
  %s9 = ssub.s32 1, %s7
  %s10 = scalar_select 0, %s9, %s7
  // Predicated region
  $region2: #{distilbert_class_forward.15} parent=0 // pred_check
    _
  $region3: #{distilbert_class_forward.15} parent=0 // pred_check_branch
    %12 = sbr.rel (0) target = $region5
  $region4: #{distilbert_class_forward.15} parent=0 // pred_region
    _
  $region5: #{distilbert_class_forward.15} parent=0 // pred_fallthru
    _
  // Predicated region
  $region6: #{distilbert_class_forward.15} parent=0 // pred_check
    _
  $region7: #{distilbert_class_forward.15} parent=0 // pred_check_branch
    %14 = sbr.rel (0) target = $region9
  $region8: #{distilbert_class_forward.15} parent=0 // pred_region
    _
  $region9: #{distilbert_class_forward.15} parent=0 // pred_fallthru
    _
  // Predicated region
  $region10: #{distilbert_class_forward.15} parent=0 // pred_check
    _
  $region11: #{distilbert_class_forward.15} parent=0 // pred_check_branch
    %16 = sbr.rel (0) target = $region13
  $region12: #{distilbert_class_forward.15} parent=0 // pred_region
    _
  $region13: #{distilbert_class_forward.15} parent=0 // pred_fallthru
    _
  // Predicated region
  $region14: #{distilbert_class_forward.15} parent=0 // pred_check
    _
  $region15: #{distilbert_class_forward.15} parent=0 // pred_check_branch
    %18 = sbr.rel (0) target = $region17
  $region16: #{distilbert_class_forward.15} parent=0 // pred_region
    _
  $region17: #{distilbert_class_forward.15} parent=0 // pred_fallthru
    _
  // Predicated region
  $region18: #{distilbert_class_forward.15} parent=0 // pred_check
    _
  $region19: #{distilbert_class_forward.15} parent=0 // pred_check_branch
    %20 = sbr.rel (0) target = $region21
  $region20: #{distilbert_class_forward.15} parent=0 // pred_region
    _
  $region21: #{distilbert_class_forward.15} parent=0 // pred_fallthru
    _
  // Predicated region
  $region22: #{distilbert_class_forward.15} parent=0 // pred_check
    _
  $region23: #{distilbert_class_forward.15} parent=0 // pred_check_branch
    %22 = sbr.rel (0) target = $region25
  $region24: #{distilbert_class_forward.15} parent=0 // pred_region
    _
  $region25: #{distilbert_class_forward.15} parent=0 // pred_fallthru
    _
  %v24 = vld [vmem:[%s0] sm:$0xf]
  %v25 = vld [vmem:[%s0 + $0x4] sm:$0xf]
  %v26 = vld [vmem:[%s0 + $0x8] sm:$0xf]
  %v27 = vld [vmem:[%s0 + $0xc] sm:$0xf]
  %v28 = vld [vmem:[%s1] sm:$0xf]
  %v29 = vld [vmem:[%s1 + $0x4] sm:$0xf]
  %v30 = vld [vmem:[%s1 + $0x8] sm:$0xf]
  %v31 = vld [vmem:[%s1 + $0xc] sm:$0xf]
  %v32 = vld [vmem:[%s1 + $0x10] sm:$0xf]
  %v33 = vld [vmem:[%s1 + $0x14] sm:$0xf]
  %v34 = vld [vmem:[%s1 + $0x18] sm:$0xf]
  %v35 = vld [vmem:[%s1 + $0x1c] sm:$0xf]
  %v36 = vld [vmem:[%s1 + $0x20] sm:$0xf]
  %v37 = vld [vmem:[%s1 + $0x24] sm:$0xf]
  %v38 = vld [vmem:[%s1 + $0x28] sm:$0xf]
  %v39 = vld [vmem:[%s1 + $0x2c] sm:$0xf]
  %v40 = vld [vmem:[%s1 + $0x30] sm:$0xf]
  %v41 = vld [vmem:[%s1 + $0x34] sm:$0xf]
  %v42 = vld [vmem:[%s1 + $0x38] sm:$0xf]
  %v43 = vld [vmem:[%s1 + $0x3c] sm:$0xf]
  %v44 = vld [vmem:[%s2] sm:$0x1]
  %v46 = vlaneseq
  %v47 = vshrl.u32 %v46, 7
  %v48 = vsub.s32 0, %v47
  %v49 = vrot.slane %v44, %v48
  %v55 = vunpack.c.l.b16 %v24
  %v56 = vunpack.c.l.b16 %v25
  %v57 = vunpack.c.l.b16 %v26
  %v58 = vunpack.c.l.b16 %v27
  %v59 = vpack.c.b16 %v56, %v55
  %v60 = vpack.c.b16 %v58, %v57
  %v79 = vunpack.c.l.b16 %v28
  %v80 = vunpack.c.l.b16 %v29
  %v81 = vunpack.c.l.b16 %v30
  %v82 = vunpack.c.l.b16 %v31
  %v83 = vunpack.c.l.b16 %v32
  %v84 = vunpack.c.l.b16 %v33
  %v85 = vunpack.c.l.b16 %v34
  %v86 = vunpack.c.l.b16 %v35
  %v87 = vunpack.c.l.b16 %v36
  %v88 = vunpack.c.l.b16 %v37
  %v89 = vunpack.c.l.b16 %v38
  %v90 = vunpack.c.l.b16 %v39
  %v91 = vunpack.c.l.b16 %v40
  %v92 = vunpack.c.l.b16 %v41
  %v93 = vunpack.c.l.b16 %v42
  %v94 = vunpack.c.l.b16 %v43
  %v95 = vpack.c.b16 %v80, %v79
  %v96 = vpack.c.b16 %v82, %v81
  %v97 = vpack.c.b16 %v84, %v83
  %v98 = vpack.c.b16 %v86, %v85
  %v99 = vpack.c.b16 %v88, %v87
  %v100 = vpack.c.b16 %v90, %v89
  %v101 = vpack.c.b16 %v92, %v91
  %v102 = vpack.c.b16 %v94, %v93
  %111 = vmatprep.subr.bf16.mxu0 0
  %112 = vmatpush1.bf16.msra.mxu0 %v95
  %113 = vmatprep.subr.bf16.mxu0 0
  %114 = vmatpush1.bf16.msra.mxu0 %v96
  %115 = vmatprep.subr.bf16.mxu0 0
  %116 = vmatpush1.bf16.msra.mxu0 %v97
  %117 = vmatprep.subr.bf16.mxu0 0
  %118 = vmatpush1.bf16.msra.mxu0 %v98
  %119 = vmatprep.subr.bf16.mxu0 0
  %120 = vmatpush1.bf16.msra.mxu0 %v99
  %121 = vmatprep.subr.bf16.mxu0 0
  %122 = vmatpush1.bf16.msra.mxu0 %v100
  %123 = vmatprep.subr.bf16.mxu0 0
  %124 = vmatpush1.bf16.msra.mxu0 %v101
  %125 = vmatprep.subr.bf16.mxu0 0
  %126 = vmatpush1.bf16.msra.mxu0 %v102
  %127 = vmatprep.subr.bf16.mxu0 0
  %128 = vmatpush1.bf16.msra.mxu0 0
  %129 = vmatprep.subr.bf16.mxu0 0
  %130 = vmatpush1.bf16.msra.mxu0 0
  %131 = vmatprep.subr.bf16.mxu0 0
  %132 = vmatpush1.bf16.msra.mxu0 0
  %133 = vmatprep.subr.bf16.mxu0 0
  %134 = vmatpush1.bf16.msra.mxu0 0
  %135 = vmatprep.subr.bf16.mxu0 0
  %136 = vmatpush1.bf16.msra.mxu0 0
  %137 = vmatprep.subr.bf16.mxu0 0
  %138 = vmatpush1.bf16.msra.mxu0 0
  %139 = vmatprep.subr.bf16.mxu0 0
  %140 = vmatpush1.bf16.msra.mxu0 0
  %141 = vmatprep.subr.bf16.mxu0 0
  %142 = vmatpush1.bf16.msra.mxu0 0
  %143 = vmatprep.mubr.bf16.mxu0 0
  %144 = vmatmul.mubr.bf16.gmra.mrb[0].mxu0 %v59
  %v145 = vpop.f32.mrb[0].mxu0
  %v146 = vadd.f32 %v49, %v145
  %v147 = vpop.f32.mrb[0].mxu0
  %v148 = vpop.f32.mrb[0].mxu0
  %v149 = vadd.f32 %v49, %v148
  %v150 = vpop.f32.mrb[0].mxu0
  %151 = vmatprep.mubr.bf16.mxu0 0
  %152 = vmatmul.mubr.bf16.gmra.mrb[0].mxu0 %v60
  %v153 = vpop.f32.mrb[0].mxu0
  %v154 = vadd.f32 %v49, %v153
  %v155 = vpop.f32.mrb[0].mxu0
  %v156 = vpop.f32.mrb[0].mxu0
  %v157 = vadd.f32 %v49, %v156
  %v158 = vpop.f32.mrb[0].mxu0
  %159 = vdwg.mxu0
  %v160 = vld [vmem:[%s3] sm:$0xf]
  %v161 = vld [vmem:[%s3 + $0x4] sm:$0xf]
  %v162 = vld [vmem:[%s3 + $0x8] sm:$0xf]
  %v163 = vld [vmem:[%s3 + $0xc] sm:$0xf]
  %v164 = vunpack.c.l.bf16 %v160
  %v165 = vunpack.c.l.bf16 %v161
  %v166 = vunpack.c.l.bf16 %v162
  %v167 = vunpack.c.l.bf16 %v163
  %v168 = vadd.f32 %v146, %v164
  %v169 = vadd.f32 %v149, %v165
  %v170 = vadd.f32 %v154, %v166
  %v171 = vadd.f32 %v157, %v167
  %172 = vadd.xlane.f32.xlu0 %v168
  %v173 = vpop.xlane.xlu0 %172
  %174 = vadd.xlane.f32.xlu0 %v169
  %v175 = vpop.xlane.xlu0 %174
  %176 = vadd.xlane.f32.xlu0 %v170
  %v177 = vpop.xlane.xlu0 %176
  %178 = vadd.xlane.f32.xlu0 %v171
  %v179 = vpop.xlane.xlu0 %178
  %v180 = vrcp.pop 128.0
  %v181 = vmul.f32 %v173, %v180
  %v182 = vmul.f32 %v175, %v180
  %v183 = vmul.f32 %v177, %v180
  %v184 = vmul.f32 %v179, %v180
  %v185 = vsub.f32 %v168, %v181
  %v186 = vsub.f32 %v169, %v182
  %v187 = vsub.f32 %v170, %v183
  %v188 = vsub.f32 %v171, %v184
  %v189 = vmul.f32 %v185, %v185
  %v190 = vmul.f32 %v186, %v186
  %v191 = vmul.f32 %v187, %v187
  %v192 = vmul.f32 %v188, %v188
  %193 = vadd.xlane.f32.xlu0 %v189
  %v194 = vpop.xlane.xlu0 %193
  %195 = vadd.xlane.f32.xlu0 %v190
  %v196 = vpop.xlane.xlu0 %195
  %197 = vadd.xlane.f32.xlu0 %v191
  %v198 = vpop.xlane.xlu0 %197
  %199 = vadd.xlane.f32.xlu0 %v192
  %v200 = vpop.xlane.xlu0 %199
  %v201 = vmul.f32 %v194, %v180
  %v202 = vmul.f32 %v196, %v180
  %v203 = vmul.f32 %v198, %v180
  %v204 = vmul.f32 %v200, %v180
  %v205 = vadd.f32 %v201, 1e-12
  %v206 = vadd.f32 %v202, 1e-12
  %v207 = vadd.f32 %v203, 1e-12
  %v208 = vadd.f32 %v204, 1e-12
  %v209 = vrsqrt.pop %v205
  %v210 = vrsqrt.pop %v206
  %v211 = vrsqrt.pop %v207
  %v212 = vrsqrt.pop %v208
  %v213 = vmul.f32 %v185, %v209
  %v214 = vmul.f32 %v186, %v210
  %v215 = vmul.f32 %v187, %v211
  %v216 = vmul.f32 %v188, %v212
  %v217 = vld [vmem:[%s4] sm:$0x1]
  %v219 = vlaneseq
  %v220 = vshrl.u32 %v219, 7
  %v221 = vsub.s32 0, %v220
  %v222 = vrot.slane %v217, %v221
  %v224 = vmul.f32 %v213, %v222
  %v225 = vmul.f32 %v214, %v222
  %v226 = vmul.f32 %v215, %v222
  %v227 = vmul.f32 %v216, %v222
  %v228 = vld [vmem:[%s5] sm:$0x1]
  %v230 = vlaneseq
  %v231 = vshrl.u32 %v230, 7
  %v232 = vsub.s32 0, %v231
  %v233 = vrot.slane %v228, %v232
  %v235 = vadd.f32 %v224, %v233
  %v236 = vadd.f32 %v225, %v233
  %v237 = vadd.f32 %v226, %v233
  %v238 = vadd.f32 %v227, %v233
  %v239 = vpack.c.bf16 %v236, %v235
  %v240 = vpack.c.bf16 %v238, %v237
  %v243 = vunpack.c.l.b16 %v239
  %v244 = vunpack.c.h.b16 %v239
  %v245 = vunpack.c.l.b16 %v240
  %v246 = vunpack.c.h.b16 %v240
  %v247 = vpack.c.b16 %v243, %v243
  %v248 = vpack.c.b16 %v244, %v244
  %v249 = vpack.c.b16 %v245, %v245
  %v250 = vpack.c.b16 %v246, %v246
  %255 = vst [vmem:[%s6] sm:$0xf] %v247
  %256 = vst [vmem:[%s6 + $0x4] sm:$0xf] %v248
  %257 = vst [vmem:[%s6 + $0x8] sm:$0xf] %v249
  %258 = vst [vmem:[%s6 + $0xc] sm:$0xf] %v250
  // Predicated region
  $region26: #{distilbert_class_forward.15} parent=0 // pred_check
    _
  $region27: #{distilbert_class_forward.15} parent=0 // pred_check_branch
    %260 = sbr.rel (0) target = $region29
  $region28: #{distilbert_class_forward.15} parent=0 // pred_region
    _
  $region29: #{distilbert_class_forward.15} parent=0 // pred_fallthru
    _
  // Predicated region
  $region30: #{distilbert_class_forward.15} parent=0 // pred_check
    _
  $region31: #{distilbert_class_forward.15} parent=0 // pred_check_branch
    %262 = sbr.rel (0) target = $region33
  $region32: #{distilbert_class_forward.15} parent=0 // pred_region
    _
  $region33: #{distilbert_class_forward.15} parent=0 // pred_fallthru
    _

// kernel: distilbert_class_forward.13
$region0: #{distilbert_class_forward.13}
  #allocation0 [shape = 'u32[]', space=smem, size = 0x4, offset = 0x4, fixed_abs, tag = 'smem constant byte address 0x4 - core index']
  #allocation1 [shape = 'u32[144,128]{1,0:T(1,128)}', space=vmem, size = 0x12000, scoped, tag = 'internal scratch']
  %s0 = inlined_call_operand.vmem [shape: bf16[32,128], index: 0, kind: input, shape index: {}]
  %s1 = inlined_call_operand.vmem [shape: bf16[128,384], index: 1, kind: input, shape index: {}]
  %s2 = inlined_call_operand.vmem [shape: f32[1,384], index: 2, kind: input, shape index: {}]
  %s3 = inlined_call_operand.vmem [shape: bf16[32,384], index: 3, kind: output, shape index: {}]
  %s4 = sld [smem:[#allocation0]]
  $region22: #{distilbert_class_forward.13} parent=0
    _
  %s6 = ssub.s32 1, %s4
  %s7 = scalar_select 0, %s6, %s4
  // Predicated region
  $region2: #{distilbert_class_forward.13} parent=0 // pred_check
    _
  $region3: #{distilbert_class_forward.13} parent=0 // pred_check_branch
    %9 = sbr.rel (0) target = $region5
  $region4: #{distilbert_class_forward.13} parent=0 // pred_region
    _
  $region5: #{distilbert_class_forward.13} parent=0 // pred_fallthru
    _
  // Predicated region
  $region6: #{distilbert_class_forward.13} parent=0 // pred_check
    _
  $region7: #{distilbert_class_forward.13} parent=0 // pred_check_branch
    %11 = sbr.rel (0) target = $region9
  $region8: #{distilbert_class_forward.13} parent=0 // pred_region
    _
  $region9: #{distilbert_class_forward.13} parent=0 // pred_fallthru
    _
  // Predicated region
  $region10: #{distilbert_class_forward.13} parent=0 // pred_check
    _
  $region11: #{distilbert_class_forward.13} parent=0 // pred_check_branch
    %13 = sbr.rel (0) target = $region13
  $region12: #{distilbert_class_forward.13} parent=0 // pred_region
    _
  $region13: #{distilbert_class_forward.13} parent=0 // pred_fallthru
    _
  %v15 = vld [vmem:[%s0] sm:$0xf]
  %v16 = vld [vmem:[%s0 + $0x4] sm:$0xf]
  %v17 = vld [vmem:[%s0 + $0x8] sm:$0xf]
  %v18 = vld [vmem:[%s0 + $0xc] sm:$0xf]
  %v19 = vld [vmem:[%s1] sm:$0xff]
  %v20 = vld [vmem:[%s1 + $0x8] sm:$0xf]
  %v21 = vld [vmem:[%s1 + $0xc] sm:$0xff]
  %v22 = vld [vmem:[%s1 + $0x14] sm:$0xf]
  %v23 = vld [vmem:[%s1 + $0x18] sm:$0xff]
  %v24 = vld [vmem:[%s1 + $0x20] sm:$0xf]
  %v25 = vld [vmem:[%s1 + $0x24] sm:$0xff]
  %v26 = vld [vmem:[%s1 + $0x2c] sm:$0xf]
  %v27 = vld [vmem:[%s1 + $0x30] sm:$0xff]
  %v28 = vld [vmem:[%s1 + $0x38] sm:$0xf]
  %v29 = vld [vmem:[%s1 + $0x3c] sm:$0xff]
  %v30 = vld [vmem:[%s1 + $0x44] sm:$0xf]
  %v31 = vld [vmem:[%s1 + $0x48] sm:$0xff]
  %v32 = vld [vmem:[%s1 + $0x50] sm:$0xf]
  %v33 = vld [vmem:[%s1 + $0x54] sm:$0xff]
  %v34 = vld [vmem:[%s1 + $0x5c] sm:$0xf]
  %v35 = vld [vmem:[%s1 + $0x60] sm:$0xff]
  %v36 = vld [vmem:[%s1 + $0x68] sm:$0xf]
  %v37 = vld [vmem:[%s1 + $0x6c] sm:$0xff]
  %v38 = vld [vmem:[%s1 + $0x74] sm:$0xf]
  %v39 = vld [vmem:[%s1 + $0x78] sm:$0xff]
  %v40 = vld [vmem:[%s1 + $0x80] sm:$0xf]
  %v41 = vld [vmem:[%s1 + $0x84] sm:$0xff]
  %v42 = vld [vmem:[%s1 + $0x8c] sm:$0xf]
  %v43 = vld [vmem:[%s1 + $0x90] sm:$0xff]
  %v44 = vld [vmem:[%s1 + $0x98] sm:$0xf]
  %v45 = vld [vmem:[%s1 + $0x9c] sm:$0xff]
  %v46 = vld [vmem:[%s1 + $0xa4] sm:$0xf]
  %v47 = vld [vmem:[%s1 + $0xa8] sm:$0xff]
  %v48 = vld [vmem:[%s1 + $0xb0] sm:$0xf]
  %v49 = vld [vmem:[%s1 + $0xb4] sm:$0xff]
  %v50 = vld [vmem:[%s1 + $0xbc] sm:$0xf]
  %v51 = vld [vmem:[%s2] sm:$0x7]
  %v53 = vlaneseq
  %v54 = vshrl.u32 %v53, 7
  %v55 = vsub.s32 0, %v54
  %v56 = vrot.slane %v51, %v55
  %v57 = vlaneseq
  %v58 = vshrl.u32 %v57, 7
  %v59 = vsub.s32 1, %v58
  %v60 = vrot.slane %v51, %v59
  %v61 = vlaneseq
  %v62 = vshrl.u32 %v61, 7
  %v63 = vsub.s32 2, %v62
  %v64 = vrot.slane %v51, %v63
  %v72 = vunpack.c.l.b16 %v15
  %v73 = vunpack.c.l.b16 %v16
  %v74 = vunpack.c.l.b16 %v17
  %v75 = vunpack.c.l.b16 %v18
  %v76 = vpack.c.b16 %v73, %v72
  %v77 = vpack.c.b16 %v75, %v74
  %v112 = vunpack.c.l.b16 %v19
  %v113 = vunpack.c.h.b16 %v19
  %v114 = vunpack.c.l.b16 %v20
  %v115 = vunpack.c.l.b16 %v21
  %v116 = vunpack.c.h.b16 %v21
  %v117 = vunpack.c.l.b16 %v22
  %v118 = vunpack.c.l.b16 %v23
  %v119 = vunpack.c.h.b16 %v23
  %v120 = vunpack.c.l.b16 %v24
  %v121 = vunpack.c.l.b16 %v25
  %v122 = vunpack.c.h.b16 %v25
  %v123 = vunpack.c.l.b16 %v26
  %v124 = vunpack.c.l.b16 %v27
  %v125 = vunpack.c.h.b16 %v27
  %v126 = vunpack.c.l.b16 %v28
  %v127 = vunpack.c.l.b16 %v29
  %v128 = vunpack.c.h.b16 %v29
  %v129 = vunpack.c.l.b16 %v30
  %v130 = vunpack.c.l.b16 %v31
  %v131 = vunpack.c.h.b16 %v31
  %v132 = vunpack.c.l.b16 %v32
  %v133 = vunpack.c.l.b16 %v33
  %v134 = vunpack.c.h.b16 %v33
  %v135 = vunpack.c.l.b16 %v34
  %v136 = vunpack.c.l.b16 %v35
  %v137 = vunpack.c.h.b16 %v35
  %v138 = vunpack.c.l.b16 %v36
  %v139 = vunpack.c.l.b16 %v37
  %v140 = vunpack.c.h.b16 %v37
  %v141 = vunpack.c.l.b16 %v38
  %v142 = vunpack.c.l.b16 %v39
  %v143 = vunpack.c.h.b16 %v39
  %v144 = vunpack.c.l.b16 %v40
  %v145 = vunpack.c.l.b16 %v41
  %v146 = vunpack.c.h.b16 %v41
  %v147 = vunpack.c.l.b16 %v42
  %v148 = vunpack.c.l.b16 %v43
  %v149 = vunpack.c.h.b16 %v43
  %v150 = vunpack.c.l.b16 %v44
  %v151 = vunpack.c.l.b16 %v45
  %v152 = vunpack.c.h.b16 %v45
  %v153 = vunpack.c.l.b16 %v46
  %v154 = vunpack.c.l.b16 %v47
  %v155 = vunpack.c.h.b16 %v47
  %v156 = vunpack.c.l.b16 %v48
  %v157 = vunpack.c.l.b16 %v49
  %v158 = vunpack.c.h.b16 %v49
  %v159 = vunpack.c.l.b16 %v50
  %v160 = vpack.c.b16 %v115, %v112
  %v161 = vpack.c.b16 %v116, %v113
  %v162 = vpack.c.b16 %v117, %v114
  %v163 = vpack.c.b16 %v121, %v118
  %v164 = vpack.c.b16 %v122, %v119
  %v165 = vpack.c.b16 %v123, %v120
  %v166 = vpack.c.b16 %v127, %v124
  %v167 = vpack.c.b16 %v128, %v125
  %v168 = vpack.c.b16 %v129, %v126
  %v169 = vpack.c.b16 %v133, %v130
  %v170 = vpack.c.b16 %v134, %v131
  %v171 = vpack.c.b16 %v135, %v132
  %v172 = vpack.c.b16 %v139, %v136
  %v173 = vpack.c.b16 %v140, %v137
  %v174 = vpack.c.b16 %v141, %v138
  %v175 = vpack.c.b16 %v145, %v142
  %v176 = vpack.c.b16 %v146, %v143
  %v177 = vpack.c.b16 %v147, %v144
  %v178 = vpack.c.b16 %v151, %v148
  %v179 = vpack.c.b16 %v152, %v149
  %v180 = vpack.c.b16 %v153, %v150
  %v181 = vpack.c.b16 %v157, %v154
  %v182 = vpack.c.b16 %v158, %v155
  %v183 = vpack.c.b16 %v159, %v156
  %208 = vmatprep.subr.bf16.mxu0 %v161
  %209 = vmatpush1.bf16.msra.mxu0 %v160
  %210 = vmatprep.subr.bf16.mxu0 %v164
  %211 = vmatpush1.bf16.msra.mxu0 %v163
  %212 = vmatprep.subr.bf16.mxu0 %v167
  %213 = vmatpush1.bf16.msra.mxu0 %v166
  %214 = vmatprep.subr.bf16.mxu0 %v170
  %215 = vmatpush1.bf16.msra.mxu0 %v169
  %216 = vmatprep.subr.bf16.mxu0 %v173
  %217 = vmatpush1.bf16.msra.mxu0 %v172
  %218 = vmatprep.subr.bf16.mxu0 %v176
  %219 = vmatpush1.bf16.msra.mxu0 %v175
  %220 = vmatprep.subr.bf16.mxu0 %v179
  %221 = vmatpush1.bf16.msra.mxu0 %v178
  %222 = vmatprep.subr.bf16.mxu0 %v182
  %223 = vmatpush1.bf16.msra.mxu0 %v181
  %224 = vmatprep.subr.bf16.mxu0 0
  %225 = vmatpush1.bf16.msra.mxu0 0
  %226 = vmatprep.subr.bf16.mxu0 0
  %227 = vmatpush1.bf16.msra.mxu0 0
  %228 = vmatprep.subr.bf16.mxu0 0
  %229 = vmatpush1.bf16.msra.mxu0 0
  %230 = vmatprep.subr.bf16.mxu0 0
  %231 = vmatpush1.bf16.msra.mxu0 0
  %232 = vmatprep.subr.bf16.mxu0 0
  %233 = vmatpush1.bf16.msra.mxu0 0
  %234 = vmatprep.subr.bf16.mxu0 0
  %235 = vmatpush1.bf16.msra.mxu0 0
  %236 = vmatprep.subr.bf16.mxu0 0
  %237 = vmatpush1.bf16.msra.mxu0 0
  %238 = vmatprep.subr.bf16.mxu0 0
  %239 = vmatpush1.bf16.msra.mxu0 0
  %240 = vmatprep.mubr.bf16.mxu0 0
  %241 = vmatmul.mubr.bf16.gmra.mrb[0].mxu0 %v76
  %v242 = vpop.f32.mrb[0].mxu0
  %v243 = vadd.f32 %v56, %v242
  %v244 = vpop.f32.mrb[0].mxu0
  %v245 = vadd.f32 %v60, %v244
  %v246 = vpop.f32.mrb[0].mxu0
  %v247 = vadd.f32 %v56, %v246
  %v248 = vpop.f32.mrb[0].mxu0
  %v249 = vadd.f32 %v60, %v248
  %250 = vmatprep.mubr.bf16.mxu0 0
  %251 = vmatmul.mubr.bf16.gmra.mrb[0].mxu0 %v77
  %v252 = vpop.f32.mrb[0].mxu0
  %v253 = vadd.f32 %v56, %v252
  %v254 = vpop.f32.mrb[0].mxu0
  %v255 = vadd.f32 %v60, %v254
  %v256 = vpop.f32.mrb[0].mxu0
  %v257 = vadd.f32 %v56, %v256
  %v258 = vpop.f32.mrb[0].mxu0
  %v259 = vadd.f32 %v60, %v258
  %260 = vdwg.mxu0
  %261 = vmatprep.subr.bf16.mxu0 0
  %262 = vmatpush1.bf16.msra.mxu0 %v162
  %263 = vmatprep.subr.bf16.mxu0 0
  %264 = vmatpush1.bf16.msra.mxu0 %v165
  %265 = vmatprep.subr.bf16.mxu0 0
  %266 = vmatpush1.bf16.msra.mxu0 %v168
  %267 = vmatprep.subr.bf16.mxu0 0
  %268 = vmatpush1.bf16.msra.mxu0 %v171
  %269 = vmatprep.subr.bf16.mxu0 0
  %270 = vmatpush1.bf16.msra.mxu0 %v174
  %271 = vmatprep.subr.bf16.mxu0 0
  %272 = vmatpush1.bf16.msra.mxu0 %v177
  %273 = vmatprep.subr.bf16.mxu0 0
  %274 = vmatpush1.bf16.msra.mxu0 %v180
  %275 = vmatprep.subr.bf16.mxu0 0
  %276 = vmatpush1.bf16.msra.mxu0 %v183
  %277 = vmatprep.subr.bf16.mxu0 0
  %278 = vmatpush1.bf16.msra.mxu0 0
  %279 = vmatprep.subr.bf16.mxu0 0
  %280 = vmatpush1.bf16.msra.mxu0 0
  %281 = vmatprep.subr.bf16.mxu0 0
  %282 = vmatpush1.bf16.msra.mxu0 0
  %283 = vmatprep.subr.bf16.mxu0 0
  %284 = vmatpush1.bf16.msra.mxu0 0
  %285 = vmatprep.subr.bf16.mxu0 0
  %286 = vmatpush1.bf16.msra.mxu0 0
  %287 = vmatprep.subr.bf16.mxu0 0
  %288 = vmatpush1.bf16.msra.mxu0 0
  %289 = vmatprep.subr.bf16.mxu0 0
  %290 = vmatpush1.bf16.msra.mxu0 0
  %291 = vmatprep.subr.bf16.mxu0 0
  %292 = vmatpush1.bf16.msra.mxu0 0
  %293 = vmatprep.mubr.bf16.mxu0 0
  %294 = vmatmul.mubr.bf16.gmra.mrb[0].mxu0 %v76
  %v295 = vpop.f32.mrb[0].mxu0
  %v296 = vadd.f32 %v64, %v295
  %v297 = vpop.f32.mrb[0].mxu0
  %v298 = vpop.f32.mrb[0].mxu0
  %v299 = vadd.f32 %v64, %v298
  %v300 = vpop.f32.mrb[0].mxu0
  %301 = vmatprep.mubr.bf16.mxu0 0
  %302 = vmatmul.mubr.bf16.gmra.mrb[0].mxu0 %v77
  %v303 = vpop.f32.mrb[0].mxu0
  %v304 = vadd.f32 %v64, %v303
  %v305 = vpop.f32.mrb[0].mxu0
  %v306 = vpop.f32.mrb[0].mxu0
  %v307 = vadd.f32 %v64, %v306
  %v308 = vpop.f32.mrb[0].mxu0
  %309 = vdwg.mxu0
  %v310 = vpack.c.bf16 %v247, %v243
  %v311 = vpack.c.bf16 %v249, %v245
  %v312 = vpack.c.bf16 %v299, %v296
  %v313 = vpack.c.bf16 %v257, %v253
  %v314 = vpack.c.bf16 %v259, %v255
  %v315 = vpack.c.bf16 %v307, %v304
  %v322 = vunpack.c.l.b16 %v310
  %v323 = vunpack.c.l.b16 %v311
  %v324 = vunpack.c.l.b16 %v312
  %v325 = vunpack.c.h.b16 %v310
  %v326 = vunpack.c.h.b16 %v311
  %v327 = vunpack.c.h.b16 %v312
  %v328 = vunpack.c.l.b16 %v313
  %v329 = vunpack.c.l.b16 %v314
  %v330 = vunpack.c.l.b16 %v315
  %v331 = vunpack.c.h.b16 %v313
  %v332 = vunpack.c.h.b16 %v314
  %v333 = vunpack.c.h.b16 %v315
  %v334 = vpack.c.b16 %v323, %v322
  %v335 = vpack.c.b16 %v324, %v324
  %v336 = vpack.c.b16 %v326, %v325
  %v337 = vpack.c.b16 %v327, %v327
  %v338 = vpack.c.b16 %v329, %v328
  %v339 = vpack.c.b16 %v330, %v330
  %v340 = vpack.c.b16 %v332, %v331
  %v341 = vpack.c.b16 %v333, %v333
  %350 = vst [vmem:[%s3] sm:$0xff] %v334
  %351 = vst [vmem:[%s3 + $0x8] sm:$0xf] %v335
  %352 = vst [vmem:[%s3 + $0xc] sm:$0xff] %v336
  %353 = vst [vmem:[%s3 + $0x14] sm:$0xf] %v337
  %354 = vst [vmem:[%s3 + $0x18] sm:$0xff] %v338
  %355 = vst [vmem:[%s3 + $0x20] sm:$0xf] %v339
  %356 = vst [vmem:[%s3 + $0x24] sm:$0xff] %v340
  %357 = vst [vmem:[%s3 + $0x2c] sm:$0xf] %v341
  // Predicated region
  $region14: #{distilbert_class_forward.13} parent=0 // pred_check
    _
  $region15: #{distilbert_class_forward.13} parent=0 // pred_check_branch
    %359 = sbr.rel (0) target = $region17
  $region16: #{distilbert_class_forward.13} parent=0 // pred_region
    _
  $region17: #{distilbert_class_forward.13} parent=0 // pred_fallthru
    _
  // Predicated region
  $region18: #{distilbert_class_forward.13} parent=0 // pred_check
    _
  $region19: #{distilbert_class_forward.13} parent=0 // pred_check_branch
    %361 = sbr.rel (0) target = $region21
  $region20: #{distilbert_class_forward.13} parent=0 // pred_region
    _
  $region21: #{distilbert_class_forward.13} parent=0 // pred_fallthru
    _

// kernel: distilbert_class_forward.14
$region0: #{distilbert_class_forward.14}
  #allocation0 [shape = 'u32[]', space=smem, size = 0x4, offset = 0x4, fixed_abs, tag = 'smem constant byte address 0x4 - core index']
  #allocation1 [shape = 'u32[144,128]{1,0:T(1,128)}', space=vmem, size = 0x12000, scoped, tag = 'internal scratch']
  %s0 = inlined_call_operand.vmem [shape: bf16[2,16,384], index: 0, kind: input, shape index: {}]
  %s1 = inlined_call_operand.vmem [shape: f32[2,1,16], index: 1, kind: input, shape index: {}]
  %s2 = inlined_call_operand.vmem [shape: bf16[2,16,128], index: 2, kind: output, shape index: {}]
  %s3 = sld [smem:[#allocation0]]
  $region41: #{distilbert_class_forward.14} parent=0
    _
  %s5 = ssub.s32 1, %s3
  %s6 = scalar_select 0, %s5, %s3
  loop: start=0, step=1, limit=4
  $region2: #{distilbert_class_forward.14} parent=0 // loop_pre_header
    _
  $region3: #{distilbert_class_forward.14} parent=0 // loop_header
    %s8 = sphi 0, %s12
    %p9 = scmp.ge.s32.totalorder %s8, 4
    %s18 = sphi 0, %s20
    %s21 = sphi 0, %s18
    %s22 = sphi 0, %s21
    %s38 = sphi 0, %s22
    %s44 = sphi 0, %s46
    %s47 = sphi 0, %s44
    %s48 = sphi 0, %s47
    %s64 = sphi 0, %s48
    %s70 = sphi 0, %s72
    %s73 = sphi 0, %s70
    %s74 = sphi 0, %s73
    %s90 = sphi 0, %s74
  $region4: #{distilbert_class_forward.14} parent=0 // loop_header_branch
    %11 = sbr.rel (%p9) target = $region8
  $region5: #{distilbert_class_forward.14} parent=0 // loop_body
    %s13 = ssub.s32 %s8, 1
    %s14 = ssub.s32 %s8, 2
    %s15 = sadd.s32 %s8, 1
    %s16 = ssub.s32 %s8, %s15
    %p17 = scmp.eq.s32.totalorder %s16, 0
    %s19 = sadd.s32 %s18, 1
    %s20 = scalar_select %p17, %s18, %s19
    %p23 = pneg %p17
    %p24 = scmp.eq.s32.totalorder %s8, 1
    %p25 = por %p23, %p24
    %p26 = scmp.ne.s32.totalorder %s18, %s21
    %p27 = scmp.eq.s32.totalorder %s8, 0
    %p28 = por %p26, %p27
    %p29 = scmp.ne.s32.totalorder %s18, %s21
    %p30 = scmp.eq.s32.totalorder %s13, 1
    %p31 = por %p29, %p30
    %p32 = scmp.ne.s32.totalorder %s21, %s22
    %p33 = scmp.eq.s32.totalorder %s13, 0
    %p34 = por %p32, %p33
    %p35 = scmp.ne.s32.totalorder %s21, %s22
    %p36 = scmp.eq.s32.totalorder %s14, 1
    %p37 = por %p35, %p36
    %p39 = scmp.ne.s32.totalorder %s22, %s38
    %p40 = scmp.eq.s32.totalorder %s14, 0
    %p41 = por %p39, %p40
    %s42 = ssub.s32 %s8, %s15
    %p43 = scmp.eq.s32.totalorder %s42, 0
    %s45 = sadd.s32 %s44, 1
    %s46 = scalar_select %p43, %s44, %s45
    %p49 = pneg %p43
    %p50 = scmp.eq.s32.totalorder %s8, 1
    %p51 = por %p49, %p50
    %p52 = scmp.ne.s32.totalorder %s44, %s47
    %p53 = scmp.eq.s32.totalorder %s8, 0
    %p54 = por %p52, %p53
    %p55 = scmp.ne.s32.totalorder %s44, %s47
    %p56 = scmp.eq.s32.totalorder %s13, 1
    %p57 = por %p55, %p56
    %p58 = scmp.ne.s32.totalorder %s47, %s48
    %p59 = scmp.eq.s32.totalorder %s13, 0
    %p60 = por %p58, %p59
    %p61 = scmp.ne.s32.totalorder %s47, %s48
    %p62 = scmp.eq.s32.totalorder %s14, 1
    %p63 = por %p61, %p62
    %p65 = scmp.ne.s32.totalorder %s48, %s64
    %p66 = scmp.eq.s32.totalorder %s14, 0
    %p67 = por %p65, %p66
    %s68 = ssub.s32 %s8, %s15
    %p69 = scmp.eq.s32.totalorder %s68, 0
    %s71 = sadd.s32 %s70, 1
    %s72 = scalar_select %p69, %s70, %s71
    %p75 = pneg %p69
    %p76 = scmp.eq.s32.totalorder %s8, 1
    %p77 = por %p75, %p76
    %p78 = scmp.ne.s32.totalorder %s70, %s73
    %p79 = scmp.eq.s32.totalorder %s8, 0
    %p80 = por %p78, %p79
    %p81 = scmp.ne.s32.totalorder %s70, %s73
    %p82 = scmp.eq.s32.totalorder %s13, 1
    %p83 = por %p81, %p82
    %p84 = scmp.ne.s32.totalorder %s73, %s74
    %p85 = scmp.eq.s32.totalorder %s13, 0
    %p86 = por %p84, %p85
    %p87 = scmp.ne.s32.totalorder %s73, %s74
    %p88 = scmp.eq.s32.totalorder %s14, 1
    %p89 = por %p87, %p88
    %p91 = scmp.ne.s32.totalorder %s74, %s90
    %p92 = scmp.eq.s32.totalorder %s14, 0
    %p93 = por %p91, %p92
    %p94 = scmp.le.s32.totalorder 1, %s8
    %p95 = scmp.lt.s32.totalorder %s8, 3
    %p96 = pnand %p94, %p95
    %p97 = pneg %p96
    // Predicated region
    $region9: #{distilbert_class_forward.14} parent=5 // pred_check
      _
    $region10: #{distilbert_class_forward.14} parent=5 // pred_check_branch
      %99 = sbr.rel (%p96) target = $region12
    $region11: #{distilbert_class_forward.14} parent=5 // pred_region
      %s100 = ssub.s32 %s8, 1
    $region12: #{distilbert_class_forward.14} parent=5 // pred_fallthru
      _
    %p101 = scmp.lt.s32.totalorder %s8, 2
    // Predicated region
    $region13: #{distilbert_class_forward.14} parent=5 // pred_check
      %p102 = pneg %p101
    $region14: #{distilbert_class_forward.14} parent=5 // pred_check_branch
      %104 = sbr.rel (%p102) target = $region16
    $region15: #{distilbert_class_forward.14} parent=5 // pred_region
      // Predicated region
      $region17: #{distilbert_class_forward.14} parent=15 // pred_check
        %p105 = pneg %p28
      $region18: #{distilbert_class_forward.14} parent=15 // pred_check_branch
        %107 = sbr.rel (%p105) target = $region20
      $region19: #{distilbert_class_forward.14} parent=15 // pred_region
        %p108 = scmp.lt.s32.totalorder %s8, 1
        %s109 = scalar_select %p108, %s8, 1
        %s110 = smul.addr %s109, 6
        %s111 = smul.addr %s110, 4
        %s112 = scalar_lea.vmem %s0, %s111
      $region20: #{distilbert_class_forward.14} parent=15 // pred_fallthru
        _
      // Predicated region
      $region21: #{distilbert_class_forward.14} parent=15 // pred_check
        %p113 = pneg %p54
      $region22: #{distilbert_class_forward.14} parent=15 // pred_check_branch
        %115 = sbr.rel (%p113) target = $region24
      $region23: #{distilbert_class_forward.14} parent=15 // pred_region
        %p116 = scmp.lt.s32.totalorder %s8, 1
        %s117 = scalar_select %p116, %s8, 1
        %s118 = scalar_lea.vmem %s1, %s117
      $region24: #{distilbert_class_forward.14} parent=15 // pred_fallthru
        _
    $region16: #{distilbert_class_forward.14} parent=5 // pred_fallthru
      _
    %p119 = scmp.le.s32.totalorder 1, %s8
    %p120 = scmp.lt.s32.totalorder %s8, 3
    %p121 = pnand %p119, %p120
    %p122 = pneg %p121
    // Predicated region
    $region25: #{distilbert_class_forward.14} parent=5 // pred_check
      _
    $region26: #{distilbert_class_forward.14} parent=5 // pred_check_branch
      %124 = sbr.rel (%p121) target = $region28
    $region27: #{distilbert_class_forward.14} parent=5 // pred_region
      %s125 = ssub.s32 %s8, 1
      %p126 = scmp.lt.s32.totalorder %s13, 1
      %s127 = scalar_select %p126, %s13, 1
      %s128 = smul.addr %s127, 6
      %s129 = smul.addr %s128, 4
      %s130 = scalar_lea.vmem %s0, %s129
      %p131 = pneg %p34
      %p132 = pneg %p31
      %p133 = scmp.lt.s32.totalorder %s13, 1
      %s134 = scalar_select %p133, %s13, 1
      %s135 = scalar_lea.vmem %s1, %s134
      %p136 = pneg %p60
      %p137 = pneg %p57
      %p138 = pneg %p86
      %p139 = pneg %p83
      %p140 = scmp.lt.s32.totalorder %s13, 1
      %s141 = scalar_select %p140, %s13, 1
      %s142 = smul.addr %s141, 2
      %s143 = smul.addr %s142, 4
      %s144 = scalar_lea.vmem %s2, %s143
      %p145 = scmp.lt.s32.totalorder %s13, 1
      %s146 = scalar_select %p145, %s13, 1
      %s147 = smul.addr %s146, 6
      %s148 = smul.addr %s147, 4
      %s149 = scalar_lea.vmem %s0, %s148
      %p150 = scmp.lt.s32.totalorder %s13, 1
      %s151 = scalar_select %p150, %s13, 1
      %s152 = scalar_lea.vmem %s1, %s151
      %p153 = scmp.lt.s32.totalorder %s13, 1
      %s154 = scalar_select %p153, %s13, 1
      %s155 = smul.addr %s154, 2
      %s156 = smul.addr %s155, 4
      %s157 = scalar_lea.vmem %s2, %s156
      %v159 = vld [vmem:[%s149] sm:$0xff]
      %v160 = vld [vmem:[%s149 + $0x8] sm:$0xf]
      %v161 = vld [vmem:[%s149 + $0xc] sm:$0xff]
      %v162 = vld [vmem:[%s149 + $0x14] sm:$0xf]
      %v163 = vld [vmem:[%s152] sm:$0x1]
      %v166 = vunpack.c.l.b16 %v159
      %v167 = vunpack.c.l.b16 %v161
      %v168 = vpack.c.b16 %v167, %v166
      %v169 = vunpack.c.h.b16 %v159
      %v170 = vunpack.c.h.b16 %v161
      %v171 = vpack.c.b16 %v170, %v169
      %vm172 = vcmask 261120
      %v174 = vsel %vm172, %v168, 0
      %v177 = vsel %vm172, %v171, 0
      %179 = vmatprep.subr.bf16.mxu0 0
      %180 = vmatpush1.bf16.xpose.msra.mxu0 %v177
      %181 = vmatprep.subr.bf16.mxu0 0
      %182 = vmatpush1.bf16.xpose.msra.mxu0 0
      %183 = vmatprep.subr.bf16.mxu0 0
      %184 = vmatpush1.bf16.xpose.msra.mxu0 0
      %185 = vmatprep.subr.bf16.mxu0 0
      %186 = vmatpush1.bf16.xpose.msra.mxu0 0
      %187 = vmatprep.subr.bf16.mxu0 0
      %188 = vmatpush1.bf16.xpose.msra.mxu0 0
      %189 = vmatprep.subr.bf16.mxu0 0
      %190 = vmatpush1.bf16.xpose.msra.mxu0 0
      %191 = vmatprep.subr.bf16.mxu0 0
      %192 = vmatpush1.bf16.xpose.msra.mxu0 0
      %193 = vmatprep.subr.bf16.mxu0 0
      %194 = vmatpush1.bf16.xpose.msra.mxu0 0
      %195 = vmatprep.subr.bf16.mxu0 0
      %196 = vmatpush1.bf16.xpose.msra.mxu0 0
      %197 = vmatprep.subr.bf16.mxu0 0
      %198 = vmatpush1.bf16.xpose.msra.mxu0 0
      %199 = vmatprep.subr.bf16.mxu0 0
      %200 = vmatpush1.bf16.xpose.msra.mxu0 0
      %201 = vmatprep.subr.bf16.mxu0 0
      %202 = vmatpush1.bf16.xpose.msra.mxu0 0
      %203 = vmatprep.subr.bf16.mxu0 0
      %204 = vmatpush1.bf16.xpose.msra.mxu0 0
      %205 = vmatprep.subr.bf16.mxu0 0
      %206 = vmatpush1.bf16.xpose.msra.mxu0 0
      %207 = vmatprep.subr.bf16.mxu0 0
      %208 = vmatpush1.bf16.xpose.msra.mxu0 0
      %209 = vmatprep.subr.bf16.mxu0 0
      %210 = vmatpush1.bf16.xpose.msra.mxu0 0
      %211 = vmatprep.mubr.bf16.mxu0 0
      %212 = vmatmul.mubr.bf16.gmra.mrb[0].mxu0 %v174
      %v213 = vpop.f32.mrb[0].mxu0
      %v214 = vadd.f32 0.0, %v213
      %v215 = vpop.f32.mrb[0].mxu0
      %v216 = vpop.f32.mrb[0].mxu0
      %v217 = vadd.f32 0.0, %v216
      %v218 = vpop.f32.mrb[0].mxu0
      %219 = vdwg.mxu0
      %v220 = vmul.f32 %v214, 0.17677669
      %v221 = vmul.f32 %v217, 0.17677669
      %v223 = vlaneseq
      %v224 = vshrl.u32 %v223, 7
      %v225 = vsub.s32 0, %v224
      %v226 = vrot.slane %v163, %v225
      %v228 = vadd.f32 %v220, %v226
      %v229 = vadd.f32 %v221, %v226
      %vm230 = vcmask 130048
      %v231 = vsel %vm230, %v228, -inf
      %232 = vmax.xlane.f32.xlu0 %v231
      %v233 = vpop.xlane.xlu0 %232
      %v234 = vsel %vm230, %v229, -inf
      %235 = vmax.xlane.f32.xlu0 %v234
      %v236 = vpop.xlane.xlu0 %235
      %v237 = vsub.f32 %v228, %v233
      %v238 = vsub.f32 %v229, %v236
      %v239 = vmul.f32 %v237, 1.442695
      %v240 = vpow.pop %v239
      %v241 = vmul.f32 %v238, 1.442695
      %v242 = vpow.pop %v241
      %v243 = vsel %vm230, %v240, 0.0
      %244 = vadd.xlane.f32.xlu0 %v243
      %v245 = vpop.xlane.xlu0 %244
      %v246 = vsel %vm230, %v242, 0.0
      %247 = vadd.xlane.f32.xlu0 %v246
      %v248 = vpop.xlane.xlu0 %247
      %v249 = vpack.c.bf16 %v242, %v240
      %v252 = vunpack.c.l.b16 %v160
      %v253 = vunpack.c.l.b16 %v162
      %v254 = vpack.c.b16 %v253, %v252
      %v257 = vsel %vm230, %v249, 0
      %259 = vmatprep.subr.bf16.mxu0 0
      %260 = vmatpush1.bf16.msra.mxu0 %v254
      %261 = vmatprep.subr.bf16.mxu0 0
      %262 = vmatpush1.bf16.msra.mxu0 0
      %263 = vmatprep.subr.bf16.mxu0 0
      %264 = vmatpush1.bf16.msra.mxu0 0
      %265 = vmatprep.subr.bf16.mxu0 0
      %266 = vmatpush1.bf16.msra.mxu0 0
      %267 = vmatprep.subr.bf16.mxu0 0
      %268 = vmatpush1.bf16.msra.mxu0 0
      %269 = vmatprep.subr.bf16.mxu0 0
      %270 = vmatpush1.bf16.msra.mxu0 0
      %271 = vmatprep.subr.bf16.mxu0 0
      %272 = vmatpush1.bf16.msra.mxu0 0
      %273 = vmatprep.subr.bf16.mxu0 0
      %274 = vmatpush1.bf16.msra.mxu0 0
      %275 = vmatprep.subr.bf16.mxu0 0
      %276 = vmatpush1.bf16.msra.mxu0 0
      %277 = vmatprep.subr.bf16.mxu0 0
      %278 = vmatpush1.bf16.msra.mxu0 0
      %279 = vmatprep.subr.bf16.mxu0 0
      %280 = vmatpush1.bf16.msra.mxu0 0
      %281 = vmatprep.subr.bf16.mxu0 0
      %282 = vmatpush1.bf16.msra.mxu0 0
      %283 = vmatprep.subr.bf16.mxu0 0
      %284 = vmatpush1.bf16.msra.mxu0 0
      %285 = vmatprep.subr.bf16.mxu0 0
      %286 = vmatpush1.bf16.msra.mxu0 0
      %287 = vmatprep.subr.bf16.mxu0 0
      %288 = vmatpush1.bf16.msra.mxu0 0
      %289 = vmatprep.subr.bf16.mxu0 0
      %290 = vmatpush1.bf16.msra.mxu0 0
      %291 = vmatprep.mubr.bf16.mxu0 0
      %292 = vmatmul.mubr.bf16.gmra.mrb[0].mxu0 %v257
      %v293 = vpop.f32.mrb[0].mxu0
      %v294 = vadd.f32 0.0, %v293
      %v295 = vpop.f32.mrb[0].mxu0
      %v296 = vpop.f32.mrb[0].mxu0
      %v297 = vadd.f32 0.0, %v296
      %v298 = vpop.f32.mrb[0].mxu0
      %299 = vdwg.mxu0
      %v300 = vrcp.pop %v245
      %v301 = vrcp.pop %v248
      %v302 = vmul.f32 %v294, %v300
      %v303 = vmul.f32 %v297, %v301
      %v304 = vpack.c.bf16 %v303, %v302
      %305 = vrot.lane.b32.xlu0 %v168, 96
      %v306 = vpop.permute.xlu0 %305
      %307 = vrot.lane.b32.xlu0 %v171, 96
      %v308 = vpop.permute.xlu0 %307
      %v310 = vsel %vm172, %v306, 0
      %v313 = vsel %vm172, %v308, 0
      %315 = vmatprep.subr.bf16.mxu0 0
      %316 = vmatpush1.bf16.xpose.msra.mxu0 %v313
      %317 = vmatprep.subr.bf16.mxu0 0
      %318 = vmatpush1.bf16.xpose.msra.mxu0 0
      %319 = vmatprep.subr.bf16.mxu0 0
      %320 = vmatpush1.bf16.xpose.msra.mxu0 0
      %321 = vmatprep.subr.bf16.mxu0 0
      %322 = vmatpush1.bf16.xpose.msra.mxu0 0
      %323 = vmatprep.subr.bf16.mxu0 0
      %324 = vmatpush1.bf16.xpose.msra.mxu0 0
      %325 = vmatprep.subr.bf16.mxu0 0
      %326 = vmatpush1.bf16.xpose.msra.mxu0 0
      %327 = vmatprep.subr.bf16.mxu0 0
      %328 = vmatpush1.bf16.xpose.msra.mxu0 0
      %329 = vmatprep.subr.bf16.mxu0 0
      %330 = vmatpush1.bf16.xpose.msra.mxu0 0
      %331 = vmatprep.subr.bf16.mxu0 0
      %332 = vmatpush1.bf16.xpose.msra.mxu0 0
      %333 = vmatprep.subr.bf16.mxu0 0
      %334 = vmatpush1.bf16.xpose.msra.mxu0 0
      %335 = vmatprep.subr.bf16.mxu0 0
      %336 = vmatpush1.bf16.xpose.msra.mxu0 0
      %337 = vmatprep.subr.bf16.mxu0 0
      %338 = vmatpush1.bf16.xpose.msra.mxu0 0
      %339 = vmatprep.subr.bf16.mxu0 0
      %340 = vmatpush1.bf16.xpose.msra.mxu0 0
      %341 = vmatprep.subr.bf16.mxu0 0
      %342 = vmatpush1.bf16.xpose.msra.mxu0 0
      %343 = vmatprep.subr.bf16.mxu0 0
      %344 = vmatpush1.bf16.xpose.msra.mxu0 0
      %345 = vmatprep.subr.bf16.mxu0 0
      %346 = vmatpush1.bf16.xpose.msra.mxu0 0
      %347 = vmatprep.mubr.bf16.mxu0 0
      %348 = vmatmul.mubr.bf16.gmra.mrb[0].mxu0 %v310
      %v349 = vpop.f32.mrb[0].mxu0
      %v350 = vadd.f32 0.0, %v349
      %v351 = vpop.f32.mrb[0].mxu0
      %v352 = vpop.f32.mrb[0].mxu0
      %v353 = vadd.f32 0.0, %v352
      %v354 = vpop.f32.mrb[0].mxu0
      %355 = vdwg.mxu0
      %v356 = vmul.f32 %v350, 0.17677669
      %v357 = vmul.f32 %v353, 0.17677669
      %v358 = vadd.f32 %v356, %v226
      %v359 = vadd.f32 %v357, %v226
      %v360 = vsel %vm230, %v358, -inf
      %361 = vmax.xlane.f32.xlu0 %v360
      %v362 = vpop.xlane.xlu0 %361
      %v363 = vsel %vm230, %v359, -inf
      %364 = vmax.xlane.f32.xlu0 %v363
      %v365 = vpop.xlane.xlu0 %364
      %v366 = vsub.f32 %v358, %v362
      %v367 = vsub.f32 %v359, %v365
      %v368 = vmul.f32 %v366, 1.442695
      %v369 = vpow.pop %v368
      %v370 = vmul.f32 %v367, 1.442695
      %v371 = vpow.pop %v370
      %v372 = vsel %vm230, %v369, 0.0
      %373 = vadd.xlane.f32.xlu0 %v372
      %v374 = vpop.xlane.xlu0 %373
      %v375 = vsel %vm230, %v371, 0.0
      %376 = vadd.xlane.f32.xlu0 %v375
      %v377 = vpop.xlane.xlu0 %376
      %v378 = vpack.c.bf16 %v371, %v369
      %379 = vrot.lane.b32.xlu0 %v254, 96
      %v380 = vpop.permute.xlu0 %379
      %v383 = vsel %vm230, %v378, 0
      %385 = vmatprep.subr.bf16.mxu0 0
      %386 = vmatpush1.bf16.msra.mxu0 %v380
      %387 = vmatprep.subr.bf16.mxu0 0
      %388 = vmatpush1.bf16.msra.mxu0 0
      %389 = vmatprep.subr.bf16.mxu0 0
      %390 = vmatpush1.bf16.msra.mxu0 0
      %391 = vmatprep.subr.bf16.mxu0 0
      %392 = vmatpush1.bf16.msra.mxu0 0
      %393 = vmatprep.subr.bf16.mxu0 0
      %394 = vmatpush1.bf16.msra.mxu0 0
      %395 = vmatprep.subr.bf16.mxu0 0
      %396 = vmatpush1.bf16.msra.mxu0 0
      %397 = vmatprep.subr.bf16.mxu0 0
      %398 = vmatpush1.bf16.msra.mxu0 0
      %399 = vmatprep.subr.bf16.mxu0 0
      %400 = vmatpush1.bf16.msra.mxu0 0
      %401 = vmatprep.subr.bf16.mxu0 0
      %402 = vmatpush1.bf16.msra.mxu0 0
      %403 = vmatprep.subr.bf16.mxu0 0
      %404 = vmatpush1.bf16.msra.mxu0 0
      %405 = vmatprep.subr.bf16.mxu0 0
      %406 = vmatpush1.bf16.msra.mxu0 0
      %407 = vmatprep.subr.bf16.mxu0 0
      %408 = vmatpush1.bf16.msra.mxu0 0
      %409 = vmatprep.subr.bf16.mxu0 0
      %410 = vmatpush1.bf16.msra.mxu0 0
      %411 = vmatprep.subr.bf16.mxu0 0
      %412 = vmatpush1.bf16.msra.mxu0 0
      %413 = vmatprep.subr.bf16.mxu0 0
      %414 = vmatpush1.bf16.msra.mxu0 0
      %415 = vmatprep.subr.bf16.mxu0 0
      %416 = vmatpush1.bf16.msra.mxu0 0
      %417 = vmatprep.mubr.bf16.mxu0 0
      %418 = vmatmul.mubr.bf16.gmra.mrb[0].mxu0 %v383
      %v419 = vpop.f32.mrb[0].mxu0
      %v420 = vadd.f32 0.0, %v419
      %v421 = vpop.f32.mrb[0].mxu0
      %v422 = vpop.f32.mrb[0].mxu0
      %v423 = vadd.f32 0.0, %v422
      %v424 = vpop.f32.mrb[0].mxu0
      %425 = vdwg.mxu0
      %v426 = vrcp.pop %v374
      %v427 = vrcp.pop %v377
      %v428 = vmul.f32 %v420, %v426
      %v429 = vmul.f32 %v423, %v427
      %v430 = vpack.c.bf16 %v429, %v428
      %431 = vrot.lane.b32.xlu0 %v168, 64
      %v432 = vpop.permute.xlu0 %431
      %433 = vrot.lane.b32.xlu0 %v171, 64
      %v434 = vpop.permute.xlu0 %433
      %v436 = vsel %vm172, %v432, 0
      %v439 = vsel %vm172, %v434, 0
      %441 = vmatprep.subr.bf16.mxu0 0
      %442 = vmatpush1.bf16.xpose.msra.mxu0 %v439
      %443 = vmatprep.subr.bf16.mxu0 0
      %444 = vmatpush1.bf16.xpose.msra.mxu0 0
      %445 = vmatprep.subr.bf16.mxu0 0
      %446 = vmatpush1.bf16.xpose.msra.mxu0 0
      %447 = vmatprep.subr.bf16.mxu0 0
      %448 = vmatpush1.bf16.xpose.msra.mxu0 0
      %449 = vmatprep.subr.bf16.mxu0 0
      %450 = vmatpush1.bf16.xpose.msra.mxu0 0
      %451 = vmatprep.subr.bf16.mxu0 0
      %452 = vmatpush1.bf16.xpose.msra.mxu0 0
      %453 = vmatprep.subr.bf16.mxu0 0
      %454 = vmatpush1.bf16.xpose.msra.mxu0 0
      %455 = vmatprep.subr.bf16.mxu0 0
      %456 = vmatpush1.bf16.xpose.msra.mxu0 0
      %457 = vmatprep.subr.bf16.mxu0 0
      %458 = vmatpush1.bf16.xpose.msra.mxu0 0
      %459 = vmatprep.subr.bf16.mxu0 0
      %460 = vmatpush1.bf16.xpose.msra.mxu0 0
      %461 = vmatprep.subr.bf16.mxu0 0
      %462 = vmatpush1.bf16.xpose.msra.mxu0 0
      %463 = vmatprep.subr.bf16.mxu0 0
      %464 = vmatpush1.bf16.xpose.msra.mxu0 0
      %465 = vmatprep.subr.bf16.mxu0 0
      %466 = vmatpush1.bf16.xpose.msra.mxu0 0
      %467 = vmatprep.subr.bf16.mxu0 0
      %468 = vmatpush1.bf16.xpose.msra.mxu0 0
      %469 = vmatprep.subr.bf16.mxu0 0
      %470 = vmatpush1.bf16.xpose.msra.mxu0 0
      %471 = vmatprep.subr.bf16.mxu0 0
      %472 = vmatpush1.bf16.xpose.msra.mxu0 0
      %473 = vmatprep.mubr.bf16.mxu0 0
      %474 = vmatmul.mubr.bf16.gmra.mrb[0].mxu0 %v436
      %v475 = vpop.f32.mrb[0].mxu0
      %v476 = vadd.f32 0.0, %v475
      %v477 = vpop.f32.mrb[0].mxu0
      %v478 = vpop.f32.mrb[0].mxu0
      %v479 = vadd.f32 0.0, %v478
      %v480 = vpop.f32.mrb[0].mxu0
      %481 = vdwg.mxu0
      %v482 = vmul.f32 %v476, 0.17677669
      %v483 = vmul.f32 %v479, 0.17677669
      %v484 = vadd.f32 %v482, %v226
      %v485 = vadd.f32 %v483, %v226
      %v486 = vsel %vm230, %v484, -inf
      %487 = vmax.xlane.f32.xlu0 %v486
      %v488 = vpop.xlane.xlu0 %487
      %v489 = vsel %vm230, %v485, -inf
      %490 = vmax.xlane.f32.xlu0 %v489
      %v491 = vpop.xlane.xlu0 %490
      %v492 = vsub.f32 %v484, %v488
      %v493 = vsub.f32 %v485, %v491
      %v494 = vmul.f32 %v492, 1.442695
      %v495 = vpow.pop %v494
      %v496 = vmul.f32 %v493, 1.442695
      %v497 = vpow.pop %v496
      %v498 = vsel %vm230, %v495, 0.0
      %499 = vadd.xlane.f32.xlu0 %v498
      %v500 = vpop.xlane.xlu0 %499
      %v501 = vsel %vm230, %v497, 0.0
      %502 = vadd.xlane.f32.xlu0 %v501
      %v503 = vpop.xlane.xlu0 %502
      %v504 = vpack.c.bf16 %v497, %v495
      %505 = vrot.lane.b32.xlu0 %v254, 64
      %v506 = vpop.permute.xlu0 %505
      %v509 = vsel %vm230, %v504, 0
      %511 = vmatprep.subr.bf16.mxu0 0
      %512 = vmatpush1.bf16.msra.mxu0 %v506
      %513 = vmatprep.subr.bf16.mxu0 0
      %514 = vmatpush1.bf16.msra.mxu0 0
      %515 = vmatprep.subr.bf16.mxu0 0
      %516 = vmatpush1.bf16.msra.mxu0 0
      %517 = vmatprep.subr.bf16.mxu0 0
      %518 = vmatpush1.bf16.msra.mxu0 0
      %519 = vmatprep.subr.bf16.mxu0 0
      %520 = vmatpush1.bf16.msra.mxu0 0
      %521 = vmatprep.subr.bf16.mxu0 0
      %522 = vmatpush1.bf16.msra.mxu0 0
      %523 = vmatprep.subr.bf16.mxu0 0
      %524 = vmatpush1.bf16.msra.mxu0 0
      %525 = vmatprep.subr.bf16.mxu0 0
      %526 = vmatpush1.bf16.msra.mxu0 0
      %527 = vmatprep.subr.bf16.mxu0 0
      %528 = vmatpush1.bf16.msra.mxu0 0
      %529 = vmatprep.subr.bf16.mxu0 0
      %530 = vmatpush1.bf16.msra.mxu0 0
      %531 = vmatprep.subr.bf16.mxu0 0
      %532 = vmatpush1.bf16.msra.mxu0 0
      %533 = vmatprep.subr.bf16.mxu0 0
      %534 = vmatpush1.bf16.msra.mxu0 0
      %535 = vmatprep.subr.bf16.mxu0 0
      %536 = vmatpush1.bf16.msra.mxu0 0
      %537 = vmatprep.subr.bf16.mxu0 0
      %538 = vmatpush1.bf16.msra.mxu0 0
      %539 = vmatprep.subr.bf16.mxu0 0
      %540 = vmatpush1.bf16.msra.mxu0 0
      %541 = vmatprep.subr.bf16.mxu0 0
      %542 = vmatpush1.bf16.msra.mxu0 0
      %543 = vmatprep.mubr.bf16.mxu0 0
      %544 = vmatmul.mubr.bf16.gmra.mrb[0].mxu0 %v509
      %v545 = vpop.f32.mrb[0].mxu0
      %v546 = vadd.f32 0.0, %v545
      %v547 = vpop.f32.mrb[0].mxu0
      %v548 = vpop.f32.mrb[0].mxu0
      %v549 = vadd.f32 0.0, %v548
      %v550 = vpop.f32.mrb[0].mxu0
      %551 = vdwg.mxu0
      %v552 = vrcp.pop %v500
      %v553 = vrcp.pop %v503
      %v554 = vmul.f32 %v546, %v552
      %v555 = vmul.f32 %v549, %v553
      %v556 = vpack.c.bf16 %v555, %v554
      %557 = vrot.lane.b32.xlu0 %v168, 32
      %v558 = vpop.permute.xlu0 %557
      %559 = vrot.lane.b32.xlu0 %v171, 32
      %v560 = vpop.permute.xlu0 %559
      %v562 = vsel %vm172, %v558, 0
      %v565 = vsel %vm172, %v560, 0
      %567 = vmatprep.subr.bf16.mxu0 0
      %568 = vmatpush1.bf16.xpose.msra.mxu0 %v565
      %569 = vmatprep.subr.bf16.mxu0 0
      %570 = vmatpush1.bf16.xpose.msra.mxu0 0
      %571 = vmatprep.subr.bf16.mxu0 0
      %572 = vmatpush1.bf16.xpose.msra.mxu0 0
      %573 = vmatprep.subr.bf16.mxu0 0
      %574 = vmatpush1.bf16.xpose.msra.mxu0 0
      %575 = vmatprep.subr.bf16.mxu0 0
      %576 = vmatpush1.bf16.xpose.msra.mxu0 0
      %577 = vmatprep.subr.bf16.mxu0 0
      %578 = vmatpush1.bf16.xpose.msra.mxu0 0
      %579 = vmatprep.subr.bf16.mxu0 0
      %580 = vmatpush1.bf16.xpose.msra.mxu0 0
      %581 = vmatprep.subr.bf16.mxu0 0
      %582 = vmatpush1.bf16.xpose.msra.mxu0 0
      %583 = vmatprep.subr.bf16.mxu0 0
      %584 = vmatpush1.bf16.xpose.msra.mxu0 0
      %585 = vmatprep.subr.bf16.mxu0 0
      %586 = vmatpush1.bf16.xpose.msra.mxu0 0
      %587 = vmatprep.subr.bf16.mxu0 0
      %588 = vmatpush1.bf16.xpose.msra.mxu0 0
      %589 = vmatprep.subr.bf16.mxu0 0
      %590 = vmatpush1.bf16.xpose.msra.mxu0 0
      %591 = vmatprep.subr.bf16.mxu0 0
      %592 = vmatpush1.bf16.xpose.msra.mxu0 0
      %593 = vmatprep.subr.bf16.mxu0 0
      %594 = vmatpush1.bf16.xpose.msra.mxu0 0
      %595 = vmatprep.subr.bf16.mxu0 0
      %596 = vmatpush1.bf16.xpose.msra.mxu0 0
      %597 = vmatprep.subr.bf16.mxu0 0
      %598 = vmatpush1.bf16.xpose.msra.mxu0 0
      %599 = vmatprep.mubr.bf16.mxu0 0
      %600 = vmatmul.mubr.bf16.gmra.mrb[0].mxu0 %v562
      %v601 = vpop.f32.mrb[0].mxu0
      %v602 = vadd.f32 0.0, %v601
      %v603 = vpop.f32.mrb[0].mxu0
      %v604 = vpop.f32.mrb[0].mxu0
      %v605 = vadd.f32 0.0, %v604
      %v606 = vpop.f32.mrb[0].mxu0
      %607 = vdwg.mxu0
      %v608 = vmul.f32 %v602, 0.17677669
      %v609 = vmul.f32 %v605, 0.17677669
      %v610 = vadd.f32 %v608, %v226
      %v611 = vadd.f32 %v609, %v226
      %v612 = vsel %vm230, %v610, -inf
      %613 = vmax.xlane.f32.xlu0 %v612
      %v614 = vpop.xlane.xlu0 %613
      %v615 = vsel %vm230, %v611, -inf
      %616 = vmax.xlane.f32.xlu0 %v615
      %v617 = vpop.xlane.xlu0 %616
      %v618 = vsub.f32 %v610, %v614
      %v619 = vsub.f32 %v611, %v617
      %v620 = vmul.f32 %v618, 1.442695
      %v621 = vpow.pop %v620
      %v622 = vmul.f32 %v619, 1.442695
      %v623 = vpow.pop %v622
      %v624 = vsel %vm230, %v621, 0.0
      %625 = vadd.xlane.f32.xlu0 %v624
      %v626 = vpop.xlane.xlu0 %625
      %v627 = vsel %vm230, %v623, 0.0
      %628 = vadd.xlane.f32.xlu0 %v627
      %v629 = vpop.xlane.xlu0 %628
      %v630 = vpack.c.bf16 %v623, %v621
      %631 = vrot.lane.b32.xlu0 %v254, 32
      %v632 = vpop.permute.xlu0 %631
      %v635 = vsel %vm230, %v630, 0
      %637 = vmatprep.subr.bf16.mxu0 0
      %638 = vmatpush1.bf16.msra.mxu0 %v632
      %639 = vmatprep.subr.bf16.mxu0 0
      %640 = vmatpush1.bf16.msra.mxu0 0
      %641 = vmatprep.subr.bf16.mxu0 0
      %642 = vmatpush1.bf16.msra.mxu0 0
      %643 = vmatprep.subr.bf16.mxu0 0
      %644 = vmatpush1.bf16.msra.mxu0 0
      %645 = vmatprep.subr.bf16.mxu0 0
      %646 = vmatpush1.bf16.msra.mxu0 0
      %647 = vmatprep.subr.bf16.mxu0 0
      %648 = vmatpush1.bf16.msra.mxu0 0
      %649 = vmatprep.subr.bf16.mxu0 0
      %650 = vmatpush1.bf16.msra.mxu0 0
      %651 = vmatprep.subr.bf16.mxu0 0
      %652 = vmatpush1.bf16.msra.mxu0 0
      %653 = vmatprep.subr.bf16.mxu0 0
      %654 = vmatpush1.bf16.msra.mxu0 0
      %655 = vmatprep.subr.bf16.mxu0 0
      %656 = vmatpush1.bf16.msra.mxu0 0
      %657 = vmatprep.subr.bf16.mxu0 0
      %658 = vmatpush1.bf16.msra.mxu0 0
      %659 = vmatprep.subr.bf16.mxu0 0
      %660 = vmatpush1.bf16.msra.mxu0 0
      %661 = vmatprep.subr.bf16.mxu0 0
      %662 = vmatpush1.bf16.msra.mxu0 0
      %663 = vmatprep.subr.bf16.mxu0 0
      %664 = vmatpush1.bf16.msra.mxu0 0
      %665 = vmatprep.subr.bf16.mxu0 0
      %666 = vmatpush1.bf16.msra.mxu0 0
      %667 = vmatprep.subr.bf16.mxu0 0
      %668 = vmatpush1.bf16.msra.mxu0 0
      %669 = vmatprep.mubr.bf16.mxu0 0
      %670 = vmatmul.mubr.bf16.gmra.mrb[0].mxu0 %v635
      %v671 = vpop.f32.mrb[0].mxu0
      %v672 = vadd.f32 0.0, %v671
      %v673 = vpop.f32.mrb[0].mxu0
      %v674 = vpop.f32.mrb[0].mxu0
      %v675 = vadd.f32 0.0, %v674
      %v676 = vpop.f32.mrb[0].mxu0
      %677 = vdwg.mxu0
      %v678 = vrcp.pop %v626
      %v679 = vrcp.pop %v629
      %v680 = vmul.f32 %v672, %v678
      %v681 = vmul.f32 %v675, %v679
      %v682 = vpack.c.bf16 %v681, %v680
      %684 = vrot.lane.b32.xlu0 %v430, 32
      %v685 = vpop.permute.xlu0 %684
      %687 = vrot.lane.b32.xlu0 %v556, 64
      %v688 = vpop.permute.xlu0 %687
      %690 = vrot.lane.b32.xlu0 %v682, 96
      %v691 = vpop.permute.xlu0 %690
      %v694 = vsel %vm172, %v304, %v685
      %vm695 = vcmask 523264
      %v697 = vsel %vm695, %v694, %v688
      %vm698 = vcmask 785408
      %v700 = vsel %vm698, %v697, %v691
      %v702 = vunpack.c.l.b16 %v700
      %v703 = vunpack.c.h.b16 %v700
      %v704 = vpack.c.b16 %v702, %v702
      %v705 = vpack.c.b16 %v703, %v703
      %708 = vst [vmem:[%s157] sm:$0xf] %v704
      %709 = vst [vmem:[%s157 + $0x4] sm:$0xf] %v705
      %p710 = scmp.lt.s32.totalorder %s13, 1
      %s711 = scalar_select %p710, %s13, 1
      %s712 = smul.addr %s711, 2
      %s713 = smul.addr %s712, 4
      %s714 = scalar_lea.vmem %s2, %s713
      // Predicated region
      $region29: #{distilbert_class_forward.14} parent=27 // pred_check
        %p715 = pneg %p83
      $region30: #{distilbert_class_forward.14} parent=27 // pred_check_branch
        %717 = sbr.rel (%p715) target = $region32
      $region31: #{distilbert_class_forward.14} parent=27 // pred_region
        _
      $region32: #{distilbert_class_forward.14} parent=27 // pred_fallthru
        _
    $region28: #{distilbert_class_forward.14} parent=5 // pred_fallthru
      _
    %p718 = scmp.le.s32.totalorder 2, %s8
    // Predicated region
    $region33: #{distilbert_class_forward.14} parent=5 // pred_check
      %p719 = pneg %p718
    $region34: #{distilbert_class_forward.14} parent=5 // pred_check_branch
      %721 = sbr.rel (%p719) target = $region36
    $region35: #{distilbert_class_forward.14} parent=5 // pred_region
      %s722 = ssub.s32 %s8, 2
      // Predicated region
      $region37: #{distilbert_class_forward.14} parent=35 // pred_check
        %p723 = pneg %p89
      $region38: #{distilbert_class_forward.14} parent=35 // pred_check_branch
        %725 = sbr.rel (%p723) target = $region40
      $region39: #{distilbert_class_forward.14} parent=35 // pred_region
        %p726 = scmp.lt.s32.totalorder %s14, 1
        %s727 = scalar_select %p726, %s14, 1
        %s728 = smul.addr %s727, 2
        %s729 = smul.addr %s728, 4
        %s730 = scalar_lea.vmem %s2, %s729
      $region40: #{distilbert_class_forward.14} parent=35 // pred_fallthru
        _
    $region36: #{distilbert_class_forward.14} parent=5 // pred_fallthru
      _
  $region6: #{distilbert_class_forward.14} parent=0 // loop_footer
    %s12 = sadd.s32 1, %s8
  $region7: #{distilbert_class_forward.14} parent=0 // loop_footer_branch
    %7 = sbr.rel target = $region3
  $region8: #{distilbert_class_forward.14} parent=0 // loop_exit
    _

// kernel: distilbert_class_forward.16
$region0: #{distilbert_class_forward.16}
  #allocation0 [shape = 'u32[]', space=smem, size = 0x4, offset = 0x4, fixed_abs, tag = 'smem constant byte address 0x4 - core index']
  #allocation1 [shape = 'u32[144,128]{1,0:T(1,128)}', space=vmem, size = 0x12000, scoped, tag = 'internal scratch']
  %s0 = inlined_call_operand.vmem [shape: bf16[32,128], index: 0, kind: input, shape index: {}]
  %s1 = inlined_call_operand.vmem [shape: bf16[128,256], index: 1, kind: input, shape index: {}]
  %s2 = inlined_call_operand.vmem [shape: f32[1,256], index: 2, kind: input, shape index: {}]
  %s3 = inlined_call_operand.vmem [shape: bf16[32,256], index: 3, kind: output, shape index: {}]
  %s4 = sld [smem:[#allocation0]]
  $region22: #{distilbert_class_forward.16} parent=0
    _
  %s6 = ssub.s32 1, %s4
  %s7 = scalar_select 0, %s6, %s4
  // Predicated region
  $region2: #{distilbert_class_forward.16} parent=0 // pred_check
    _
  $region3: #{distilbert_class_forward.16} parent=0 // pred_check_branch
    %9 = sbr.rel (0) target = $region5
  $region4: #{distilbert_class_forward.16} parent=0 // pred_region
    _
  $region5: #{distilbert_class_forward.16} parent=0 // pred_fallthru
    _
  // Predicated region
  $region6: #{distilbert_class_forward.16} parent=0 // pred_check
    _
  $region7: #{distilbert_class_forward.16} parent=0 // pred_check_branch
    %11 = sbr.rel (0) target = $region9
  $region8: #{distilbert_class_forward.16} parent=0 // pred_region
    _
  $region9: #{distilbert_class_forward.16} parent=0 // pred_fallthru
    _
  // Predicated region
  $region10: #{distilbert_class_forward.16} parent=0 // pred_check
    _
  $region11: #{distilbert_class_forward.16} parent=0 // pred_check_branch
    %13 = sbr.rel (0) target = $region13
  $region12: #{distilbert_class_forward.16} parent=0 // pred_region
    _
  $region13: #{distilbert_class_forward.16} parent=0 // pred_fallthru
    _
  %v15 = vld [vmem:[%s0] sm:$0xf]
  %v16 = vld [vmem:[%s0 + $0x4] sm:$0xf]
  %v17 = vld [vmem:[%s0 + $0x8] sm:$0xf]
  %v18 = vld [vmem:[%s0 + $0xc] sm:$0xf]
  %v19 = vld [vmem:[%s1] sm:$0xff]
  %v20 = vld [vmem:[%s1 + $0x8] sm:$0xff]
  %v21 = vld [vmem:[%s1 + $0x10] sm:$0xff]
  %v22 = vld [vmem:[%s1 + $0x18] sm:$0xff]
  %v23 = vld [vmem:[%s1 + $0x20] sm:$0xff]
  %v24 = vld [vmem:[%s1 + $0x28] sm:$0xff]
  %v25 = vld [vmem:[%s1 + $0x30] sm:$0xff]
  %v26 = vld [vmem:[%s1 + $0x38] sm:$0xff]
  %v27 = vld [vmem:[%s1 + $0x40] sm:$0xff]
  %v28 = vld [vmem:[%s1 + $0x48] sm:$0xff]
  %v29 = vld [vmem:[%s1 + $0x50] sm:$0xff]
  %v30 = vld [vmem:[%s1 + $0x58] sm:$0xff]
  %v31 = vld [vmem:[%s1 + $0x60] sm:$0xff]
  %v32 = vld [vmem:[%s1 + $0x68] sm:$0xff]
  %v33 = vld [vmem:[%s1 + $0x70] sm:$0xff]
  %v34 = vld [vmem:[%s1 + $0x78] sm:$0xff]
  %v35 = vld [vmem:[%s2] sm:$0x3]
  %v37 = vlaneseq
  %v38 = vshrl.u32 %v37, 7
  %v39 = vsub.s32 0, %v38
  %v40 = vrot.slane %v35, %v39
  %v41 = vlaneseq
  %v42 = vshrl.u32 %v41, 7
  %v43 = vsub.s32 1, %v42
  %v44 = vrot.slane %v35, %v43
  %v51 = vunpack.c.l.b16 %v15
  %v52 = vunpack.c.l.b16 %v16
  %v53 = vunpack.c.l.b16 %v17
  %v54 = vunpack.c.l.b16 %v18
  %v55 = vpack.c.b16 %v52, %v51
  %v56 = vpack.c.b16 %v54, %v53
  %v75 = vunpack.c.l.b16 %v19
  %v76 = vunpack.c.h.b16 %v19
  %v77 = vunpack.c.l.b16 %v20
  %v78 = vunpack.c.h.b16 %v20
  %v79 = vunpack.c.l.b16 %v21
  %v80 = vunpack.c.h.b16 %v21
  %v81 = vunpack.c.l.b16 %v22
  %v82 = vunpack.c.h.b16 %v22
  %v83 = vunpack.c.l.b16 %v23
  %v84 = vunpack.c.h.b16 %v23
  %v85 = vunpack.c.l.b16 %v24
  %v86 = vunpack.c.h.b16 %v24
  %v87 = vunpack.c.l.b16 %v25
  %v88 = vunpack.c.h.b16 %v25
  %v89 = vunpack.c.l.b16 %v26
  %v90 = vunpack.c.h.b16 %v26
  %v91 = vunpack.c.l.b16 %v27
  %v92 = vunpack.c.h.b16 %v27
  %v93 = vunpack.c.l.b16 %v28
  %v94 = vunpack.c.h.b16 %v28
  %v95 = vunpack.c.l.b16 %v29
  %v96 = vunpack.c.h.b16 %v29
  %v97 = vunpack.c.l.b16 %v30
  %v98 = vunpack.c.h.b16 %v30
  %v99 = vunpack.c.l.b16 %v31
  %v100 = vunpack.c.h.b16 %v31
  %v101 = vunpack.c.l.b16 %v32
  %v102 = vunpack.c.h.b16 %v32
  %v103 = vunpack.c.l.b16 %v33
  %v104 = vunpack.c.h.b16 %v33
  %v105 = vunpack.c.l.b16 %v34
  %v106 = vunpack.c.h.b16 %v34
  %v107 = vpack.c.b16 %v77, %v75
  %v108 = vpack.c.b16 %v78, %v76
  %v109 = vpack.c.b16 %v81, %v79
  %v110 = vpack.c.b16 %v82, %v80
  %v111 = vpack.c.b16 %v85, %v83
  %v112 = vpack.c.b16 %v86, %v84
  %v113 = vpack.c.b16 %v89, %v87
  %v114 = vpack.c.b16 %v90, %v88
  %v115 = vpack.c.b16 %v93, %v91
  %v116 = vpack.c.b16 %v94, %v92
  %v117 = vpack.c.b16 %v97, %v95
  %v118 = vpack.c.b16 %v98, %v96
  %v119 = vpack.c.b16 %v101, %v99
  %v120 = vpack.c.b16 %v102, %v100
  %v121 = vpack.c.b16 %v105, %v103
  %v122 = vpack.c.b16 %v106, %v104
  %139 = vmatprep.subr.bf16.mxu0 %v108
  %140 = vmatpush1.bf16.msra.mxu0 %v107
  %141 = vmatprep.subr.bf16.mxu0 %v110
  %142 = vmatpush1.bf16.msra.mxu0 %v109
  %143 = vmatprep.subr.bf16.mxu0 %v112
  %144 = vmatpush1.bf16.msra.mxu0 %v111
  %145 = vmatprep.subr.bf16.mxu0 %v114
  %146 = vmatpush1.bf16.msra.mxu0 %v113
  %147 = vmatprep.subr.bf16.mxu0 %v116
  %148 = vmatpush1.bf16.msra.mxu0 %v115
  %149 = vmatprep.subr.bf16.mxu0 %v118
  %150 = vmatpush1.bf16.msra.mxu0 %v117
  %151 = vmatprep.subr.bf16.mxu0 %v120
  %152 = vmatpush1.bf16.msra.mxu0 %v119
  %153 = vmatprep.subr.bf16.mxu0 %v122
  %154 = vmatpush1.bf16.msra.mxu0 %v121
  %155 = vmatprep.subr.bf16.mxu0 0
  %156 = vmatpush1.bf16.msra.mxu0 0
  %157 = vmatprep.subr.bf16.mxu0 0
  %158 = vmatpush1.bf16.msra.mxu0 0
  %159 = vmatprep.subr.bf16.mxu0 0
  %160 = vmatpush1.bf16.msra.mxu0 0
  %161 = vmatprep.subr.bf16.mxu0 0
  %162 = vmatpush1.bf16.msra.mxu0 0
  %163 = vmatprep.subr.bf16.mxu0 0
  %164 = vmatpush1.bf16.msra.mxu0 0
  %165 = vmatprep.subr.bf16.mxu0 0
  %166 = vmatpush1.bf16.msra.mxu0 0
  %167 = vmatprep.subr.bf16.mxu0 0
  %168 = vmatpush1.bf16.msra.mxu0 0
  %169 = vmatprep.subr.bf16.mxu0 0
  %170 = vmatpush1.bf16.msra.mxu0 0
  %171 = vmatprep.mubr.bf16.mxu0 0
  %172 = vmatmul.mubr.bf16.gmra.mrb[0].mxu0 %v55
  %v173 = vpop.f32.mrb[0].mxu0
  %v174 = vadd.f32 %v40, %v173
  %v175 = vpop.f32.mrb[0].mxu0
  %v176 = vadd.f32 %v44, %v175
  %v177 = vpop.f32.mrb[0].mxu0
  %v178 = vadd.f32 %v40, %v177
  %v179 = vpop.f32.mrb[0].mxu0
  %v180 = vadd.f32 %v44, %v179
  %181 = vmatprep.mubr.bf16.mxu0 0
  %182 = vmatmul.mubr.bf16.gmra.mrb[0].mxu0 %v56
  %v183 = vpop.f32.mrb[0].mxu0
  %v184 = vadd.f32 %v40, %v183
  %v185 = vpop.f32.mrb[0].mxu0
  %v186 = vadd.f32 %v44, %v185
  %v187 = vpop.f32.mrb[0].mxu0
  %v188 = vadd.f32 %v40, %v187
  %v189 = vpop.f32.mrb[0].mxu0
  %v190 = vadd.f32 %v44, %v189
  %191 = vdwg.mxu0
  %v192 = vmul.f32 %v174, %v174
  %v193 = vmul.f32 %v176, %v176
  %v194 = vmul.f32 %v178, %v178
  %v195 = vmul.f32 %v180, %v180
  %v196 = vmul.f32 %v184, %v184
  %v197 = vmul.f32 %v186, %v186
  %v198 = vmul.f32 %v188, %v188
  %v199 = vmul.f32 %v190, %v190
  %v200 = vmul.f32 %v174, %v192
  %v201 = vmul.f32 %v176, %v193
  %v202 = vmul.f32 %v178, %v194
  %v203 = vmul.f32 %v180, %v195
  %v204 = vmul.f32 %v184, %v196
  %v205 = vmul.f32 %v186, %v197
  %v206 = vmul.f32 %v188, %v198
  %v207 = vmul.f32 %v190, %v199
  %v208 = vmul.f32 %v200, 0.044715
  %v209 = vmul.f32 %v201, 0.044715
  %v210 = vmul.f32 %v202, 0.044715
  %v211 = vmul.f32 %v203, 0.044715
  %v212 = vmul.f32 %v204, 0.044715
  %v213 = vmul.f32 %v205, 0.044715
  %v214 = vmul.f32 %v206, 0.044715
  %v215 = vmul.f32 %v207, 0.044715
  %v216 = vadd.f32 %v174, %v208
  %v217 = vadd.f32 %v176, %v209
  %v218 = vadd.f32 %v178, %v210
  %v219 = vadd.f32 %v180, %v211
  %v220 = vadd.f32 %v184, %v212
  %v221 = vadd.f32 %v186, %v213
  %v222 = vadd.f32 %v188, %v214
  %v223 = vadd.f32 %v190, %v215
  %v224 = vmul.f32 %v216, 0.7978846
  %v225 = vmul.f32 %v217, 0.7978846
  %v226 = vmul.f32 %v218, 0.7978846
  %v227 = vmul.f32 %v219, 0.7978846
  %v228 = vmul.f32 %v220, 0.7978846
  %v229 = vmul.f32 %v221, 0.7978846
  %v230 = vmul.f32 %v222, 0.7978846
  %v231 = vmul.f32 %v223, 0.7978846
  %v232 = vtanh.pop %v224
  %v233 = vtanh.pop %v225
  %v234 = vtanh.pop %v226
  %v235 = vtanh.pop %v227
  %v236 = vtanh.pop %v228
  %v237 = vtanh.pop %v229
  %v238 = vtanh.pop %v230
  %v239 = vtanh.pop %v231
  %v240 = vadd.f32 %v232, 1.0
  %v241 = vadd.f32 %v233, 1.0
  %v242 = vadd.f32 %v234, 1.0
  %v243 = vadd.f32 %v235, 1.0
  %v244 = vadd.f32 %v236, 1.0
  %v245 = vadd.f32 %v237, 1.0
  %v246 = vadd.f32 %v238, 1.0
  %v247 = vadd.f32 %v239, 1.0
  %v248 = vmul.f32 %v240, 0.5
  %v249 = vmul.f32 %v241, 0.5
  %v250 = vmul.f32 %v242, 0.5
  %v251 = vmul.f32 %v243, 0.5
  %v252 = vmul.f32 %v244, 0.5
  %v253 = vmul.f32 %v245, 0.5
  %v254 = vmul.f32 %v246, 0.5
  %v255 = vmul.f32 %v247, 0.5
  %v256 = vmul.f32 %v174, %v248
  %v257 = vmul.f32 %v176, %v249
  %v258 = vmul.f32 %v178, %v250
  %v259 = vmul.f32 %v180, %v251
  %v260 = vmul.f32 %v184, %v252
  %v261 = vmul.f32 %v186, %v253
  %v262 = vmul.f32 %v188, %v254
  %v263 = vmul.f32 %v190, %v255
  %v264 = vpack.c.bf16 %v258, %v256
  %v265 = vpack.c.bf16 %v259, %v257
  %v266 = vpack.c.bf16 %v262, %v260
  %v267 = vpack.c.bf16 %v263, %v261
  %v272 = vunpack.c.l.b16 %v264
  %v273 = vunpack.c.l.b16 %v265
  %v274 = vunpack.c.h.b16 %v264
  %v275 = vunpack.c.h.b16 %v265
  %v276 = vunpack.c.l.b16 %v266
  %v277 = vunpack.c.l.b16 %v267
  %v278 = vunpack.c.h.b16 %v266
  %v279 = vunpack.c.h.b16 %v267
  %v280 = vpack.c.b16 %v273, %v272
  %v281 = vpack.c.b16 %v275, %v274
  %v282 = vpack.c.b16 %v277, %v276
  %v283 = vpack.c.b16 %v279, %v278
  %288 = vst [vmem:[%s3] sm:$0xff] %v280
  %289 = vst [vmem:[%s3 + $0x8] sm:$0xff] %v281
  %290 = vst [vmem:[%s3 + $0x10] sm:$0xff] %v282
  %291 = vst [vmem:[%s3 + $0x18] sm:$0xff] %v283
  // Predicated region
  $region14: #{distilbert_class_forward.16} parent=0 // pred_check
    _
  $region15: #{distilbert_class_forward.16} parent=0 // pred_check_branch
    %293 = sbr.rel (0) target = $region17
  $region16: #{distilbert_class_forward.16} parent=0 // pred_region
    _
  $region17: #{distilbert_class_forward.16} parent=0 // pred_fallthru
    _
  // Predicated region
  $region18: #{distilbert_class_forward.16} parent=0 // pred_check
    _
  $region19: #{distilbert_class_forward.16} parent=0 // pred_check_branch
    %295 = sbr.rel (0) target = $region21
  $region20: #{distilbert_class_forward.16} parent=0 // pred_region
    _
  $region21: #{distilbert_class_forward.16} parent=0 // pred_fallthru
    _

// kernel: distilbert_class_forward.23
$region0: #{distilbert_class_forward.23}
  #allocation0 [shape = 'u32[]', space=smem, size = 0x4, offset = 0x4, fixed_abs, tag = 'smem constant byte address 0x4 - core index']
  #allocation1 [shape = 'u32[144,128]{1,0:T(1,128)}', space=vmem, size = 0x12000, scoped, tag = 'internal scratch']
  %s0 = inlined_call_operand.vmem [shape: bf16[2,128], index: 0, kind: input, shape index: {}]
  %s1 = inlined_call_operand.vmem [shape: bf16[128,128], index: 1, kind: input, shape index: {}]
  %s2 = inlined_call_operand.vmem [shape: f32[1,128], index: 2, kind: input, shape index: {}]
  %s3 = inlined_call_operand.vmem [shape: bf16[128,128], index: 3, kind: input, shape index: {}]
  %s4 = inlined_call_operand.vmem [shape: f32[1,128], index: 4, kind: input, shape index: {}]
  %s5 = inlined_call_operand.hbm [shape: f32[2,128], index: 5, kind: output, shape index: {}]
  %s6 = sld [smem:[#allocation0]]
  $region30: #{distilbert_class_forward.23} parent=0
    _
  %s8 = ssub.s32 1, %s6
  %s9 = scalar_select 0, %s8, %s6
  $region1: #{distilbert_class_forward.23} parent=0
    #allocation2 [shape = 'u8[1024]{0}', space=vmem, size = 0x400, scoped, tag = 'output window, operand 0, single buffered']
    #allocation3 [shape = 's32[1]{0}', space=sflag, size = 0x4, scoped, tag = 'scoped memory for distilbert_class_forward.23']
    %10 = vsyncpa [#allocation3], 0
    // Predicated region
    $region2: #{distilbert_class_forward.23} parent=1 // pred_check
      _
    $region3: #{distilbert_class_forward.23} parent=1 // pred_check_branch
      %12 = sbr.rel (0) target = $region5
    $region4: #{distilbert_class_forward.23} parent=1 // pred_region
      _
    $region5: #{distilbert_class_forward.23} parent=1 // pred_fallthru
      _
    // Predicated region
    $region6: #{distilbert_class_forward.23} parent=1 // pred_check
      _
    $region7: #{distilbert_class_forward.23} parent=1 // pred_check_branch
      %14 = sbr.rel (0) target = $region9
    $region8: #{distilbert_class_forward.23} parent=1 // pred_region
      _
    $region9: #{distilbert_class_forward.23} parent=1 // pred_fallthru
      _
    // Predicated region
    $region10: #{distilbert_class_forward.23} parent=1 // pred_check
      _
    $region11: #{distilbert_class_forward.23} parent=1 // pred_check_branch
      %16 = sbr.rel (0) target = $region13
    $region12: #{distilbert_class_forward.23} parent=1 // pred_region
      _
    $region13: #{distilbert_class_forward.23} parent=1 // pred_fallthru
      _
    // Predicated region
    $region14: #{distilbert_class_forward.23} parent=1 // pred_check
      _
    $region15: #{distilbert_class_forward.23} parent=1 // pred_check_branch
      %18 = sbr.rel (0) target = $region17
    $region16: #{distilbert_class_forward.23} parent=1 // pred_region
      _
    $region17: #{distilbert_class_forward.23} parent=1 // pred_fallthru
      _
    // Predicated region
    $region18: #{distilbert_class_forward.23} parent=1 // pred_check
      _
    $region19: #{distilbert_class_forward.23} parent=1 // pred_check_branch
      %20 = sbr.rel (0) target = $region21
    $region20: #{distilbert_class_forward.23} parent=1 // pred_region
      _
    $region21: #{distilbert_class_forward.23} parent=1 // pred_fallthru
      _
    %v22 = vld [vmem:[%s0] sm:$0x1]
    %v23 = vld [vmem:[%s1] sm:$0xf]
    %v24 = vld [vmem:[%s1 + $0x4] sm:$0xf]
    %v25 = vld [vmem:[%s1 + $0x8] sm:$0xf]
    %v26 = vld [vmem:[%s1 + $0xc] sm:$0xf]
    %v27 = vld [vmem:[%s1 + $0x10] sm:$0xf]
    %v28 = vld [vmem:[%s1 + $0x14] sm:$0xf]
    %v29 = vld [vmem:[%s1 + $0x18] sm:$0xf]
    %v30 = vld [vmem:[%s1 + $0x1c] sm:$0xf]
    %v31 = vld [vmem:[%s1 + $0x20] sm:$0xf]
    %v32 = vld [vmem:[%s1 + $0x24] sm:$0xf]
    %v33 = vld [vmem:[%s1 + $0x28] sm:$0xf]
    %v34 = vld [vmem:[%s1 + $0x2c] sm:$0xf]
    %v35 = vld [vmem:[%s1 + $0x30] sm:$0xf]
    %v36 = vld [vmem:[%s1 + $0x34] sm:$0xf]
    %v37 = vld [vmem:[%s1 + $0x38] sm:$0xf]
    %v38 = vld [vmem:[%s1 + $0x3c] sm:$0xf]
    %v39 = vld [vmem:[%s2] sm:$0x1]
    %v41 = vlaneseq
    %v42 = vshrl.u32 %v41, 7
    %v43 = vsub.s32 0, %v42
    %v44 = vrot.slane %v39, %v43
    %v62 = vunpack.c.l.b16 %v23
    %v63 = vunpack.c.l.b16 %v24
    %v64 = vunpack.c.l.b16 %v25
    %v65 = vunpack.c.l.b16 %v26
    %v66 = vunpack.c.l.b16 %v27
    %v67 = vunpack.c.l.b16 %v28
    %v68 = vunpack.c.l.b16 %v29
    %v69 = vunpack.c.l.b16 %v30
    %v70 = vunpack.c.l.b16 %v31
    %v71 = vunpack.c.l.b16 %v32
    %v72 = vunpack.c.l.b16 %v33
    %v73 = vunpack.c.l.b16 %v34
    %v74 = vunpack.c.l.b16 %v35
    %v75 = vunpack.c.l.b16 %v36
    %v76 = vunpack.c.l.b16 %v37
    %v77 = vunpack.c.l.b16 %v38
    %v78 = vpack.c.b16 %v63, %v62
    %v79 = vpack.c.b16 %v65, %v64
    %v80 = vpack.c.b16 %v67, %v66
    %v81 = vpack.c.b16 %v69, %v68
    %v82 = vpack.c.b16 %v71, %v70
    %v83 = vpack.c.b16 %v73, %v72
    %v84 = vpack.c.b16 %v75, %v74
    %v85 = vpack.c.b16 %v77, %v76
    %94 = vmatprep.subr.bf16.mxu0 0
    %95 = vmatpush1.bf16.msra.mxu0 %v78
    %96 = vmatprep.subr.bf16.mxu0 0
    %97 = vmatpush1.bf16.msra.mxu0 %v79
    %98 = vmatprep.subr.bf16.mxu0 0
    %99 = vmatpush1.bf16.msra.mxu0 %v80
    %100 = vmatprep.subr.bf16.mxu0 0
    %101 = vmatpush1.bf16.msra.mxu0 %v81
    %102 = vmatprep.subr.bf16.mxu0 0
    %103 = vmatpush1.bf16.msra.mxu0 %v82
    %104 = vmatprep.subr.bf16.mxu0 0
    %105 = vmatpush1.bf16.msra.mxu0 %v83
    %106 = vmatprep.subr.bf16.mxu0 0
    %107 = vmatpush1.bf16.msra.mxu0 %v84
    %108 = vmatprep.subr.bf16.mxu0 0
    %109 = vmatpush1.bf16.msra.mxu0 %v85
    %110 = vmatprep.subr.bf16.mxu0 0
    %111 = vmatpush1.bf16.msra.mxu0 0
    %112 = vmatprep.subr.bf16.mxu0 0
    %113 = vmatpush1.bf16.msra.mxu0 0
    %114 = vmatprep.subr.bf16.mxu0 0
    %115 = vmatpush1.bf16.msra.mxu0 0
    %116 = vmatprep.subr.bf16.mxu0 0
    %117 = vmatpush1.bf16.msra.mxu0 0
    %118 = vmatprep.subr.bf16.mxu0 0
    %119 = vmatpush1.bf16.msra.mxu0 0
    %120 = vmatprep.subr.bf16.mxu0 0
    %121 = vmatpush1.bf16.msra.mxu0 0
    %122 = vmatprep.subr.bf16.mxu0 0
    %123 = vmatpush1.bf16.msra.mxu0 0
    %124 = vmatprep.subr.bf16.mxu0 0
    %125 = vmatpush1.bf16.msra.mxu0 0
    %126 = vmatprep.mubr.bf16.mxu0 0
    %127 = vmatmul.mubr.bf16.gmra.mrb[0].mxu0 %v22
    %v128 = vpop.f32.mrb[0].mxu0
    %v129 = vadd.f32 %v44, %v128
    %v130 = vpop.f32.mrb[0].mxu0
    %v131 = vpop.f32.mrb[0].mxu0
    %v132 = vpop.f32.mrb[0].mxu0
    %133 = vdwg.mxu0
    %v134 = vxor.u32 %v129, 2147483648
    %v135 = vmul.f32 %v134, 1.442695
    %v136 = vpow.pop %v135
    %v137 = vadd.f32 %v136, 1.0
    %v138 = vrcp.pop %v137
    %v139 = vmul.f32 1.0, %v138
    %v140 = vpack.c.bf16 %v139, %v139
    %v141 = vld [vmem:[%s3] sm:$0xf]
    %v142 = vld [vmem:[%s3 + $0x4] sm:$0xf]
    %v143 = vld [vmem:[%s3 + $0x8] sm:$0xf]
    %v144 = vld [vmem:[%s3 + $0xc] sm:$0xf]
    %v145 = vld [vmem:[%s3 + $0x10] sm:$0xf]
    %v146 = vld [vmem:[%s3 + $0x14] sm:$0xf]
    %v147 = vld [vmem:[%s3 + $0x18] sm:$0xf]
    %v148 = vld [vmem:[%s3 + $0x1c] sm:$0xf]
    %v149 = vld [vmem:[%s3 + $0x20] sm:$0xf]
    %v150 = vld [vmem:[%s3 + $0x24] sm:$0xf]
    %v151 = vld [vmem:[%s3 + $0x28] sm:$0xf]
    %v152 = vld [vmem:[%s3 + $0x2c] sm:$0xf]
    %v153 = vld [vmem:[%s3 + $0x30] sm:$0xf]
    %v154 = vld [vmem:[%s3 + $0x34] sm:$0xf]
    %v155 = vld [vmem:[%s3 + $0x38] sm:$0xf]
    %v156 = vld [vmem:[%s3 + $0x3c] sm:$0xf]
    %v157 = vld [vmem:[%s4] sm:$0x1]
    %v159 = vlaneseq
    %v160 = vshrl.u32 %v159, 7
    %v161 = vsub.s32 0, %v160
    %v162 = vrot.slane %v157, %v161
    %v180 = vunpack.c.l.b16 %v141
    %v181 = vunpack.c.l.b16 %v142
    %v182 = vunpack.c.l.b16 %v143
    %v183 = vunpack.c.l.b16 %v144
    %v184 = vunpack.c.l.b16 %v145
    %v185 = vunpack.c.l.b16 %v146
    %v186 = vunpack.c.l.b16 %v147
    %v187 = vunpack.c.l.b16 %v148
    %v188 = vunpack.c.l.b16 %v149
    %v189 = vunpack.c.l.b16 %v150
    %v190 = vunpack.c.l.b16 %v151
    %v191 = vunpack.c.l.b16 %v152
    %v192 = vunpack.c.l.b16 %v153
    %v193 = vunpack.c.l.b16 %v154
    %v194 = vunpack.c.l.b16 %v155
    %v195 = vunpack.c.l.b16 %v156
    %v196 = vpack.c.b16 %v181, %v180
    %v197 = vpack.c.b16 %v183, %v182
    %v198 = vpack.c.b16 %v185, %v184
    %v199 = vpack.c.b16 %v187, %v186
    %v200 = vpack.c.b16 %v189, %v188
    %v201 = vpack.c.b16 %v191, %v190
    %v202 = vpack.c.b16 %v193, %v192
    %v203 = vpack.c.b16 %v195, %v194
    %212 = vmatprep.subr.bf16.mxu0 0
    %213 = vmatpush1.bf16.msra.mxu0 %v196
    %214 = vmatprep.subr.bf16.mxu0 0
    %215 = vmatpush1.bf16.msra.mxu0 %v197
    %216 = vmatprep.subr.bf16.mxu0 0
    %217 = vmatpush1.bf16.msra.mxu0 %v198
    %218 = vmatprep.subr.bf16.mxu0 0
    %219 = vmatpush1.bf16.msra.mxu0 %v199
    %220 = vmatprep.subr.bf16.mxu0 0
    %221 = vmatpush1.bf16.msra.mxu0 %v200
    %222 = vmatprep.subr.bf16.mxu0 0
    %223 = vmatpush1.bf16.msra.mxu0 %v201
    %224 = vmatprep.subr.bf16.mxu0 0
    %225 = vmatpush1.bf16.msra.mxu0 %v202
    %226 = vmatprep.subr.bf16.mxu0 0
    %227 = vmatpush1.bf16.msra.mxu0 %v203
    %228 = vmatprep.subr.bf16.mxu0 0
    %229 = vmatpush1.bf16.msra.mxu0 0
    %230 = vmatprep.subr.bf16.mxu0 0
    %231 = vmatpush1.bf16.msra.mxu0 0
    %232 = vmatprep.subr.bf16.mxu0 0
    %233 = vmatpush1.bf16.msra.mxu0 0
    %234 = vmatprep.subr.bf16.mxu0 0
    %235 = vmatpush1.bf16.msra.mxu0 0
    %236 = vmatprep.subr.bf16.mxu0 0
    %237 = vmatpush1.bf16.msra.mxu0 0
    %238 = vmatprep.subr.bf16.mxu0 0
    %239 = vmatpush1.bf16.msra.mxu0 0
    %240 = vmatprep.subr.bf16.mxu0 0
    %241 = vmatpush1.bf16.msra.mxu0 0
    %242 = vmatprep.subr.bf16.mxu0 0
    %243 = vmatpush1.bf16.msra.mxu0 0
    %244 = vmatprep.mubr.bf16.mxu0 0
    %245 = vmatmul.mubr.bf16.gmra.mrb[0].mxu0 %v140
    %v246 = vpop.f32.mrb[0].mxu0
    %v247 = vadd.f32 %v162, %v246
    %v248 = vpop.f32.mrb[0].mxu0
    %v249 = vpop.f32.mrb[0].mxu0
    %v250 = vpop.f32.mrb[0].mxu0
    %251 = vdwg.mxu0
    %252 = vst [vmem:[#allocation2] sm:$0x3] %v247
    // Predicated region
    $region22: #{distilbert_class_forward.23} parent=1 // pred_check
      _
    $region23: #{distilbert_class_forward.23} parent=1 // pred_check_branch
      %254 = sbr.rel (0) target = $region25
    $region24: #{distilbert_class_forward.23} parent=1 // pred_region
      %s256 = ssub.s32 32, 32
      %257 = vsyncadd [#allocation3], %s256
      %s259 = sshll.u32 [#allocation2], 4
      %s260 = int_to_ptr.vmem [resolvable:$true] %s259
      %262 = dma.vmem_to_hbm [thread:$0]  %s260, 32, %s5, [#allocation3]
    $region25: #{distilbert_class_forward.23} parent=1 // pred_fallthru
      _
    // Predicated region
    $region26: #{distilbert_class_forward.23} parent=1 // pred_check
      _
    $region27: #{distilbert_class_forward.23} parent=1 // pred_check_branch
      %264 = sbr.rel (0) target = $region29
    $region28: #{distilbert_class_forward.23} parent=1 // pred_region
      %265 = dma.done [#allocation3], 32
    $region29: #{distilbert_class_forward.23} parent=1 // pred_fallthru
      _
    %266 = vsyncpa [#allocation3], 1

// kernel: distilbert_class_forward.17
$region0: #{distilbert_class_forward.17}
  #allocation0 [shape = 'u32[]', space=smem, size = 0x4, offset = 0x4, fixed_abs, tag = 'smem constant byte address 0x4 - core index']
  #allocation1 [shape = 'u32[144,128]{1,0:T(1,128)}', space=vmem, size = 0x12000, scoped, tag = 'internal scratch']
  %s0 = inlined_call_operand.vmem [shape: bf16[32,256], index: 0, kind: input, shape index: {}]
  %s1 = inlined_call_operand.vmem [shape: bf16[256,128], index: 1, kind: input, shape index: {}]
  %s2 = inlined_call_operand.vmem [shape: f32[1,128], index: 2, kind: input, shape index: {}]
  %s3 = inlined_call_operand.vmem [shape: bf16[32,128], index: 3, kind: input, shape index: {}]
  %s4 = inlined_call_operand.vmem [shape: f32[1,128], index: 4, kind: input, shape index: {}]
  %s5 = inlined_call_operand.vmem [shape: f32[1,128], index: 5, kind: input, shape index: {}]
  %s6 = inlined_call_operand.vmem [shape: bf16[32,128], index: 6, kind: output, shape index: {}]
  %s7 = sld [smem:[#allocation0]]
  $region34: #{distilbert_class_forward.17} parent=0
    _
  %s9 = ssub.s32 1, %s7
  %s10 = scalar_select 0, %s9, %s7
  // Predicated region
  $region2: #{distilbert_class_forward.17} parent=0 // pred_check
    _
  $region3: #{distilbert_class_forward.17} parent=0 // pred_check_branch
    %12 = sbr.rel (0) target = $region5
  $region4: #{distilbert_class_forward.17} parent=0 // pred_region
    _
  $region5: #{distilbert_class_forward.17} parent=0 // pred_fallthru
    _
  // Predicated region
  $region6: #{distilbert_class_forward.17} parent=0 // pred_check
    _
  $region7: #{distilbert_class_forward.17} parent=0 // pred_check_branch
    %14 = sbr.rel (0) target = $region9
  $region8: #{distilbert_class_forward.17} parent=0 // pred_region
    _
  $region9: #{distilbert_class_forward.17} parent=0 // pred_fallthru
    _
  // Predicated region
  $region10: #{distilbert_class_forward.17} parent=0 // pred_check
    _
  $region11: #{distilbert_class_forward.17} parent=0 // pred_check_branch
    %16 = sbr.rel (0) target = $region13
  $region12: #{distilbert_class_forward.17} parent=0 // pred_region
    _
  $region13: #{distilbert_class_forward.17} parent=0 // pred_fallthru
    _
  // Predicated region
  $region14: #{distilbert_class_forward.17} parent=0 // pred_check
    _
  $region15: #{distilbert_class_forward.17} parent=0 // pred_check_branch
    %18 = sbr.rel (0) target = $region17
  $region16: #{distilbert_class_forward.17} parent=0 // pred_region
    _
  $region17: #{distilbert_class_forward.17} parent=0 // pred_fallthru
    _
  // Predicated region
  $region18: #{distilbert_class_forward.17} parent=0 // pred_check
    _
  $region19: #{distilbert_class_forward.17} parent=0 // pred_check_branch
    %20 = sbr.rel (0) target = $region21
  $region20: #{distilbert_class_forward.17} parent=0 // pred_region
    _
  $region21: #{distilbert_class_forward.17} parent=0 // pred_fallthru
    _
  // Predicated region
  $region22: #{distilbert_class_forward.17} parent=0 // pred_check
    _
  $region23: #{distilbert_class_forward.17} parent=0 // pred_check_branch
    %22 = sbr.rel (0) target = $region25
  $region24: #{distilbert_class_forward.17} parent=0 // pred_region
    _
  $region25: #{distilbert_class_forward.17} parent=0 // pred_fallthru
    _
  %v24 = vld [vmem:[%s0] sm:$0xff]
  %v25 = vld [vmem:[%s0 + $0x8] sm:$0xff]
  %v26 = vld [vmem:[%s0 + $0x10] sm:$0xff]
  %v27 = vld [vmem:[%s0 + $0x18] sm:$0xff]
  %v28 = vld [vmem:[%s1] sm:$0xf]
  %v29 = vld [vmem:[%s1 + $0x4] sm:$0xf]
  %v30 = vld [vmem:[%s1 + $0x8] sm:$0xf]
  %v31 = vld [vmem:[%s1 + $0xc] sm:$0xf]
  %v32 = vld [vmem:[%s1 + $0x10] sm:$0xf]
  %v33 = vld [vmem:[%s1 + $0x14] sm:$0xf]
  %v34 = vld [vmem:[%s1 + $0x18] sm:$0xf]
  %v35 = vld [vmem:[%s1 + $0x1c] sm:$0xf]
  %v36 = vld [vmem:[%s1 + $0x20] sm:$0xf]
  %v37 = vld [vmem:[%s1 + $0x24] sm:$0xf]
  %v38 = vld [vmem:[%s1 + $0x28] sm:$0xf]
  %v39 = vld [vmem:[%s1 + $0x2c] sm:$0xf]
  %v40 = vld [vmem:[%s1 + $0x30] sm:$0xf]
  %v41 = vld [vmem:[%s1 + $0x34] sm:$0xf]
  %v42 = vld [vmem:[%s1 + $0x38] sm:$0xf]
  %v43 = vld [vmem:[%s1 + $0x3c] sm:$0xf]
  %v44 = vld [vmem:[%s1 + $0x40] sm:$0xf]
  %v45 = vld [vmem:[%s1 + $0x44] sm:$0xf]
  %v46 = vld [vmem:[%s1 + $0x48] sm:$0xf]
  %v47 = vld [vmem:[%s1 + $0x4c] sm:$0xf]
  %v48 = vld [vmem:[%s1 + $0x50] sm:$0xf]
  %v49 = vld [vmem:[%s1 + $0x54] sm:$0xf]
  %v50 = vld [vmem:[%s1 + $0x58] sm:$0xf]
  %v51 = vld [vmem:[%s1 + $0x5c] sm:$0xf]
  %v52 = vld [vmem:[%s1 + $0x60] sm:$0xf]
  %v53 = vld [vmem:[%s1 + $0x64] sm:$0xf]
  %v54 = vld [vmem:[%s1 + $0x68] sm:$0xf]
  %v55 = vld [vmem:[%s1 + $0x6c] sm:$0xf]
  %v56 = vld [vmem:[%s1 + $0x70] sm:$0xf]
  %v57 = vld [vmem:[%s1 + $0x74] sm:$0xf]
  %v58 = vld [vmem:[%s1 + $0x78] sm:$0xf]
  %v59 = vld [vmem:[%s1 + $0x7c] sm:$0xf]
  %v60 = vld [vmem:[%s2] sm:$0x1]
  %v62 = vlaneseq
  %v63 = vshrl.u32 %v62, 7
  %v64 = vsub.s32 0, %v63
  %v65 = vrot.slane %v60, %v64
  %v71 = vunpack.c.l.b16 %v24
  %v72 = vunpack.c.h.b16 %v24
  %v73 = vunpack.c.l.b16 %v25
  %v74 = vunpack.c.h.b16 %v25
  %v75 = vunpack.c.l.b16 %v26
  %v76 = vunpack.c.h.b16 %v26
  %v77 = vunpack.c.l.b16 %v27
  %v78 = vunpack.c.h.b16 %v27
  %v79 = vpack.c.b16 %v73, %v71
  %v80 = vpack.c.b16 %v74, %v72
  %v81 = vpack.c.b16 %v77, %v75
  %v82 = vpack.c.b16 %v78, %v76
  %v119 = vunpack.c.l.b16 %v28
  %v120 = vunpack.c.l.b16 %v29
  %v121 = vunpack.c.l.b16 %v30
  %v122 = vunpack.c.l.b16 %v31
  %v123 = vunpack.c.l.b16 %v32
  %v124 = vunpack.c.l.b16 %v33
  %v125 = vunpack.c.l.b16 %v34
  %v126 = vunpack.c.l.b16 %v35
  %v127 = vunpack.c.l.b16 %v36
  %v128 = vunpack.c.l.b16 %v37
  %v129 = vunpack.c.l.b16 %v38
  %v130 = vunpack.c.l.b16 %v39
  %v131 = vunpack.c.l.b16 %v40
  %v132 = vunpack.c.l.b16 %v41
  %v133 = vunpack.c.l.b16 %v42
  %v134 = vunpack.c.l.b16 %v43
  %v135 = vunpack.c.l.b16 %v44
  %v136 = vunpack.c.l.b16 %v45
  %v137 = vunpack.c.l.b16 %v46
  %v138 = vunpack.c.l.b16 %v47
  %v139 = vunpack.c.l.b16 %v48
  %v140 = vunpack.c.l.b16 %v49
  %v141 = vunpack.c.l.b16 %v50
  %v142 = vunpack.c.l.b16 %v51
  %v143 = vunpack.c.l.b16 %v52
  %v144 = vunpack.c.l.b16 %v53
  %v145 = vunpack.c.l.b16 %v54
  %v146 = vunpack.c.l.b16 %v55
  %v147 = vunpack.c.l.b16 %v56
  %v148 = vunpack.c.l.b16 %v57
  %v149 = vunpack.c.l.b16 %v58
  %v150 = vunpack.c.l.b16 %v59
  %v151 = vpack.c.b16 %v120, %v119
  %v152 = vpack.c.b16 %v122, %v121
  %v153 = vpack.c.b16 %v124, %v123
  %v154 = vpack.c.b16 %v126, %v125
  %v155 = vpack.c.b16 %v128, %v127
  %v156 = vpack.c.b16 %v130, %v129
  %v157 = vpack.c.b16 %v132, %v131
  %v158 = vpack.c.b16 %v134, %v133
  %v159 = vpack.c.b16 %v136, %v135
  %v160 = vpack.c.b16 %v138, %v137
  %v161 = vpack.c.b16 %v140, %v139
  %v162 = vpack.c.b16 %v142, %v141
  %v163 = vpack.c.b16 %v144, %v143
  %v164 = vpack.c.b16 %v146, %v145
  %v165 = vpack.c.b16 %v148, %v147
  %v166 = vpack.c.b16 %v150, %v149
  %183 = vmatprep.subr.bf16.mxu0 0
  %184 = vmatpush1.bf16.msra.mxu0 %v151
  %185 = vmatprep.subr.bf16.mxu0 0
  %186 = vmatpush1.bf16.msra.mxu0 %v152
  %187 = vmatprep.subr.bf16.mxu0 0
  %188 = vmatpush1.bf16.msra.mxu0 %v153
  %189 = vmatprep.subr.bf16.mxu0 0
  %190 = vmatpush1.bf16.msra.mxu0 %v154
  %191 = vmatprep.subr.bf16.mxu0 0
  %192 = vmatpush1.bf16.msra.mxu0 %v155
  %193 = vmatprep.subr.bf16.mxu0 0
  %194 = vmatpush1.bf16.msra.mxu0 %v156
  %195 = vmatprep.subr.bf16.mxu0 0
  %196 = vmatpush1.bf16.msra.mxu0 %v157
  %197 = vmatprep.subr.bf16.mxu0 0
  %198 = vmatpush1.bf16.msra.mxu0 %v158
  %199 = vmatprep.subr.bf16.mxu0 0
  %200 = vmatpush1.bf16.msra.mxu0 %v159
  %201 = vmatprep.subr.bf16.mxu0 0
  %202 = vmatpush1.bf16.msra.mxu0 %v160
  %203 = vmatprep.subr.bf16.mxu0 0
  %204 = vmatpush1.bf16.msra.mxu0 %v161
  %205 = vmatprep.subr.bf16.mxu0 0
  %206 = vmatpush1.bf16.msra.mxu0 %v162
  %207 = vmatprep.subr.bf16.mxu0 0
  %208 = vmatpush1.bf16.msra.mxu0 %v163
  %209 = vmatprep.subr.bf16.mxu0 0
  %210 = vmatpush1.bf16.msra.mxu0 %v164
  %211 = vmatprep.subr.bf16.mxu0 0
  %212 = vmatpush1.bf16.msra.mxu0 %v165
  %213 = vmatprep.subr.bf16.mxu0 0
  %214 = vmatpush1.bf16.msra.mxu0 %v166
  %215 = vmatprep.mubr.bf16.mxu0 %v80
  %216 = vmatmul.mubr.bf16.gmra.mrb[0].mxu0 %v79
  %v217 = vpop.f32.mrb[0].mxu0
  %v218 = vadd.f32 %v65, %v217
  %v219 = vpop.f32.mrb[0].mxu0
  %v220 = vpop.f32.mrb[0].mxu0
  %v221 = vadd.f32 %v65, %v220
  %v222 = vpop.f32.mrb[0].mxu0
  %223 = vmatprep.mubr.bf16.mxu0 %v82
  %224 = vmatmul.mubr.bf16.gmra.mrb[0].mxu0 %v81
  %v225 = vpop.f32.mrb[0].mxu0
  %v226 = vadd.f32 %v65, %v225
  %v227 = vpop.f32.mrb[0].mxu0
  %v228 = vpop.f32.mrb[0].mxu0
  %v229 = vadd.f32 %v65, %v228
  %v230 = vpop.f32.mrb[0].mxu0
  %231 = vdwg.mxu0
  %v232 = vld [vmem:[%s3] sm:$0xf]
  %v233 = vld [vmem:[%s3 + $0x4] sm:$0xf]
  %v234 = vld [vmem:[%s3 + $0x8] sm:$0xf]
  %v235 = vld [vmem:[%s3 + $0xc] sm:$0xf]
  %v236 = vunpack.c.l.bf16 %v232
  %v237 = vunpack.c.l.bf16 %v233
  %v238 = vunpack.c.l.bf16 %v234
  %v239 = vunpack.c.l.bf16 %v235
  %v240 = vadd.f32 %v218, %v236
  %v241 = vadd.f32 %v221, %v237
  %v242 = vadd.f32 %v226, %v238
  %v243 = vadd.f32 %v229, %v239
  %244 = vadd.xlane.f32.xlu0 %v240
  %v245 = vpop.xlane.xlu0 %244
  %246 = vadd.xlane.f32.xlu0 %v241
  %v247 = vpop.xlane.xlu0 %246
  %248 = vadd.xlane.f32.xlu0 %v242
  %v249 = vpop.xlane.xlu0 %248
  %250 = vadd.xlane.f32.xlu0 %v243
  %v251 = vpop.xlane.xlu0 %250
  %v252 = vrcp.pop 128.0
  %v253 = vmul.f32 %v245, %v252
  %v254 = vmul.f32 %v247, %v252
  %v255 = vmul.f32 %v249, %v252
  %v256 = vmul.f32 %v251, %v252
  %v257 = vsub.f32 %v240, %v253
  %v258 = vsub.f32 %v241, %v254
  %v259 = vsub.f32 %v242, %v255
  %v260 = vsub.f32 %v243, %v256
  %v261 = vmul.f32 %v257, %v257
  %v262 = vmul.f32 %v258, %v258
  %v263 = vmul.f32 %v259, %v259
  %v264 = vmul.f32 %v260, %v260
  %265 = vadd.xlane.f32.xlu0 %v261
  %v266 = vpop.xlane.xlu0 %265
  %267 = vadd.xlane.f32.xlu0 %v262
  %v268 = vpop.xlane.xlu0 %267
  %269 = vadd.xlane.f32.xlu0 %v263
  %v270 = vpop.xlane.xlu0 %269
  %271 = vadd.xlane.f32.xlu0 %v264
  %v272 = vpop.xlane.xlu0 %271
  %v273 = vmul.f32 %v266, %v252
  %v274 = vmul.f32 %v268, %v252
  %v275 = vmul.f32 %v270, %v252
  %v276 = vmul.f32 %v272, %v252
  %v277 = vadd.f32 %v273, 1e-12
  %v278 = vadd.f32 %v274, 1e-12
  %v279 = vadd.f32 %v275, 1e-12
  %v280 = vadd.f32 %v276, 1e-12
  %v281 = vrsqrt.pop %v277
  %v282 = vrsqrt.pop %v278
  %v283 = vrsqrt.pop %v279
  %v284 = vrsqrt.pop %v280
  %v285 = vmul.f32 %v257, %v281
  %v286 = vmul.f32 %v258, %v282
  %v287 = vmul.f32 %v259, %v283
  %v288 = vmul.f32 %v260, %v284
  %v289 = vld [vmem:[%s4] sm:$0x1]
  %v291 = vlaneseq
  %v292 = vshrl.u32 %v291, 7
  %v293 = vsub.s32 0, %v292
  %v294 = vrot.slane %v289, %v293
  %v296 = vmul.f32 %v285, %v294
  %v297 = vmul.f32 %v286, %v294
  %v298 = vmul.f32 %v287, %v294
  %v299 = vmul.f32 %v288, %v294
  %v300 = vld [vmem:[%s5] sm:$0x1]
  %v302 = vlaneseq
  %v303 = vshrl.u32 %v302, 7
  %v304 = vsub.s32 0, %v303
  %v305 = vrot.slane %v300, %v304
  %v307 = vadd.f32 %v296, %v305
  %v308 = vadd.f32 %v297, %v305
  %v309 = vadd.f32 %v298, %v305
  %v310 = vadd.f32 %v299, %v305
  %v311 = vpack.c.bf16 %v308, %v307
  %v312 = vpack.c.bf16 %v310, %v309
  %v315 = vunpack.c.l.b16 %v311
  %v316 = vunpack.c.h.b16 %v311
  %v317 = vunpack.c.l.b16 %v312
  %v318 = vunpack.c.h.b16 %v312
  %v319 = vpack.c.b16 %v315, %v315
  %v320 = vpack.c.b16 %v316, %v316
  %v321 = vpack.c.b16 %v317, %v317
  %v322 = vpack.c.b16 %v318, %v318
  %327 = vst [vmem:[%s6] sm:$0xf] %v319
  %328 = vst [vmem:[%s6 + $0x4] sm:$0xf] %v320
  %329 = vst [vmem:[%s6 + $0x8] sm:$0xf] %v321
  %330 = vst [vmem:[%s6 + $0xc] sm:$0xf] %v322
  // Predicated region
  $region26: #{distilbert_class_forward.17} parent=0 // pred_check
    _
  $region27: #{distilbert_class_forward.17} parent=0 // pred_check_branch
    %332 = sbr.rel (0) target = $region29
  $region28: #{distilbert_class_forward.17} parent=0 // pred_region
    _
  $region29: #{distilbert_class_forward.17} parent=0 // pred_fallthru
    _
  // Predicated region
  $region30: #{distilbert_class_forward.17} parent=0 // pred_check
    _
  $region31: #{distilbert_class_forward.17} parent=0 // pred_check_branch
    %334 = sbr.rel (0) target = $region33
  $region32: #{distilbert_class_forward.17} parent=0 // pred_region
    _
  $region33: #{distilbert_class_forward.17} parent=0 // pred_fallthru
    _

</llo_original>
